<compile_context>
chip_gen: v6e
topology: v6e:2x2x1
jax: 0.10.0
libtpu: 0.0.40
codegen_flags: <defaults>
</compile_context>

<pallas_src>
import numpy as np

import jax
import jax.numpy as jnp
from jax.experimental import pallas as pl
from jax.experimental.pallas import tpu as pltpu

# Fixed geometry implied by fc1's 864 = 24*6*6 input features.
H0 = W0 = 32          # input spatial size
C0 = 3                # input channels
C1, C2 = 12, 24       # conv1 / conv2 output channels
H1 = W1 = 30          # conv1 output (valid 3x3)
HP1 = WP1 = 15        # pool1 output
H2 = W2 = 13          # conv2 output
HP2 = WP2 = 6         # pool2 output
F1, F2 = 120, 50      # fc sizes
NEG_SLOPE = 0.01      # PyTorch F.leaky_relu default


# ---------------------------------------------------------------------------
# The fused kernel: one grid step == one image.
# In-kernel activation layout: 2-D (rows = image row, lanes = col*C + channel).
# ---------------------------------------------------------------------------
def _convnet_fused_kernel(
        x_ref,                                   # (1, C0*H0, W0), rows = c*32+h
        w1_ref, b1_ref, s1e_ref, s1o_ref,        # conv1 banded W, bias, pool1 selectors
        w2_ref, b2_ref, s2e_ref, s2o_ref,        # conv2 banded W, bias, pool2 selectors
        wf1_ref, bf1_ref, wf2_ref, bf2_ref,      # fc1 (permuted), fc2
        o_ref,                                   # (1, 1, F2)
        y1_ref, r1_ref, p1_ref, y2_ref, r2_ref, p2_ref):
    f32 = jnp.float32

    # ---- conv1 (3x3 valid, 3->12) + bias + ReLU ---------------------------
    # y1[i, j*C1+o] = sum_{kh,c,kw} x[c, i+kh, j+kw] * conv1_w[o, c, kh, kw]
    acc1 = jnp.zeros((H1, W1 * C1), f32)
    for kh in range(3):
        for c in range(C0):
            lhs = x_ref[0, c * H0 + kh: c * H0 + kh + H1, :]           # (30, 32)
            acc1 = acc1 + jnp.dot(lhs, w1_ref[kh, c],
                                  preferred_element_type=f32)           # (30, 360)
    y1_ref[...] = jnp.maximum(acc1 + b1_ref[...], 0.0)

    # ---- pool1: 2x2 / stride 2 ---------------------------------------------
    for p in range(HP1):                    # rows: full-width single-row max
        r1_ref[p:p + 1, :] = jnp.maximum(y1_ref[2 * p:2 * p + 1, :],
                                         y1_ref[2 * p + 1:2 * p + 2, :])
    r1 = r1_ref[...]                        # (15, 360)
    p1_ref[...] = jnp.maximum(              # cols: 0/1 selection matmuls (lane-dense)
        jnp.dot(r1, s1e_ref[...], preferred_element_type=f32),
        jnp.dot(r1, s1o_ref[...], preferred_element_type=f32))          # (15, 180)

    # ---- conv2 (3x3 valid, 12->24) + bias + ReLU ----------------------------
    acc2 = jnp.zeros((H2, W2 * C2), f32)
    for kh in range(3):
        acc2 = acc2 + jnp.dot(p1_ref[kh:kh + H2, :], w2_ref[kh],
                              preferred_element_type=f32)                # (13, 312)
    y2_ref[...] = jnp.maximum(acc2 + b2_ref[...], 0.0)

    # ---- pool2: 2x2 / stride 2 (floor mode: last row / col dropped) ---------
    for p in range(HP2):
        r2_ref[p:p + 1, :] = jnp.maximum(y2_ref[2 * p:2 * p + 1, :],
                                         y2_ref[2 * p + 1:2 * p + 2, :])
    r2 = r2_ref[...]                        # (6, 312)
    p2_ref[...] = jnp.maximum(
        jnp.dot(r2, s2e_ref[...], preferred_element_type=f32),
        jnp.dot(r2, s2o_ref[...], preferred_element_type=f32))           # (6, 144)

    # ---- fc1 + leaky_relu, fc2 + leaky_relu ----------------------------------
    # fc1's weight columns were pre-permuted so the pooled (row, col*C2 + o)
    # layout can be contracted row-by-row (absorbs torch's NCHW flatten order).
    acc = jnp.zeros((1, F1), f32)
    for i in range(HP2):
        acc = acc + jnp.dot(p2_ref[i:i + 1, :], wf1_ref[i],
                            preferred_element_type=f32)                  # (1, 120)
    h = acc + bf1_ref[...]
    h = jnp.where(h >= 0.0, h, NEG_SLOPE * h)
    y = jnp.dot(h, wf2_ref[...], preferred_element_type=f32) + bf2_ref[...]
    y = jnp.where(y >= 0.0, y, NEG_SLOPE * y)
    o_ref[0] = y                                                          # (1, 50)


# ---------------------------------------------------------------------------
# Forward wrapper (single pallas_call).
# ---------------------------------------------------------------------------
def convnet_basic_forward(x_nchw, prep):
    """Reproduces ConvNetBasic.forward for x_nchw of shape (B, 3, 32, 32)."""
    B = x_nchw.shape[0]
    x2d = x_nchw.reshape(B, C0 * H0, W0)      # free reshape; rows = c*32 + h

    w_bytes = sum(int(v.size) * 4 for v in prep.values())
    macs = (9 * H1 * W0 * (W1 * C1)                # conv1 banded matmuls
            + 2 * HP1 * (W1 * C1) * (WP1 * C1)     # pool1 selection matmuls
            + 3 * H2 * (WP1 * C1) * (W2 * C2)      # conv2 banded matmuls
            + 2 * HP2 * (W2 * C2) * (WP2 * C2)     # pool2 selection matmuls
            + HP2 * (WP2 * C2) * F1 + F1 * F2)     # fc1, fc2
    cost = pl.CostEstimate(flops=2 * B * macs, transcendentals=0,
                           bytes_accessed=B * (C0 * H0 * W0 + F2) * 4 + w_bytes)

    out = pl.pallas_call(
        _convnet_fused_kernel,
        out_shape=jax.ShapeDtypeStruct((B, 1, F2), jnp.float32),
        grid_spec=pltpu.PrefetchScalarGridSpec(
            num_scalar_prefetch=0,
            grid=(B,),
            in_specs=[
                pl.BlockSpec((1, C0 * H0, W0), lambda b: (b, 0, 0)),
                pl.BlockSpec((3, C0, W0, W1 * C1), lambda b: (0, 0, 0, 0)),
                pl.BlockSpec((1, W1 * C1), lambda b: (0, 0)),
                pl.BlockSpec((W1 * C1, WP1 * C1), lambda b: (0, 0)),
                pl.BlockSpec((W1 * C1, WP1 * C1), lambda b: (0, 0)),
                pl.BlockSpec((3, WP1 * C1, W2 * C2), lambda b: (0, 0, 0)),
                pl.BlockSpec((1, W2 * C2), lambda b: (0, 0)),
                pl.BlockSpec((W2 * C2, WP2 * C2), lambda b: (0, 0)),
                pl.BlockSpec((W2 * C2, WP2 * C2), lambda b: (0, 0)),
                pl.BlockSpec((HP2, WP2 * C2, F1), lambda b: (0, 0, 0)),
                pl.BlockSpec((1, F1), lambda b: (0, 0)),
                pl.BlockSpec((F1, F2), lambda b: (0, 0)),
                pl.BlockSpec((1, F2), lambda b: (0, 0)),
            ],
            out_specs=pl.BlockSpec((1, 1, F2), lambda b: (b, 0, 0)),
            scratch_shapes=[
                pltpu.VMEM((H1, W1 * C1), jnp.float32),     # y1  (30, 360)
                pltpu.VMEM((HP1, W1 * C1), jnp.float32),    # r1  (15, 360)
                pltpu.VMEM((HP1, WP1 * C1), jnp.float32),   # p1  (15, 180)
                pltpu.VMEM((H2, W2 * C2), jnp.float32),     # y2  (13, 312)
                pltpu.VMEM((HP2, W2 * C2), jnp.float32),    # r2  (6, 312)
                pltpu.VMEM((HP2, WP2 * C2), jnp.float32),   # p2  (6, 144)
            ],
        ),
        compiler_params=pltpu.CompilerParams(
            dimension_semantics=("parallel",)),
        cost_estimate=cost,
    )(x2d, prep["w1b"], prep["b1r"], prep["s1e"], prep["s1o"],
      prep["w2b"], prep["b2r"], prep["s2e"], prep["s2o"],
      prep["wf1"], prep["bf1"], prep["wf2"], prep["bf2"])
    return out.reshape(B, F2)


# ---------------------------------------------------------------------------
# One-time weight preparation (hoisted out of the hot path).
# ---------------------------------------------------------------------------
def prepare_params(params):
    c1w = np.asarray(params["conv1_w"], np.float32)   # (12, 3, 3, 3)  (O,C,kh,kw)
    c1b = np.asarray(params["conv1_b"], np.float32)
    c2w = np.asarray(params["conv2_w"], np.float32)   # (24, 12, 3, 3)
    c2b = np.asarray(params["conv2_b"], np.float32)
    f1w = np.asarray(params["fc1_w"], np.float32)     # (120, 864)
    f1b = np.asarray(params["fc1_b"], np.float32)
    f2w = np.asarray(params["fc2_w"], np.float32)     # (50, 120)
    f2b = np.asarray(params["fc2_b"], np.float32)

    # conv1 banded weights: w1b[kh, c, w, j*C1 + o] = c1w[o, c, kh, w - j]
    w1b = np.zeros((3, C0, W0, W1 * C1), np.float32)
    for kh in range(3):
        for kw in range(3):
            tap = c1w[:, :, kh, kw].T                  # (C0, C1)
            for j in range(W1):
                w1b[kh, :, j + kw, j * C1:(j + 1) * C1] = tap
    b1r = np.tile(c1b, W1)[None, :]                     # (1, 360)

    # conv2 banded weights: w2b[kh, w*C1 + c, j*C2 + o] = c2w[o, c, kh, w - j]
    w2b = np.zeros((3, WP1 * C1, W2 * C2), np.float32)
    for kh in range(3):
        for kw in range(3):
            tap = c2w[:, :, kh, kw].T                  # (C1, C2)
            for j in range(W2):
                w = j + kw
                w2b[kh, w * C1:(w + 1) * C1, j * C2:(j + 1) * C2] = tap
    b2r = np.tile(c2b, W2)[None, :]                     # (1, 312)

    # 0/1 selectors picking even / odd column groups for the 2x2 max pools.
    def pool_selectors(w_in, w_out, ch):
        se = np.zeros((w_in * ch, w_out * ch), np.float32)
        so = np.zeros((w_in * ch, w_out * ch), np.float32)
        for q in range(w_out):
            for o in range(ch):
                se[(2 * q) * ch + o, q * ch + o] = 1.0
                so[(2 * q + 1) * ch + o, q * ch + o] = 1.0
        return se, so

    s1e, s1o = pool_selectors(W1, WP1, C1)              # (360, 180)
    s2e, s2o = pool_selectors(W2, WP2, C2)              # (312, 144)

    # fc1: permute the 864 input features from torch's flatten order
    # (o*36 + i*6 + j, NCHW) to the kernel's pooled layout (i, j*C2 + o).
    wf1 = f1w.reshape(F1, C2, HP2, WP2)                 # (u, o, i, j)
    wf1 = np.transpose(wf1, (2, 3, 1, 0))               # (i, j, o, u)
    wf1 = np.ascontiguousarray(wf1.reshape(HP2, WP2 * C2, F1))
    bf1 = f1b[None, :]

    wf2 = np.ascontiguousarray(f2w.T)                   # (120, 50)
    bf2 = f2b[None, :]

    prep = dict(w1b=w1b, b1r=b1r, s1e=s1e, s1o=s1o,
                w2b=w2b, b2r=b2r, s2e=s2e, s2o=s2o,
                wf1=wf1, bf1=bf1, wf2=wf2, bf2=bf2)
    return {k: jnp.asarray(v) for k, v in prep.items()}


# ---------------------------------------------------------------------------
# Pure-JAX (XLA) reference of the PyTorch forward, for a correctness check.
# ---------------------------------------------------------------------------
def reference_forward(x_nchw, params):
    dn = ("NCHW", "OIHW", "NCHW")
    y = jax.lax.conv_general_dilated(x_nchw, params["conv1_w"], (1, 1), "VALID",
                                     dimension_numbers=dn)
    y = jax.nn.relu(y + params["conv1_b"][None, :, None, None])
    y = jax.lax.reduce_window(y, -jnp.inf, jax.lax.max,
                              (1, 1, 2, 2), (1, 1, 2, 2), "VALID")
    y = jax.lax.conv_general_dilated(y, params["conv2_w"], (1, 1), "VALID",
                                     dimension_numbers=dn)
    y = jax.nn.relu(y + params["conv2_b"][None, :, None, None])
    y = jax.lax.reduce_window(y, -jnp.inf, jax.lax.max,
                              (1, 1, 2, 2), (1, 1, 2, 2), "VALID")
    y = y.reshape(y.shape[0], -1)
    y = jax.nn.leaky_relu(y @ params["fc1_w"].T + params["fc1_b"], NEG_SLOPE)
    y = jax.nn.leaky_relu(y @ params["fc2_w"].T + params["fc2_b"], NEG_SLOPE)
    return y


# ---------------------------------------------------------------------------
# Deterministic parameter init (PyTorch-style uniform(-1/sqrt(fan_in), ...))
# ---------------------------------------------------------------------------
def init_params(key, n_channels=3):
    ks = jax.random.split(key, 8)

    def u(k, shape, fan_in):
        bound = 1.0 / float(fan_in) ** 0.5
        return jax.random.uniform(k, shape, jnp.float32, -bound, bound)

    return {
        "conv1_w": u(ks[0], (C1, n_channels, 3, 3), n_channels * 9),
        "conv1_b": u(ks[1], (C1,), n_channels * 9),
        "conv2_w": u(ks[2], (C2, C1, 3, 3), C1 * 9),
        "conv2_b": u(ks[3], (C2,), C1 * 9),
        "fc1_w": u(ks[4], (F1, C2 * HP2 * WP2), C2 * HP2 * WP2),
        "fc1_b": u(ks[5], (F1,), C2 * HP2 * WP2),
        "fc2_w": u(ks[6], (F2, F1), F1),
        "fc2_b": u(ks[7], (F2,), F1),
    }


if __name__ == "__main__":
    key = jax.random.PRNGKey(0)
    k_x, k_p = jax.random.split(key)

    # fc1 expects 864 = 24*6*6 flat features -> input spatial size must be 32x32.
    B = 2
    x = jax.random.normal(k_x, (B, C0, H0, W0), dtype=jnp.float32)
    params = init_params(k_p, n_channels=C0)
    prep = prepare_params(params)            # one-time weight prep (not hot path)

    out = jax.jit(convnet_basic_forward)(x, prep)
    out = jax.block_until_ready(out)
    assert out.shape == (B, F2), out.shape

    # Cross-check against the pure-JAX reference (loose tolerance to absorb
    # MXU pass-precision differences vs. the XLA convolution path).
    ref = jax.block_until_ready(jax.jit(reference_forward)(x, params))
    max_err = float(jnp.max(jnp.abs(out - ref)))
    assert jnp.allclose(out, ref, atol=3e-2, rtol=3e-2), f"max_err={max_err}"

    print("KERNEL_OK")
</pallas_src>

<mosaic_0001>
module attributes {stable_mosaic.version = 11 : i64} {
  func.func @_convnet_fused_kernel(%arg0: i32, %arg1: memref<1x96x32xf32, #tpu.memory_space<vmem>>, %arg2: memref<3x3x32x360xf32, #tpu.memory_space<vmem>>, %arg3: memref<1x360xf32, #tpu.memory_space<vmem>>, %arg4: memref<360x180xf32, #tpu.memory_space<vmem>>, %arg5: memref<360x180xf32, #tpu.memory_space<vmem>>, %arg6: memref<3x180x312xf32, #tpu.memory_space<vmem>>, %arg7: memref<1x312xf32, #tpu.memory_space<vmem>>, %arg8: memref<312x144xf32, #tpu.memory_space<vmem>>, %arg9: memref<312x144xf32, #tpu.memory_space<vmem>>, %arg10: memref<6x144x120xf32, #tpu.memory_space<vmem>>, %arg11: memref<1x120xf32, #tpu.memory_space<vmem>>, %arg12: memref<120x50xf32, #tpu.memory_space<vmem>>, %arg13: memref<1x50xf32, #tpu.memory_space<vmem>>, %arg14: memref<1x1x50xf32, #tpu.memory_space<vmem>>, %arg15: memref<30x360xf32, #tpu.memory_space<vmem>>, %arg16: memref<15x360xf32, #tpu.memory_space<vmem>>, %arg17: memref<15x180xf32, #tpu.memory_space<vmem>>, %arg18: memref<13x312xf32, #tpu.memory_space<vmem>>, %arg19: memref<6x312xf32, #tpu.memory_space<vmem>>, %arg20: memref<6x144xf32, #tpu.memory_space<vmem>>) attributes {dimension_semantics = [#tpu.dimension_semantics<parallel>], iteration_bounds = array<i64: 2>, scalar_prefetch = 0 : i64, scratch_operands = 6 : i64, tpu.core_type = #tpu.core_type<tc>, window_params = [{transform_indices = @transform_0, window_bounds = array<i64: 1, 96, 32>}, {pipeline_mode = #tpu.pipeline_mode<synchronous>, transform_indices = @transform_1, window_bounds = array<i64: 3, 3, 32, 360>}, {pipeline_mode = #tpu.pipeline_mode<synchronous>, transform_indices = @transform_2, window_bounds = array<i64: 1, 360>}, {pipeline_mode = #tpu.pipeline_mode<synchronous>, transform_indices = @transform_3, window_bounds = array<i64: 360, 180>}, {pipeline_mode = #tpu.pipeline_mode<synchronous>, transform_indices = @transform_4, window_bounds = array<i64: 360, 180>}, {pipeline_mode = #tpu.pipeline_mode<synchronous>, transform_indices = @transform_5, window_bounds = array<i64: 3, 180, 312>}, {pipeline_mode = #tpu.pipeline_mode<synchronous>, transform_indices = @transform_6, window_bounds = array<i64: 1, 312>}, {pipeline_mode = #tpu.pipeline_mode<synchronous>, transform_indices = @transform_7, window_bounds = array<i64: 312, 144>}, {pipeline_mode = #tpu.pipeline_mode<synchronous>, transform_indices = @transform_8, window_bounds = array<i64: 312, 144>}, {pipeline_mode = #tpu.pipeline_mode<synchronous>, transform_indices = @transform_9, window_bounds = array<i64: 6, 144, 120>}, {pipeline_mode = #tpu.pipeline_mode<synchronous>, transform_indices = @transform_10, window_bounds = array<i64: 1, 120>}, {pipeline_mode = #tpu.pipeline_mode<synchronous>, transform_indices = @transform_11, window_bounds = array<i64: 120, 50>}, {pipeline_mode = #tpu.pipeline_mode<synchronous>, transform_indices = @transform_12, window_bounds = array<i64: 1, 50>}, {transform_indices = @transform_13, window_bounds = array<i64: 1, 1, 50>}]} {
    %cst = arith.constant 0.000000e+00 : f32
    %0 = vector.broadcast %cst : f32 to vector<30x360xf32>
    %c0 = arith.constant 0 : index
    %c0_0 = arith.constant 0 : index
    %c0_1 = arith.constant 0 : index
    %1 = vector.load %arg1[%c0, %c0_0, %c0_1] : memref<1x96x32xf32, #tpu.memory_space<vmem>>, vector<1x30x32xf32>
    %2 = vector.shape_cast %1 : vector<1x30x32xf32> to vector<30x32xf32>
    %c0_2 = arith.constant 0 : index
    %c0_3 = arith.constant 0 : index
    %c0_4 = arith.constant 0 : index
    %c0_5 = arith.constant 0 : index
    %3 = vector.load %arg2[%c0_2, %c0_3, %c0_4, %c0_5] : memref<3x3x32x360xf32, #tpu.memory_space<vmem>>, vector<1x1x32x360xf32>
    %4 = vector.shape_cast %3 : vector<1x1x32x360xf32> to vector<32x360xf32>
    %cst_6 = arith.constant dense<0.000000e+00> : vector<30x360xf32>
    %5 = tpu.matmul %2, %4, %cst_6 {dimension_numbers = #tpu.dot_dimension_numbers<[1], [0], [0], [1], [0, 0, 1, 1], [], []>} : vector<30x32xf32>, vector<32x360xf32>, vector<30x360xf32> -> vector<30x360xf32>
    %6 = arith.addf %0, %5 : vector<30x360xf32>
    %c0_7 = arith.constant 0 : index
    %c32 = arith.constant 32 : index
    %c0_8 = arith.constant 0 : index
    %7 = vector.load %arg1[%c0_7, %c32, %c0_8] : memref<1x96x32xf32, #tpu.memory_space<vmem>>, vector<1x30x32xf32>
    %8 = vector.shape_cast %7 : vector<1x30x32xf32> to vector<30x32xf32>
    %c0_9 = arith.constant 0 : index
    %c1 = arith.constant 1 : index
    %c0_10 = arith.constant 0 : index
    %c0_11 = arith.constant 0 : index
    %9 = vector.load %arg2[%c0_9, %c1, %c0_10, %c0_11] : memref<3x3x32x360xf32, #tpu.memory_space<vmem>>, vector<1x1x32x360xf32>
    %10 = vector.shape_cast %9 : vector<1x1x32x360xf32> to vector<32x360xf32>
    %cst_12 = arith.constant dense<0.000000e+00> : vector<30x360xf32>
    %11 = tpu.matmul %8, %10, %cst_12 {dimension_numbers = #tpu.dot_dimension_numbers<[1], [0], [0], [1], [0, 0, 1, 1], [], []>} : vector<30x32xf32>, vector<32x360xf32>, vector<30x360xf32> -> vector<30x360xf32>
    %12 = arith.addf %6, %11 : vector<30x360xf32>
    %c0_13 = arith.constant 0 : index
    %c64 = arith.constant 64 : index
    %c0_14 = arith.constant 0 : index
    %13 = vector.load %arg1[%c0_13, %c64, %c0_14] : memref<1x96x32xf32, #tpu.memory_space<vmem>>, vector<1x30x32xf32>
    %14 = vector.shape_cast %13 : vector<1x30x32xf32> to vector<30x32xf32>
    %c0_15 = arith.constant 0 : index
    %c2 = arith.constant 2 : index
    %c0_16 = arith.constant 0 : index
    %c0_17 = arith.constant 0 : index
    %15 = vector.load %arg2[%c0_15, %c2, %c0_16, %c0_17] : memref<3x3x32x360xf32, #tpu.memory_space<vmem>>, vector<1x1x32x360xf32>
    %16 = vector.shape_cast %15 : vector<1x1x32x360xf32> to vector<32x360xf32>
    %cst_18 = arith.constant dense<0.000000e+00> : vector<30x360xf32>
    %17 = tpu.matmul %14, %16, %cst_18 {dimension_numbers = #tpu.dot_dimension_numbers<[1], [0], [0], [1], [0, 0, 1, 1], [], []>} : vector<30x32xf32>, vector<32x360xf32>, vector<30x360xf32> -> vector<30x360xf32>
    %18 = arith.addf %12, %17 : vector<30x360xf32>
    %c0_19 = arith.constant 0 : index
    %c1_20 = arith.constant 1 : index
    %c0_21 = arith.constant 0 : index
    %19 = vector.load %arg1[%c0_19, %c1_20, %c0_21] : memref<1x96x32xf32, #tpu.memory_space<vmem>>, vector<1x30x32xf32>
    %20 = vector.shape_cast %19 : vector<1x30x32xf32> to vector<30x32xf32>
    %c1_22 = arith.constant 1 : index
    %c0_23 = arith.constant 0 : index
    %c0_24 = arith.constant 0 : index
    %c0_25 = arith.constant 0 : index
    %21 = vector.load %arg2[%c1_22, %c0_23, %c0_24, %c0_25] : memref<3x3x32x360xf32, #tpu.memory_space<vmem>>, vector<1x1x32x360xf32>
    %22 = vector.shape_cast %21 : vector<1x1x32x360xf32> to vector<32x360xf32>
    %cst_26 = arith.constant dense<0.000000e+00> : vector<30x360xf32>
    %23 = tpu.matmul %20, %22, %cst_26 {dimension_numbers = #tpu.dot_dimension_numbers<[1], [0], [0], [1], [0, 0, 1, 1], [], []>} : vector<30x32xf32>, vector<32x360xf32>, vector<30x360xf32> -> vector<30x360xf32>
    %24 = arith.addf %18, %23 : vector<30x360xf32>
    %c0_27 = arith.constant 0 : index
    %c33 = arith.constant 33 : index
    %c0_28 = arith.constant 0 : index
    %25 = vector.load %arg1[%c0_27, %c33, %c0_28] : memref<1x96x32xf32, #tpu.memory_space<vmem>>, vector<1x30x32xf32>
    %26 = vector.shape_cast %25 : vector<1x30x32xf32> to vector<30x32xf32>
    %c1_29 = arith.constant 1 : index
    %c1_30 = arith.constant 1 : index
    %c0_31 = arith.constant 0 : index
    %c0_32 = arith.constant 0 : index
    %27 = vector.load %arg2[%c1_29, %c1_30, %c0_31, %c0_32] : memref<3x3x32x360xf32, #tpu.memory_space<vmem>>, vector<1x1x32x360xf32>
    %28 = vector.shape_cast %27 : vector<1x1x32x360xf32> to vector<32x360xf32>
    %cst_33 = arith.constant dense<0.000000e+00> : vector<30x360xf32>
    %29 = tpu.matmul %26, %28, %cst_33 {dimension_numbers = #tpu.dot_dimension_numbers<[1], [0], [0], [1], [0, 0, 1, 1], [], []>} : vector<30x32xf32>, vector<32x360xf32>, vector<30x360xf32> -> vector<30x360xf32>
    %30 = arith.addf %24, %29 : vector<30x360xf32>
    %c0_34 = arith.constant 0 : index
    %c65 = arith.constant 65 : index
    %c0_35 = arith.constant 0 : index
    %31 = vector.load %arg1[%c0_34, %c65, %c0_35] : memref<1x96x32xf32, #tpu.memory_space<vmem>>, vector<1x30x32xf32>
    %32 = vector.shape_cast %31 : vector<1x30x32xf32> to vector<30x32xf32>
    %c1_36 = arith.constant 1 : index
    %c2_37 = arith.constant 2 : index
    %c0_38 = arith.constant 0 : index
    %c0_39 = arith.constant 0 : index
    %33 = vector.load %arg2[%c1_36, %c2_37, %c0_38, %c0_39] : memref<3x3x32x360xf32, #tpu.memory_space<vmem>>, vector<1x1x32x360xf32>
    %34 = vector.shape_cast %33 : vector<1x1x32x360xf32> to vector<32x360xf32>
    %cst_40 = arith.constant dense<0.000000e+00> : vector<30x360xf32>
    %35 = tpu.matmul %32, %34, %cst_40 {dimension_numbers = #tpu.dot_dimension_numbers<[1], [0], [0], [1], [0, 0, 1, 1], [], []>} : vector<30x32xf32>, vector<32x360xf32>, vector<30x360xf32> -> vector<30x360xf32>
    %36 = arith.addf %30, %35 : vector<30x360xf32>
    %c0_41 = arith.constant 0 : index
    %c2_42 = arith.constant 2 : index
    %c0_43 = arith.constant 0 : index
    %37 = vector.load %arg1[%c0_41, %c2_42, %c0_43] : memref<1x96x32xf32, #tpu.memory_space<vmem>>, vector<1x30x32xf32>
    %38 = vector.shape_cast %37 : vector<1x30x32xf32> to vector<30x32xf32>
    %c2_44 = arith.constant 2 : index
    %c0_45 = arith.constant 0 : index
    %c0_46 = arith.constant 0 : index
    %c0_47 = arith.constant 0 : index
    %39 = vector.load %arg2[%c2_44, %c0_45, %c0_46, %c0_47] : memref<3x3x32x360xf32, #tpu.memory_space<vmem>>, vector<1x1x32x360xf32>
    %40 = vector.shape_cast %39 : vector<1x1x32x360xf32> to vector<32x360xf32>
    %cst_48 = arith.constant dense<0.000000e+00> : vector<30x360xf32>
    %41 = tpu.matmul %38, %40, %cst_48 {dimension_numbers = #tpu.dot_dimension_numbers<[1], [0], [0], [1], [0, 0, 1, 1], [], []>} : vector<30x32xf32>, vector<32x360xf32>, vector<30x360xf32> -> vector<30x360xf32>
    %42 = arith.addf %36, %41 : vector<30x360xf32>
    %c0_49 = arith.constant 0 : index
    %c34 = arith.constant 34 : index
    %c0_50 = arith.constant 0 : index
    %43 = vector.load %arg1[%c0_49, %c34, %c0_50] : memref<1x96x32xf32, #tpu.memory_space<vmem>>, vector<1x30x32xf32>
    %44 = vector.shape_cast %43 : vector<1x30x32xf32> to vector<30x32xf32>
    %c2_51 = arith.constant 2 : index
    %c1_52 = arith.constant 1 : index
    %c0_53 = arith.constant 0 : index
    %c0_54 = arith.constant 0 : index
    %45 = vector.load %arg2[%c2_51, %c1_52, %c0_53, %c0_54] : memref<3x3x32x360xf32, #tpu.memory_space<vmem>>, vector<1x1x32x360xf32>
    %46 = vector.shape_cast %45 : vector<1x1x32x360xf32> to vector<32x360xf32>
    %cst_55 = arith.constant dense<0.000000e+00> : vector<30x360xf32>
    %47 = tpu.matmul %44, %46, %cst_55 {dimension_numbers = #tpu.dot_dimension_numbers<[1], [0], [0], [1], [0, 0, 1, 1], [], []>} : vector<30x32xf32>, vector<32x360xf32>, vector<30x360xf32> -> vector<30x360xf32>
    %48 = arith.addf %42, %47 : vector<30x360xf32>
    %c0_56 = arith.constant 0 : index
    %c66 = arith.constant 66 : index
    %c0_57 = arith.constant 0 : index
    %49 = vector.load %arg1[%c0_56, %c66, %c0_57] : memref<1x96x32xf32, #tpu.memory_space<vmem>>, vector<1x30x32xf32>
    %50 = vector.shape_cast %49 : vector<1x30x32xf32> to vector<30x32xf32>
    %c2_58 = arith.constant 2 : index
    %c2_59 = arith.constant 2 : index
    %c0_60 = arith.constant 0 : index
    %c0_61 = arith.constant 0 : index
    %51 = vector.load %arg2[%c2_58, %c2_59, %c0_60, %c0_61] : memref<3x3x32x360xf32, #tpu.memory_space<vmem>>, vector<1x1x32x360xf32>
    %52 = vector.shape_cast %51 : vector<1x1x32x360xf32> to vector<32x360xf32>
    %cst_62 = arith.constant dense<0.000000e+00> : vector<30x360xf32>
    %53 = tpu.matmul %50, %52, %cst_62 {dimension_numbers = #tpu.dot_dimension_numbers<[1], [0], [0], [1], [0, 0, 1, 1], [], []>} : vector<30x32xf32>, vector<32x360xf32>, vector<30x360xf32> -> vector<30x360xf32>
    %54 = arith.addf %48, %53 : vector<30x360xf32>
    %c0_63 = arith.constant 0 : index
    %c0_64 = arith.constant 0 : index
    %55 = vector.load %arg3[%c0_63, %c0_64] : memref<1x360xf32, #tpu.memory_space<vmem>>, vector<1x360xf32>
    %56 = vector.broadcast %55 : vector<1x360xf32> to vector<30x360xf32>
    %57 = arith.addf %54, %56 : vector<30x360xf32>
    %cst_65 = arith.constant 0.000000e+00 : f32
    %58 = vector.broadcast %cst_65 : f32 to vector<30x360xf32>
    %59 = arith.maximumf %57, %58 : vector<30x360xf32>
    %c0_66 = arith.constant 0 : index
    %c0_67 = arith.constant 0 : index
    %60 = vector.load %arg15[%c0_66, %c0_67] : memref<30x360xf32, #tpu.memory_space<vmem>>, vector<30x360xf32>
    tpu.vector_store %arg15[%c0_66, %c0_67], %59 {strides = array<i32>} : memref<30x360xf32, #tpu.memory_space<vmem>>, vector<30x360xf32>,
    %c0_68 = arith.constant 0 : index
    %c0_69 = arith.constant 0 : index
    %61 = vector.load %arg15[%c0_68, %c0_69] : memref<30x360xf32, #tpu.memory_space<vmem>>, vector<1x360xf32>
    %c1_70 = arith.constant 1 : index
    %c0_71 = arith.constant 0 : index
    %62 = vector.load %arg15[%c1_70, %c0_71] : memref<30x360xf32, #tpu.memory_space<vmem>>, vector<1x360xf32>
    %63 = arith.maximumf %61, %62 : vector<1x360xf32>
    %c0_72 = arith.constant 0 : index
    %c0_73 = arith.constant 0 : index
    %64 = vector.load %arg16[%c0_72, %c0_73] : memref<15x360xf32, #tpu.memory_space<vmem>>, vector<1x360xf32>
    tpu.vector_store %arg16[%c0_72, %c0_73], %63 {strides = array<i32>} : memref<15x360xf32, #tpu.memory_space<vmem>>, vector<1x360xf32>,
    %c2_74 = arith.constant 2 : index
    %c0_75 = arith.constant 0 : index
    %65 = vector.load %arg15[%c2_74, %c0_75] : memref<30x360xf32, #tpu.memory_space<vmem>>, vector<1x360xf32>
    %c3 = arith.constant 3 : index
    %c0_76 = arith.constant 0 : index
    %66 = vector.load %arg15[%c3, %c0_76] : memref<30x360xf32, #tpu.memory_space<vmem>>, vector<1x360xf32>
    %67 = arith.maximumf %65, %66 : vector<1x360xf32>
    %c1_77 = arith.constant 1 : index
    %c0_78 = arith.constant 0 : index
    %68 = vector.load %arg16[%c1_77, %c0_78] : memref<15x360xf32, #tpu.memory_space<vmem>>, vector<1x360xf32>
    tpu.vector_store %arg16[%c1_77, %c0_78], %67 {strides = array<i32>} : memref<15x360xf32, #tpu.memory_space<vmem>>, vector<1x360xf32>,
    %c4 = arith.constant 4 : index
    %c0_79 = arith.constant 0 : index
    %69 = vector.load %arg15[%c4, %c0_79] : memref<30x360xf32, #tpu.memory_space<vmem>>, vector<1x360xf32>
    %c5 = arith.constant 5 : index
    %c0_80 = arith.constant 0 : index
    %70 = vector.load %arg15[%c5, %c0_80] : memref<30x360xf32, #tpu.memory_space<vmem>>, vector<1x360xf32>
    %71 = arith.maximumf %69, %70 : vector<1x360xf32>
    %c2_81 = arith.constant 2 : index
    %c0_82 = arith.constant 0 : index
    %72 = vector.load %arg16[%c2_81, %c0_82] : memref<15x360xf32, #tpu.memory_space<vmem>>, vector<1x360xf32>
    tpu.vector_store %arg16[%c2_81, %c0_82], %71 {strides = array<i32>} : memref<15x360xf32, #tpu.memory_space<vmem>>, vector<1x360xf32>,
    %c6 = arith.constant 6 : index
    %c0_83 = arith.constant 0 : index
    %73 = vector.load %arg15[%c6, %c0_83] : memref<30x360xf32, #tpu.memory_space<vmem>>, vector<1x360xf32>
    %c7 = arith.constant 7 : index
    %c0_84 = arith.constant 0 : index
    %74 = vector.load %arg15[%c7, %c0_84] : memref<30x360xf32, #tpu.memory_space<vmem>>, vector<1x360xf32>
    %75 = arith.maximumf %73, %74 : vector<1x360xf32>
    %c3_85 = arith.constant 3 : index
    %c0_86 = arith.constant 0 : index
    %76 = vector.load %arg16[%c3_85, %c0_86] : memref<15x360xf32, #tpu.memory_space<vmem>>, vector<1x360xf32>
    tpu.vector_store %arg16[%c3_85, %c0_86], %75 {strides = array<i32>} : memref<15x360xf32, #tpu.memory_space<vmem>>, vector<1x360xf32>,
    %c8 = arith.constant 8 : index
    %c0_87 = arith.constant 0 : index
    %77 = vector.load %arg15[%c8, %c0_87] : memref<30x360xf32, #tpu.memory_space<vmem>>, vector<1x360xf32>
    %c9 = arith.constant 9 : index
    %c0_88 = arith.constant 0 : index
    %78 = vector.load %arg15[%c9, %c0_88] : memref<30x360xf32, #tpu.memory_space<vmem>>, vector<1x360xf32>
    %79 = arith.maximumf %77, %78 : vector<1x360xf32>
    %c4_89 = arith.constant 4 : index
    %c0_90 = arith.constant 0 : index
    %80 = vector.load %arg16[%c4_89, %c0_90] : memref<15x360xf32, #tpu.memory_space<vmem>>, vector<1x360xf32>
    tpu.vector_store %arg16[%c4_89, %c0_90], %79 {strides = array<i32>} : memref<15x360xf32, #tpu.memory_space<vmem>>, vector<1x360xf32>,
    %c10 = arith.constant 10 : index
    %c0_91 = arith.constant 0 : index
    %81 = vector.load %arg15[%c10, %c0_91] : memref<30x360xf32, #tpu.memory_space<vmem>>, vector<1x360xf32>
    %c11 = arith.constant 11 : index
    %c0_92 = arith.constant 0 : index
    %82 = vector.load %arg15[%c11, %c0_92] : memref<30x360xf32, #tpu.memory_space<vmem>>, vector<1x360xf32>
    %83 = arith.maximumf %81, %82 : vector<1x360xf32>
    %c5_93 = arith.constant 5 : index
    %c0_94 = arith.constant 0 : index
    %84 = vector.load %arg16[%c5_93, %c0_94] : memref<15x360xf32, #tpu.memory_space<vmem>>, vector<1x360xf32>
    tpu.vector_store %arg16[%c5_93, %c0_94], %83 {strides = array<i32>} : memref<15x360xf32, #tpu.memory_space<vmem>>, vector<1x360xf32>,
    %c12 = arith.constant 12 : index
    %c0_95 = arith.constant 0 : index
    %85 = vector.load %arg15[%c12, %c0_95] : memref<30x360xf32, #tpu.memory_space<vmem>>, vector<1x360xf32>
    %c13 = arith.constant 13 : index
    %c0_96 = arith.constant 0 : index
    %86 = vector.load %arg15[%c13, %c0_96] : memref<30x360xf32, #tpu.memory_space<vmem>>, vector<1x360xf32>
    %87 = arith.maximumf %85, %86 : vector<1x360xf32>
    %c6_97 = arith.constant 6 : index
    %c0_98 = arith.constant 0 : index
    %88 = vector.load %arg16[%c6_97, %c0_98] : memref<15x360xf32, #tpu.memory_space<vmem>>, vector<1x360xf32>
    tpu.vector_store %arg16[%c6_97, %c0_98], %87 {strides = array<i32>} : memref<15x360xf32, #tpu.memory_space<vmem>>, vector<1x360xf32>,
    %c14 = arith.constant 14 : index
    %c0_99 = arith.constant 0 : index
    %89 = vector.load %arg15[%c14, %c0_99] : memref<30x360xf32, #tpu.memory_space<vmem>>, vector<1x360xf32>
    %c15 = arith.constant 15 : index
    %c0_100 = arith.constant 0 : index
    %90 = vector.load %arg15[%c15, %c0_100] : memref<30x360xf32, #tpu.memory_space<vmem>>, vector<1x360xf32>
    %91 = arith.maximumf %89, %90 : vector<1x360xf32>
    %c7_101 = arith.constant 7 : index
    %c0_102 = arith.constant 0 : index
    %92 = vector.load %arg16[%c7_101, %c0_102] : memref<15x360xf32, #tpu.memory_space<vmem>>, vector<1x360xf32>
    tpu.vector_store %arg16[%c7_101, %c0_102], %91 {strides = array<i32>} : memref<15x360xf32, #tpu.memory_space<vmem>>, vector<1x360xf32>,
    %c16 = arith.constant 16 : index
    %c0_103 = arith.constant 0 : index
    %93 = vector.load %arg15[%c16, %c0_103] : memref<30x360xf32, #tpu.memory_space<vmem>>, vector<1x360xf32>
    %c17 = arith.constant 17 : index
    %c0_104 = arith.constant 0 : index
    %94 = vector.load %arg15[%c17, %c0_104] : memref<30x360xf32, #tpu.memory_space<vmem>>, vector<1x360xf32>
    %95 = arith.maximumf %93, %94 : vector<1x360xf32>
    %c8_105 = arith.constant 8 : index
    %c0_106 = arith.constant 0 : index
    %96 = vector.load %arg16[%c8_105, %c0_106] : memref<15x360xf32, #tpu.memory_space<vmem>>, vector<1x360xf32>
    tpu.vector_store %arg16[%c8_105, %c0_106], %95 {strides = array<i32>} : memref<15x360xf32, #tpu.memory_space<vmem>>, vector<1x360xf32>,
    %c18 = arith.constant 18 : index
    %c0_107 = arith.constant 0 : index
    %97 = vector.load %arg15[%c18, %c0_107] : memref<30x360xf32, #tpu.memory_space<vmem>>, vector<1x360xf32>
    %c19 = arith.constant 19 : index
    %c0_108 = arith.constant 0 : index
    %98 = vector.load %arg15[%c19, %c0_108] : memref<30x360xf32, #tpu.memory_space<vmem>>, vector<1x360xf32>
    %99 = arith.maximumf %97, %98 : vector<1x360xf32>
    %c9_109 = arith.constant 9 : index
    %c0_110 = arith.constant 0 : index
    %100 = vector.load %arg16[%c9_109, %c0_110] : memref<15x360xf32, #tpu.memory_space<vmem>>, vector<1x360xf32>
    tpu.vector_store %arg16[%c9_109, %c0_110], %99 {strides = array<i32>} : memref<15x360xf32, #tpu.memory_space<vmem>>, vector<1x360xf32>,
    %c20 = arith.constant 20 : index
    %c0_111 = arith.constant 0 : index
    %101 = vector.load %arg15[%c20, %c0_111] : memref<30x360xf32, #tpu.memory_space<vmem>>, vector<1x360xf32>
    %c21 = arith.constant 21 : index
    %c0_112 = arith.constant 0 : index
    %102 = vector.load %arg15[%c21, %c0_112] : memref<30x360xf32, #tpu.memory_space<vmem>>, vector<1x360xf32>
    %103 = arith.maximumf %101, %102 : vector<1x360xf32>
    %c10_113 = arith.constant 10 : index
    %c0_114 = arith.constant 0 : index
    %104 = vector.load %arg16[%c10_113, %c0_114] : memref<15x360xf32, #tpu.memory_space<vmem>>, vector<1x360xf32>
    tpu.vector_store %arg16[%c10_113, %c0_114], %103 {strides = array<i32>} : memref<15x360xf32, #tpu.memory_space<vmem>>, vector<1x360xf32>,
    %c22 = arith.constant 22 : index
    %c0_115 = arith.constant 0 : index
    %105 = vector.load %arg15[%c22, %c0_115] : memref<30x360xf32, #tpu.memory_space<vmem>>, vector<1x360xf32>
    %c23 = arith.constant 23 : index
    %c0_116 = arith.constant 0 : index
    %106 = vector.load %arg15[%c23, %c0_116] : memref<30x360xf32, #tpu.memory_space<vmem>>, vector<1x360xf32>
    %107 = arith.maximumf %105, %106 : vector<1x360xf32>
    %c11_117 = arith.constant 11 : index
    %c0_118 = arith.constant 0 : index
    %108 = vector.load %arg16[%c11_117, %c0_118] : memref<15x360xf32, #tpu.memory_space<vmem>>, vector<1x360xf32>
    tpu.vector_store %arg16[%c11_117, %c0_118], %107 {strides = array<i32>} : memref<15x360xf32, #tpu.memory_space<vmem>>, vector<1x360xf32>,
    %c24 = arith.constant 24 : index
    %c0_119 = arith.constant 0 : index
    %109 = vector.load %arg15[%c24, %c0_119] : memref<30x360xf32, #tpu.memory_space<vmem>>, vector<1x360xf32>
    %c25 = arith.constant 25 : index
    %c0_120 = arith.constant 0 : index
    %110 = vector.load %arg15[%c25, %c0_120] : memref<30x360xf32, #tpu.memory_space<vmem>>, vector<1x360xf32>
    %111 = arith.maximumf %109, %110 : vector<1x360xf32>
    %c12_121 = arith.constant 12 : index
    %c0_122 = arith.constant 0 : index
    %112 = vector.load %arg16[%c12_121, %c0_122] : memref<15x360xf32, #tpu.memory_space<vmem>>, vector<1x360xf32>
    tpu.vector_store %arg16[%c12_121, %c0_122], %111 {strides = array<i32>} : memref<15x360xf32, #tpu.memory_space<vmem>>, vector<1x360xf32>,
    %c26 = arith.constant 26 : index
    %c0_123 = arith.constant 0 : index
    %113 = vector.load %arg15[%c26, %c0_123] : memref<30x360xf32, #tpu.memory_space<vmem>>, vector<1x360xf32>
    %c27 = arith.constant 27 : index
    %c0_124 = arith.constant 0 : index
    %114 = vector.load %arg15[%c27, %c0_124] : memref<30x360xf32, #tpu.memory_space<vmem>>, vector<1x360xf32>
    %115 = arith.maximumf %113, %114 : vector<1x360xf32>
    %c13_125 = arith.constant 13 : index
    %c0_126 = arith.constant 0 : index
    %116 = vector.load %arg16[%c13_125, %c0_126] : memref<15x360xf32, #tpu.memory_space<vmem>>, vector<1x360xf32>
    tpu.vector_store %arg16[%c13_125, %c0_126], %115 {strides = array<i32>} : memref<15x360xf32, #tpu.memory_space<vmem>>, vector<1x360xf32>,
    %c28 = arith.constant 28 : index
    %c0_127 = arith.constant 0 : index
    %117 = vector.load %arg15[%c28, %c0_127] : memref<30x360xf32, #tpu.memory_space<vmem>>, vector<1x360xf32>
    %c29 = arith.constant 29 : index
    %c0_128 = arith.constant 0 : index
    %118 = vector.load %arg15[%c29, %c0_128] : memref<30x360xf32, #tpu.memory_space<vmem>>, vector<1x360xf32>
    %119 = arith.maximumf %117, %118 : vector<1x360xf32>
    %c14_129 = arith.constant 14 : index
    %c0_130 = arith.constant 0 : index
    %120 = vector.load %arg16[%c14_129, %c0_130] : memref<15x360xf32, #tpu.memory_space<vmem>>, vector<1x360xf32>
    tpu.vector_store %arg16[%c14_129, %c0_130], %119 {strides = array<i32>} : memref<15x360xf32, #tpu.memory_space<vmem>>, vector<1x360xf32>,
    %c0_131 = arith.constant 0 : index
    %c0_132 = arith.constant 0 : index
    %121 = vector.load %arg16[%c0_131, %c0_132] : memref<15x360xf32, #tpu.memory_space<vmem>>, vector<15x360xf32>
    %c0_133 = arith.constant 0 : index
    %c0_134 = arith.constant 0 : index
    %122 = vector.load %arg4[%c0_133, %c0_134] : memref<360x180xf32, #tpu.memory_space<vmem>>, vector<360x180xf32>
    %cst_135 = arith.constant dense<0.000000e+00> : vector<15x180xf32>
    %123 = tpu.matmul %121, %122, %cst_135 {dimension_numbers = #tpu.dot_dimension_numbers<[1], [0], [0], [1], [0, 0, 1, 1], [], []>} : vector<15x360xf32>, vector<360x180xf32>, vector<15x180xf32> -> vector<15x180xf32>
    %c0_136 = arith.constant 0 : index
    %c0_137 = arith.constant 0 : index
    %124 = vector.load %arg5[%c0_136, %c0_137] : memref<360x180xf32, #tpu.memory_space<vmem>>, vector<360x180xf32>
    %cst_138 = arith.constant dense<0.000000e+00> : vector<15x180xf32>
    %125 = tpu.matmul %121, %124, %cst_138 {dimension_numbers = #tpu.dot_dimension_numbers<[1], [0], [0], [1], [0, 0, 1, 1], [], []>} : vector<15x360xf32>, vector<360x180xf32>, vector<15x180xf32> -> vector<15x180xf32>
    %126 = arith.maximumf %123, %125 : vector<15x180xf32>
    %c0_139 = arith.constant 0 : index
    %c0_140 = arith.constant 0 : index
    %127 = vector.load %arg17[%c0_139, %c0_140] : memref<15x180xf32, #tpu.memory_space<vmem>>, vector<15x180xf32>
    tpu.vector_store %arg17[%c0_139, %c0_140], %126 {strides = array<i32>} : memref<15x180xf32, #tpu.memory_space<vmem>>, vector<15x180xf32>,
    %cst_141 = arith.constant 0.000000e+00 : f32
    %128 = vector.broadcast %cst_141 : f32 to vector<13x312xf32>
    %c0_142 = arith.constant 0 : index
    %c0_143 = arith.constant 0 : index
    %129 = vector.load %arg17[%c0_142, %c0_143] : memref<15x180xf32, #tpu.memory_space<vmem>>, vector<13x180xf32>
    %c0_144 = arith.constant 0 : index
    %c0_145 = arith.constant 0 : index
    %c0_146 = arith.constant 0 : index
    %130 = vector.load %arg6[%c0_144, %c0_145, %c0_146] : memref<3x180x312xf32, #tpu.memory_space<vmem>>, vector<1x180x312xf32>
    %131 = vector.shape_cast %130 : vector<1x180x312xf32> to vector<180x312xf32>
    %cst_147 = arith.constant dense<0.000000e+00> : vector<13x312xf32>
    %132 = tpu.matmul %129, %131, %cst_147 {dimension_numbers = #tpu.dot_dimension_numbers<[1], [0], [0], [1], [0, 0, 1, 1], [], []>} : vector<13x180xf32>, vector<180x312xf32>, vector<13x312xf32> -> vector<13x312xf32>
    %133 = arith.addf %128, %132 : vector<13x312xf32>
    %c1_148 = arith.constant 1 : index
    %c0_149 = arith.constant 0 : index
    %134 = vector.load %arg17[%c1_148, %c0_149] : memref<15x180xf32, #tpu.memory_space<vmem>>, vector<13x180xf32>
    %c1_150 = arith.constant 1 : index
    %c0_151 = arith.constant 0 : index
    %c0_152 = arith.constant 0 : index
    %135 = vector.load %arg6[%c1_150, %c0_151, %c0_152] : memref<3x180x312xf32, #tpu.memory_space<vmem>>, vector<1x180x312xf32>
    %136 = vector.shape_cast %135 : vector<1x180x312xf32> to vector<180x312xf32>
    %cst_153 = arith.constant dense<0.000000e+00> : vector<13x312xf32>
    %137 = tpu.matmul %134, %136, %cst_153 {dimension_numbers = #tpu.dot_dimension_numbers<[1], [0], [0], [1], [0, 0, 1, 1], [], []>} : vector<13x180xf32>, vector<180x312xf32>, vector<13x312xf32> -> vector<13x312xf32>
    %138 = arith.addf %133, %137 : vector<13x312xf32>
    %c2_154 = arith.constant 2 : index
    %c0_155 = arith.constant 0 : index
    %139 = vector.load %arg17[%c2_154, %c0_155] : memref<15x180xf32, #tpu.memory_space<vmem>>, vector<13x180xf32>
    %c2_156 = arith.constant 2 : index
    %c0_157 = arith.constant 0 : index
    %c0_158 = arith.constant 0 : index
    %140 = vector.load %arg6[%c2_156, %c0_157, %c0_158] : memref<3x180x312xf32, #tpu.memory_space<vmem>>, vector<1x180x312xf32>
    %141 = vector.shape_cast %140 : vector<1x180x312xf32> to vector<180x312xf32>
    %cst_159 = arith.constant dense<0.000000e+00> : vector<13x312xf32>
    %142 = tpu.matmul %139, %141, %cst_159 {dimension_numbers = #tpu.dot_dimension_numbers<[1], [0], [0], [1], [0, 0, 1, 1], [], []>} : vector<13x180xf32>, vector<180x312xf32>, vector<13x312xf32> -> vector<13x312xf32>
    %143 = arith.addf %138, %142 : vector<13x312xf32>
    %c0_160 = arith.constant 0 : index
    %c0_161 = arith.constant 0 : index
    %144 = vector.load %arg7[%c0_160, %c0_161] : memref<1x312xf32, #tpu.memory_space<vmem>>, vector<1x312xf32>
    %145 = vector.broadcast %144 : vector<1x312xf32> to vector<13x312xf32>
    %146 = arith.addf %143, %145 : vector<13x312xf32>
    %cst_162 = arith.constant 0.000000e+00 : f32
    %147 = vector.broadcast %cst_162 : f32 to vector<13x312xf32>
    %148 = arith.maximumf %146, %147 : vector<13x312xf32>
    %c0_163 = arith.constant 0 : index
    %c0_164 = arith.constant 0 : index
    %149 = vector.load %arg18[%c0_163, %c0_164] : memref<13x312xf32, #tpu.memory_space<vmem>>, vector<13x312xf32>
    tpu.vector_store %arg18[%c0_163, %c0_164], %148 {strides = array<i32>} : memref<13x312xf32, #tpu.memory_space<vmem>>, vector<13x312xf32>,
    %c0_165 = arith.constant 0 : index
    %c0_166 = arith.constant 0 : index
    %150 = vector.load %arg18[%c0_165, %c0_166] : memref<13x312xf32, #tpu.memory_space<vmem>>, vector<1x312xf32>
    %c1_167 = arith.constant 1 : index
    %c0_168 = arith.constant 0 : index
    %151 = vector.load %arg18[%c1_167, %c0_168] : memref<13x312xf32, #tpu.memory_space<vmem>>, vector<1x312xf32>
    %152 = arith.maximumf %150, %151 : vector<1x312xf32>
    %c0_169 = arith.constant 0 : index
    %c0_170 = arith.constant 0 : index
    %153 = vector.load %arg19[%c0_169, %c0_170] : memref<6x312xf32, #tpu.memory_space<vmem>>, vector<1x312xf32>
    tpu.vector_store %arg19[%c0_169, %c0_170], %152 {strides = array<i32>} : memref<6x312xf32, #tpu.memory_space<vmem>>, vector<1x312xf32>,
    %c2_171 = arith.constant 2 : index
    %c0_172 = arith.constant 0 : index
    %154 = vector.load %arg18[%c2_171, %c0_172] : memref<13x312xf32, #tpu.memory_space<vmem>>, vector<1x312xf32>
    %c3_173 = arith.constant 3 : index
    %c0_174 = arith.constant 0 : index
    %155 = vector.load %arg18[%c3_173, %c0_174] : memref<13x312xf32, #tpu.memory_space<vmem>>, vector<1x312xf32>
    %156 = arith.maximumf %154, %155 : vector<1x312xf32>
    %c1_175 = arith.constant 1 : index
    %c0_176 = arith.constant 0 : index
    %157 = vector.load %arg19[%c1_175, %c0_176] : memref<6x312xf32, #tpu.memory_space<vmem>>, vector<1x312xf32>
    tpu.vector_store %arg19[%c1_175, %c0_176], %156 {strides = array<i32>} : memref<6x312xf32, #tpu.memory_space<vmem>>, vector<1x312xf32>,
    %c4_177 = arith.constant 4 : index
    %c0_178 = arith.constant 0 : index
    %158 = vector.load %arg18[%c4_177, %c0_178] : memref<13x312xf32, #tpu.memory_space<vmem>>, vector<1x312xf32>
    %c5_179 = arith.constant 5 : index
    %c0_180 = arith.constant 0 : index
    %159 = vector.load %arg18[%c5_179, %c0_180] : memref<13x312xf32, #tpu.memory_space<vmem>>, vector<1x312xf32>
    %160 = arith.maximumf %158, %159 : vector<1x312xf32>
    %c2_181 = arith.constant 2 : index
    %c0_182 = arith.constant 0 : index
    %161 = vector.load %arg19[%c2_181, %c0_182] : memref<6x312xf32, #tpu.memory_space<vmem>>, vector<1x312xf32>
    tpu.vector_store %arg19[%c2_181, %c0_182], %160 {strides = array<i32>} : memref<6x312xf32, #tpu.memory_space<vmem>>, vector<1x312xf32>,
    %c6_183 = arith.constant 6 : index
    %c0_184 = arith.constant 0 : index
    %162 = vector.load %arg18[%c6_183, %c0_184] : memref<13x312xf32, #tpu.memory_space<vmem>>, vector<1x312xf32>
    %c7_185 = arith.constant 7 : index
    %c0_186 = arith.constant 0 : index
    %163 = vector.load %arg18[%c7_185, %c0_186] : memref<13x312xf32, #tpu.memory_space<vmem>>, vector<1x312xf32>
    %164 = arith.maximumf %162, %163 : vector<1x312xf32>
    %c3_187 = arith.constant 3 : index
    %c0_188 = arith.constant 0 : index
    %165 = vector.load %arg19[%c3_187, %c0_188] : memref<6x312xf32, #tpu.memory_space<vmem>>, vector<1x312xf32>
    tpu.vector_store %arg19[%c3_187, %c0_188], %164 {strides = array<i32>} : memref<6x312xf32, #tpu.memory_space<vmem>>, vector<1x312xf32>,
    %c8_189 = arith.constant 8 : index
    %c0_190 = arith.constant 0 : index
    %166 = vector.load %arg18[%c8_189, %c0_190] : memref<13x312xf32, #tpu.memory_space<vmem>>, vector<1x312xf32>
    %c9_191 = arith.constant 9 : index
    %c0_192 = arith.constant 0 : index
    %167 = vector.load %arg18[%c9_191, %c0_192] : memref<13x312xf32, #tpu.memory_space<vmem>>, vector<1x312xf32>
    %168 = arith.maximumf %166, %167 : vector<1x312xf32>
    %c4_193 = arith.constant 4 : index
    %c0_194 = arith.constant 0 : index
    %169 = vector.load %arg19[%c4_193, %c0_194] : memref<6x312xf32, #tpu.memory_space<vmem>>, vector<1x312xf32>
    tpu.vector_store %arg19[%c4_193, %c0_194], %168 {strides = array<i32>} : memref<6x312xf32, #tpu.memory_space<vmem>>, vector<1x312xf32>,
    %c10_195 = arith.constant 10 : index
    %c0_196 = arith.constant 0 : index
    %170 = vector.load %arg18[%c10_195, %c0_196] : memref<13x312xf32, #tpu.memory_space<vmem>>, vector<1x312xf32>
    %c11_197 = arith.constant 11 : index
    %c0_198 = arith.constant 0 : index
    %171 = vector.load %arg18[%c11_197, %c0_198] : memref<13x312xf32, #tpu.memory_space<vmem>>, vector<1x312xf32>
    %172 = arith.maximumf %170, %171 : vector<1x312xf32>
    %c5_199 = arith.constant 5 : index
    %c0_200 = arith.constant 0 : index
    %173 = vector.load %arg19[%c5_199, %c0_200] : memref<6x312xf32, #tpu.memory_space<vmem>>, vector<1x312xf32>
    tpu.vector_store %arg19[%c5_199, %c0_200], %172 {strides = array<i32>} : memref<6x312xf32, #tpu.memory_space<vmem>>, vector<1x312xf32>,
    %c0_201 = arith.constant 0 : index
    %c0_202 = arith.constant 0 : index
    %174 = vector.load %arg19[%c0_201, %c0_202] : memref<6x312xf32, #tpu.memory_space<vmem>>, vector<6x312xf32>
    %c0_203 = arith.constant 0 : index
    %c0_204 = arith.constant 0 : index
    %175 = vector.load %arg8[%c0_203, %c0_204] : memref<312x144xf32, #tpu.memory_space<vmem>>, vector<312x144xf32>
    %cst_205 = arith.constant dense<0.000000e+00> : vector<6x144xf32>
    %176 = tpu.matmul %174, %175, %cst_205 {dimension_numbers = #tpu.dot_dimension_numbers<[1], [0], [0], [1], [0, 0, 1, 1], [], []>} : vector<6x312xf32>, vector<312x144xf32>, vector<6x144xf32> -> vector<6x144xf32>
    %c0_206 = arith.constant 0 : index
    %c0_207 = arith.constant 0 : index
    %177 = vector.load %arg9[%c0_206, %c0_207] : memref<312x144xf32, #tpu.memory_space<vmem>>, vector<312x144xf32>
    %cst_208 = arith.constant dense<0.000000e+00> : vector<6x144xf32>
    %178 = tpu.matmul %174, %177, %cst_208 {dimension_numbers = #tpu.dot_dimension_numbers<[1], [0], [0], [1], [0, 0, 1, 1], [], []>} : vector<6x312xf32>, vector<312x144xf32>, vector<6x144xf32> -> vector<6x144xf32>
    %179 = arith.maximumf %176, %178 : vector<6x144xf32>
    %c0_209 = arith.constant 0 : index
    %c0_210 = arith.constant 0 : index
    %180 = vector.load %arg20[%c0_209, %c0_210] : memref<6x144xf32, #tpu.memory_space<vmem>>, vector<6x144xf32>
    tpu.vector_store %arg20[%c0_209, %c0_210], %179 {strides = array<i32>} : memref<6x144xf32, #tpu.memory_space<vmem>>, vector<6x144xf32>,
    %cst_211 = arith.constant 0.000000e+00 : f32
    %181 = vector.broadcast %cst_211 : f32 to vector<1x120xf32>
    %c0_212 = arith.constant 0 : index
    %c0_213 = arith.constant 0 : index
    %182 = vector.load %arg20[%c0_212, %c0_213] : memref<6x144xf32, #tpu.memory_space<vmem>>, vector<1x144xf32>
    %c0_214 = arith.constant 0 : index
    %c0_215 = arith.constant 0 : index
    %c0_216 = arith.constant 0 : index
    %183 = vector.load %arg10[%c0_214, %c0_215, %c0_216] : memref<6x144x120xf32, #tpu.memory_space<vmem>>, vector<1x144x120xf32>
    %184 = vector.shape_cast %183 : vector<1x144x120xf32> to vector<144x120xf32>
    %cst_217 = arith.constant dense<0.000000e+00> : vector<1x120xf32>
    %185 = tpu.matmul %182, %184, %cst_217 {dimension_numbers = #tpu.dot_dimension_numbers<[1], [0], [0], [1], [0, 0, 1, 1], [], []>} : vector<1x144xf32>, vector<144x120xf32>, vector<1x120xf32> -> vector<1x120xf32>
    %186 = arith.addf %181, %185 : vector<1x120xf32>
    %c1_218 = arith.constant 1 : index
    %c0_219 = arith.constant 0 : index
    %187 = vector.load %arg20[%c1_218, %c0_219] : memref<6x144xf32, #tpu.memory_space<vmem>>, vector<1x144xf32>
    %c1_220 = arith.constant 1 : index
    %c0_221 = arith.constant 0 : index
    %c0_222 = arith.constant 0 : index
    %188 = vector.load %arg10[%c1_220, %c0_221, %c0_222] : memref<6x144x120xf32, #tpu.memory_space<vmem>>, vector<1x144x120xf32>
    %189 = vector.shape_cast %188 : vector<1x144x120xf32> to vector<144x120xf32>
    %cst_223 = arith.constant dense<0.000000e+00> : vector<1x120xf32>
    %190 = tpu.matmul %187, %189, %cst_223 {dimension_numbers = #tpu.dot_dimension_numbers<[1], [0], [0], [1], [0, 0, 1, 1], [], []>} : vector<1x144xf32>, vector<144x120xf32>, vector<1x120xf32> -> vector<1x120xf32>
    %191 = arith.addf %186, %190 : vector<1x120xf32>
    %c2_224 = arith.constant 2 : index
    %c0_225 = arith.constant 0 : index
    %192 = vector.load %arg20[%c2_224, %c0_225] : memref<6x144xf32, #tpu.memory_space<vmem>>, vector<1x144xf32>
    %c2_226 = arith.constant 2 : index
    %c0_227 = arith.constant 0 : index
    %c0_228 = arith.constant 0 : index
    %193 = vector.load %arg10[%c2_226, %c0_227, %c0_228] : memref<6x144x120xf32, #tpu.memory_space<vmem>>, vector<1x144x120xf32>
    %194 = vector.shape_cast %193 : vector<1x144x120xf32> to vector<144x120xf32>
    %cst_229 = arith.constant dense<0.000000e+00> : vector<1x120xf32>
    %195 = tpu.matmul %192, %194, %cst_229 {dimension_numbers = #tpu.dot_dimension_numbers<[1], [0], [0], [1], [0, 0, 1, 1], [], []>} : vector<1x144xf32>, vector<144x120xf32>, vector<1x120xf32> -> vector<1x120xf32>
    %196 = arith.addf %191, %195 : vector<1x120xf32>
    %c3_230 = arith.constant 3 : index
    %c0_231 = arith.constant 0 : index
    %197 = vector.load %arg20[%c3_230, %c0_231] : memref<6x144xf32, #tpu.memory_space<vmem>>, vector<1x144xf32>
    %c3_232 = arith.constant 3 : index
    %c0_233 = arith.constant 0 : index
    %c0_234 = arith.constant 0 : index
    %198 = vector.load %arg10[%c3_232, %c0_233, %c0_234] : memref<6x144x120xf32, #tpu.memory_space<vmem>>, vector<1x144x120xf32>
    %199 = vector.shape_cast %198 : vector<1x144x120xf32> to vector<144x120xf32>
    %cst_235 = arith.constant dense<0.000000e+00> : vector<1x120xf32>
    %200 = tpu.matmul %197, %199, %cst_235 {dimension_numbers = #tpu.dot_dimension_numbers<[1], [0], [0], [1], [0, 0, 1, 1], [], []>} : vector<1x144xf32>, vector<144x120xf32>, vector<1x120xf32> -> vector<1x120xf32>
    %201 = arith.addf %196, %200 : vector<1x120xf32>
    %c4_236 = arith.constant 4 : index
    %c0_237 = arith.constant 0 : index
    %202 = vector.load %arg20[%c4_236, %c0_237] : memref<6x144xf32, #tpu.memory_space<vmem>>, vector<1x144xf32>
    %c4_238 = arith.constant 4 : index
    %c0_239 = arith.constant 0 : index
    %c0_240 = arith.constant 0 : index
    %203 = vector.load %arg10[%c4_238, %c0_239, %c0_240] : memref<6x144x120xf32, #tpu.memory_space<vmem>>, vector<1x144x120xf32>
    %204 = vector.shape_cast %203 : vector<1x144x120xf32> to vector<144x120xf32>
    %cst_241 = arith.constant dense<0.000000e+00> : vector<1x120xf32>
    %205 = tpu.matmul %202, %204, %cst_241 {dimension_numbers = #tpu.dot_dimension_numbers<[1], [0], [0], [1], [0, 0, 1, 1], [], []>} : vector<1x144xf32>, vector<144x120xf32>, vector<1x120xf32> -> vector<1x120xf32>
    %206 = arith.addf %201, %205 : vector<1x120xf32>
    %c5_242 = arith.constant 5 : index
    %c0_243 = arith.constant 0 : index
    %207 = vector.load %arg20[%c5_242, %c0_243] : memref<6x144xf32, #tpu.memory_space<vmem>>, vector<1x144xf32>
    %c5_244 = arith.constant 5 : index
    %c0_245 = arith.constant 0 : index
    %c0_246 = arith.constant 0 : index
    %208 = vector.load %arg10[%c5_244, %c0_245, %c0_246] : memref<6x144x120xf32, #tpu.memory_space<vmem>>, vector<1x144x120xf32>
    %209 = vector.shape_cast %208 : vector<1x144x120xf32> to vector<144x120xf32>
    %cst_247 = arith.constant dense<0.000000e+00> : vector<1x120xf32>
    %210 = tpu.matmul %207, %209, %cst_247 {dimension_numbers = #tpu.dot_dimension_numbers<[1], [0], [0], [1], [0, 0, 1, 1], [], []>} : vector<1x144xf32>, vector<144x120xf32>, vector<1x120xf32> -> vector<1x120xf32>
    %211 = arith.addf %206, %210 : vector<1x120xf32>
    %c0_248 = arith.constant 0 : index
    %c0_249 = arith.constant 0 : index
    %212 = vector.load %arg11[%c0_248, %c0_249] : memref<1x120xf32, #tpu.memory_space<vmem>>, vector<1x120xf32>
    %213 = arith.addf %211, %212 : vector<1x120xf32>
    %cst_250 = arith.constant 0.000000e+00 : f32
    %214 = vector.broadcast %cst_250 : f32 to vector<1x120xf32>
    %215 = arith.cmpf oge, %213, %214 : vector<1x120xf32>
    %cst_251 = arith.constant 0.00999999977 : f32
    %216 = vector.broadcast %cst_251 : f32 to vector<1x120xf32>
    %217 = arith.mulf %216, %213 : vector<1x120xf32>
    %218 = arith.select %215, %213, %217 : vector<1x120xi1>, vector<1x120xf32>
    %c0_252 = arith.constant 0 : index
    %c0_253 = arith.constant 0 : index
    %219 = vector.load %arg12[%c0_252, %c0_253] : memref<120x50xf32, #tpu.memory_space<vmem>>, vector<120x50xf32>
    %cst_254 = arith.constant dense<0.000000e+00> : vector<1x50xf32>
    %220 = tpu.matmul %218, %219, %cst_254 {dimension_numbers = #tpu.dot_dimension_numbers<[1], [0], [0], [1], [0, 0, 1, 1], [], []>} : vector<1x120xf32>, vector<120x50xf32>, vector<1x50xf32> -> vector<1x50xf32>
    %c0_255 = arith.constant 0 : index
    %c0_256 = arith.constant 0 : index
    %221 = vector.load %arg13[%c0_255, %c0_256] : memref<1x50xf32, #tpu.memory_space<vmem>>, vector<1x50xf32>
    %222 = arith.addf %220, %221 : vector<1x50xf32>
    %cst_257 = arith.constant 0.000000e+00 : f32
    %223 = vector.broadcast %cst_257 : f32 to vector<1x50xf32>
    %224 = arith.cmpf oge, %222, %223 : vector<1x50xf32>
    %cst_258 = arith.constant 0.00999999977 : f32
    %225 = vector.broadcast %cst_258 : f32 to vector<1x50xf32>
    %226 = arith.mulf %225, %222 : vector<1x50xf32>
    %227 = arith.select %224, %222, %226 : vector<1x50xi1>, vector<1x50xf32>
    %c0_259 = arith.constant 0 : index
    %c0_260 = arith.constant 0 : index
    %c0_261 = arith.constant 0 : index
    %228 = vector.load %arg14[%c0_259, %c0_260, %c0_261] : memref<1x1x50xf32, #tpu.memory_space<vmem>>, vector<1x1x50xf32>
    %229 = vector.shape_cast %228 : vector<1x1x50xf32> to vector<1x50xf32>
    %230 = vector.shape_cast %227 : vector<1x50xf32> to vector<1x1x50xf32>
    tpu.vector_store %arg14[%c0_259, %c0_260, %c0_261], %230 {strides = array<i32>} : memref<1x1x50xf32, #tpu.memory_space<vmem>>, vector<1x1x50xf32>,
    return
  }
  func.func @transform_0(%arg0: i32) -> (i32, i32, i32) {
    %c0_i32 = arith.constant 0 : i32
    %c0_i32_0 = arith.constant 0 : i32
    %c0_i32_1 = arith.constant 0 : i32
    return %arg0, %c0_i32, %c0_i32_0 : i32, i32, i32
  }
  func.func @transform_1(%arg0: i32) -> (i32, i32, i32, i32) {
    %c0_i32 = arith.constant 0 : i32
    %c0_i32_0 = arith.constant 0 : i32
    %c0_i32_1 = arith.constant 0 : i32
    %c0_i32_2 = arith.constant 0 : i32
    %c0_i32_3 = arith.constant 0 : i32
    return %c0_i32, %c0_i32_0, %c0_i32_1, %c0_i32_2 : i32, i32, i32, i32
  }
  func.func @transform_2(%arg0: i32) -> (i32, i32) {
    %c0_i32 = arith.constant 0 : i32
    %c0_i32_0 = arith.constant 0 : i32
    %c0_i32_1 = arith.constant 0 : i32
    return %c0_i32, %c0_i32_0 : i32, i32
  }
  func.func @transform_3(%arg0: i32) -> (i32, i32) {
    %c0_i32 = arith.constant 0 : i32
    %c0_i32_0 = arith.constant 0 : i32
    %c0_i32_1 = arith.constant 0 : i32
    return %c0_i32, %c0_i32_0 : i32, i32
  }
  func.func @transform_4(%arg0: i32) -> (i32, i32) {
    %c0_i32 = arith.constant 0 : i32
    %c0_i32_0 = arith.constant 0 : i32
    %c0_i32_1 = arith.constant 0 : i32
    return %c0_i32, %c0_i32_0 : i32, i32
  }
  func.func @transform_5(%arg0: i32) -> (i32, i32, i32) {
    %c0_i32 = arith.constant 0 : i32
    %c0_i32_0 = arith.constant 0 : i32
    %c0_i32_1 = arith.constant 0 : i32
    %c0_i32_2 = arith.constant 0 : i32
    return %c0_i32, %c0_i32_0, %c0_i32_1 : i32, i32, i32
  }
  func.func @transform_6(%arg0: i32) -> (i32, i32) {
    %c0_i32 = arith.constant 0 : i32
    %c0_i32_0 = arith.constant 0 : i32
    %c0_i32_1 = arith.constant 0 : i32
    return %c0_i32, %c0_i32_0 : i32, i32
  }
  func.func @transform_7(%arg0: i32) -> (i32, i32) {
    %c0_i32 = arith.constant 0 : i32
    %c0_i32_0 = arith.constant 0 : i32
    %c0_i32_1 = arith.constant 0 : i32
    return %c0_i32, %c0_i32_0 : i32, i32
  }
  func.func @transform_8(%arg0: i32) -> (i32, i32) {
    %c0_i32 = arith.constant 0 : i32
    %c0_i32_0 = arith.constant 0 : i32
    %c0_i32_1 = arith.constant 0 : i32
    return %c0_i32, %c0_i32_0 : i32, i32
  }
  func.func @transform_9(%arg0: i32) -> (i32, i32, i32) {
    %c0_i32 = arith.constant 0 : i32
    %c0_i32_0 = arith.constant 0 : i32
    %c0_i32_1 = arith.constant 0 : i32
    %c0_i32_2 = arith.constant 0 : i32
    return %c0_i32, %c0_i32_0, %c0_i32_1 : i32, i32, i32
  }
  func.func @transform_10(%arg0: i32) -> (i32, i32) {
    %c0_i32 = arith.constant 0 : i32
    %c0_i32_0 = arith.constant 0 : i32
    %c0_i32_1 = arith.constant 0 : i32
    return %c0_i32, %c0_i32_0 : i32, i32
  }
  func.func @transform_11(%arg0: i32) -> (i32, i32) {
    %c0_i32 = arith.constant 0 : i32
    %c0_i32_0 = arith.constant 0 : i32
    %c0_i32_1 = arith.constant 0 : i32
    return %c0_i32, %c0_i32_0 : i32, i32
  }
  func.func @transform_12(%arg0: i32) -> (i32, i32) {
    %c0_i32 = arith.constant 0 : i32
    %c0_i32_0 = arith.constant 0 : i32
    %c0_i32_1 = arith.constant 0 : i32
    return %c0_i32, %c0_i32_0 : i32, i32
  }
  func.func @transform_13(%arg0: i32) -> (i32, i32, i32) {
    %c0_i32 = arith.constant 0 : i32
    %c0_i32_0 = arith.constant 0 : i32
    %c0_i32_1 = arith.constant 0 : i32
    return %arg0, %c0_i32, %c0_i32_0 : i32, i32, i32
  }
}

</mosaic_0001>

<llo_original>
// kernel: convnet_basic_forward.1
$region0: #{convnet_basic_forward.1}
  #allocation0 [shape = 'u32[]', space=smem, size = 0x4, offset = 0x4, fixed_abs, tag = 'smem constant byte address 0x4 - core index']
  #allocation1 [shape = 'u32[144,128]{1,0:T(1,128)}', space=vmem, size = 0x12000, scoped, tag = 'internal scratch']
  #allocation2 [shape = 'f32[30,360]{1,0:T(8,128)}', space=vmem, size = 0xc000, scoped, tag = 'scratch operand']
  #allocation3 [shape = 'f32[15,360]{1,0:T(8,128)}', space=vmem, size = 0x6000, scoped, tag = 'scratch operand']
  #allocation4 [shape = 'f32[15,180]{1,0:T(8,128)}', space=vmem, size = 0x4000, scoped, tag = 'scratch operand']
  #allocation5 [shape = 'f32[13,312]{1,0:T(8,128)}', space=vmem, size = 0x6000, scoped, tag = 'scratch operand']
  #allocation6 [shape = 'f32[6,312]{1,0:T(8,128)}', space=vmem, size = 0x3000, scoped, tag = 'scratch operand']
  #allocation7 [shape = 'f32[6,144]{1,0:T(8,128)}', space=vmem, size = 0x2000, scoped, tag = 'scratch operand']
  %s0 = inlined_call_operand.vmem [shape: f32[2,96,32], index: 0, kind: input, shape index: {}]
  %s1 = inlined_call_operand.vmem [shape: f32[3,3,32,360], index: 1, kind: input, shape index: {}]
  %s2 = inlined_call_operand.vmem [shape: f32[1,360], index: 2, kind: input, shape index: {}]
  %s3 = inlined_call_operand.vmem [shape: f32[360,180], index: 3, kind: input, shape index: {}]
  %s4 = inlined_call_operand.vmem [shape: f32[360,180], index: 4, kind: input, shape index: {}]
  %s5 = inlined_call_operand.vmem [shape: f32[3,180,312], index: 5, kind: input, shape index: {}]
  %s6 = inlined_call_operand.vmem [shape: f32[1,312], index: 6, kind: input, shape index: {}]
  %s7 = inlined_call_operand.vmem [shape: f32[312,144], index: 7, kind: input, shape index: {}]
  %s8 = inlined_call_operand.vmem [shape: f32[312,144], index: 8, kind: input, shape index: {}]
  %s9 = inlined_call_operand.vmem [shape: f32[6,144,120], index: 9, kind: input, shape index: {}]
  %s10 = inlined_call_operand.vmem [shape: f32[1,120], index: 10, kind: input, shape index: {}]
  %s11 = inlined_call_operand.vmem [shape: f32[120,50], index: 11, kind: input, shape index: {}]
  %s12 = inlined_call_operand.vmem [shape: f32[1,50], index: 12, kind: input, shape index: {}]
  %s13 = inlined_call_operand.hbm [shape: f32[2,1,50], index: 13, kind: output, shape index: {}]
  %s14 = sld [smem:[#allocation0]]
  $region85: #{convnet_basic_forward.1} parent=0
    _
  %s16 = ssub.s32 1, %s14
  %s17 = scalar_select 0, %s16, %s14
  $region1: #{convnet_basic_forward.1} parent=0
    #allocation8 [shape = 'u8[1024]{0}', space=vmem, size = 0x400, scoped, tag = 'output window, operand 0']
    #allocation9 [shape = 's32[2]{0}', space=sflag, size = 0x8, scoped, tag = 'scoped memory for convnet_basic_forward.1']
    %18 = vsyncpa [#allocation9], 0
    %s19 = scalar_lea.sflag [#allocation9], 1
    %20 = vsyncpa %s19, 0
    loop: start=0, step=1, limit=4
    $region2: #{convnet_basic_forward.1} parent=1 // loop_pre_header
      _
    $region3: #{convnet_basic_forward.1} parent=1 // loop_header
      %s22 = sphi 0, %s26
      %p23 = scmp.ge.s32.totalorder %s22, 4
      %s32 = sphi 0, %s34
      %s35 = sphi 0, %s32
      %s36 = sphi 0, %s35
      %s52 = sphi 0, %s36
      %s56 = sphi 0, %s56
      %s58 = sphi 0, %s56
      %s59 = sphi 0, %s58
      %s73 = sphi 0, %s59
      %s77 = sphi 0, %s77
      %s79 = sphi 0, %s77
      %s80 = sphi 0, %s79
      %s94 = sphi 0, %s80
      %s98 = sphi 0, %s98
      %s100 = sphi 0, %s98
      %s101 = sphi 0, %s100
      %s115 = sphi 0, %s101
      %s119 = sphi 0, %s119
      %s121 = sphi 0, %s119
      %s122 = sphi 0, %s121
      %s136 = sphi 0, %s122
      %s140 = sphi 0, %s140
      %s142 = sphi 0, %s140
      %s143 = sphi 0, %s142
      %s157 = sphi 0, %s143
      %s161 = sphi 0, %s161
      %s163 = sphi 0, %s161
      %s164 = sphi 0, %s163
      %s178 = sphi 0, %s164
      %s182 = sphi 0, %s182
      %s184 = sphi 0, %s182
      %s185 = sphi 0, %s184
      %s199 = sphi 0, %s185
      %s203 = sphi 0, %s203
      %s205 = sphi 0, %s203
      %s206 = sphi 0, %s205
      %s220 = sphi 0, %s206
      %s224 = sphi 0, %s224
      %s226 = sphi 0, %s224
      %s227 = sphi 0, %s226
      %s241 = sphi 0, %s227
      %s245 = sphi 0, %s245
      %s247 = sphi 0, %s245
      %s248 = sphi 0, %s247
      %s262 = sphi 0, %s248
      %s266 = sphi 0, %s266
      %s268 = sphi 0, %s266
      %s269 = sphi 0, %s268
      %s283 = sphi 0, %s269
      %s287 = sphi 0, %s287
      %s289 = sphi 0, %s287
      %s290 = sphi 0, %s289
      %s304 = sphi 0, %s290
      %s310 = sphi 0, %s312
      %s313 = sphi 0, %s310
      %s314 = sphi 0, %s313
      %s330 = sphi 0, %s314
    $region4: #{convnet_basic_forward.1} parent=1 // loop_header_branch
      %25 = sbr.rel (%p23) target = $region8
    $region5: #{convnet_basic_forward.1} parent=1 // loop_body
      %s27 = ssub.s32 %s22, 1
      %s28 = ssub.s32 %s22, 2
      %s29 = sadd.s32 %s22, 1
      %s30 = ssub.s32 %s22, %s29
      %p31 = scmp.eq.s32.totalorder %s30, 0
      %s33 = sadd.s32 %s32, 1
      %s34 = scalar_select %p31, %s32, %s33
      %p37 = pneg %p31
      %p38 = scmp.eq.s32.totalorder %s22, 1
      %p39 = por %p37, %p38
      %p40 = scmp.ne.s32.totalorder %s32, %s35
      %p41 = scmp.eq.s32.totalorder %s22, 0
      %p42 = por %p40, %p41
      %p43 = scmp.ne.s32.totalorder %s32, %s35
      %p44 = scmp.eq.s32.totalorder %s27, 1
      %p45 = por %p43, %p44
      %p46 = scmp.ne.s32.totalorder %s35, %s36
      %p47 = scmp.eq.s32.totalorder %s27, 0
      %p48 = por %p46, %p47
      %p49 = scmp.ne.s32.totalorder %s35, %s36
      %p50 = scmp.eq.s32.totalorder %s28, 1
      %p51 = por %p49, %p50
      %p53 = scmp.ne.s32.totalorder %s36, %s52
      %p54 = scmp.eq.s32.totalorder %s28, 0
      %p55 = por %p53, %p54
      %s57 = sadd.s32 %s56, 1
      %p60 = scmp.eq.s32.totalorder %s22, 1
      %p61 = scmp.ne.s32.totalorder %s56, %s58
      %p62 = scmp.eq.s32.totalorder %s22, 0
      %p63 = por %p61, %p62
      %p64 = scmp.ne.s32.totalorder %s56, %s58
      %p65 = scmp.eq.s32.totalorder %s27, 1
      %p66 = por %p64, %p65
      %p67 = scmp.ne.s32.totalorder %s58, %s59
      %p68 = scmp.eq.s32.totalorder %s27, 0
      %p69 = por %p67, %p68
      %p70 = scmp.ne.s32.totalorder %s58, %s59
      %p71 = scmp.eq.s32.totalorder %s28, 1
      %p72 = por %p70, %p71
      %p74 = scmp.ne.s32.totalorder %s59, %s73
      %p75 = scmp.eq.s32.totalorder %s28, 0
      %p76 = por %p74, %p75
      %s78 = sadd.s32 %s77, 1
      %p81 = scmp.eq.s32.totalorder %s22, 1
      %p82 = scmp.ne.s32.totalorder %s77, %s79
      %p83 = scmp.eq.s32.totalorder %s22, 0
      %p84 = por %p82, %p83
      %p85 = scmp.ne.s32.totalorder %s77, %s79
      %p86 = scmp.eq.s32.totalorder %s27, 1
      %p87 = por %p85, %p86
      %p88 = scmp.ne.s32.totalorder %s79, %s80
      %p89 = scmp.eq.s32.totalorder %s27, 0
      %p90 = por %p88, %p89
      %p91 = scmp.ne.s32.totalorder %s79, %s80
      %p92 = scmp.eq.s32.totalorder %s28, 1
      %p93 = por %p91, %p92
      %p95 = scmp.ne.s32.totalorder %s80, %s94
      %p96 = scmp.eq.s32.totalorder %s28, 0
      %p97 = por %p95, %p96
      %s99 = sadd.s32 %s98, 1
      %p102 = scmp.eq.s32.totalorder %s22, 1
      %p103 = scmp.ne.s32.totalorder %s98, %s100
      %p104 = scmp.eq.s32.totalorder %s22, 0
      %p105 = por %p103, %p104
      %p106 = scmp.ne.s32.totalorder %s98, %s100
      %p107 = scmp.eq.s32.totalorder %s27, 1
      %p108 = por %p106, %p107
      %p109 = scmp.ne.s32.totalorder %s100, %s101
      %p110 = scmp.eq.s32.totalorder %s27, 0
      %p111 = por %p109, %p110
      %p112 = scmp.ne.s32.totalorder %s100, %s101
      %p113 = scmp.eq.s32.totalorder %s28, 1
      %p114 = por %p112, %p113
      %p116 = scmp.ne.s32.totalorder %s101, %s115
      %p117 = scmp.eq.s32.totalorder %s28, 0
      %p118 = por %p116, %p117
      %s120 = sadd.s32 %s119, 1
      %p123 = scmp.eq.s32.totalorder %s22, 1
      %p124 = scmp.ne.s32.totalorder %s119, %s121
      %p125 = scmp.eq.s32.totalorder %s22, 0
      %p126 = por %p124, %p125
      %p127 = scmp.ne.s32.totalorder %s119, %s121
      %p128 = scmp.eq.s32.totalorder %s27, 1
      %p129 = por %p127, %p128
      %p130 = scmp.ne.s32.totalorder %s121, %s122
      %p131 = scmp.eq.s32.totalorder %s27, 0
      %p132 = por %p130, %p131
      %p133 = scmp.ne.s32.totalorder %s121, %s122
      %p134 = scmp.eq.s32.totalorder %s28, 1
      %p135 = por %p133, %p134
      %p137 = scmp.ne.s32.totalorder %s122, %s136
      %p138 = scmp.eq.s32.totalorder %s28, 0
      %p139 = por %p137, %p138
      %s141 = sadd.s32 %s140, 1
      %p144 = scmp.eq.s32.totalorder %s22, 1
      %p145 = scmp.ne.s32.totalorder %s140, %s142
      %p146 = scmp.eq.s32.totalorder %s22, 0
      %p147 = por %p145, %p146
      %p148 = scmp.ne.s32.totalorder %s140, %s142
      %p149 = scmp.eq.s32.totalorder %s27, 1
      %p150 = por %p148, %p149
      %p151 = scmp.ne.s32.totalorder %s142, %s143
      %p152 = scmp.eq.s32.totalorder %s27, 0
      %p153 = por %p151, %p152
      %p154 = scmp.ne.s32.totalorder %s142, %s143
      %p155 = scmp.eq.s32.totalorder %s28, 1
      %p156 = por %p154, %p155
      %p158 = scmp.ne.s32.totalorder %s143, %s157
      %p159 = scmp.eq.s32.totalorder %s28, 0
      %p160 = por %p158, %p159
      %s162 = sadd.s32 %s161, 1
      %p165 = scmp.eq.s32.totalorder %s22, 1
      %p166 = scmp.ne.s32.totalorder %s161, %s163
      %p167 = scmp.eq.s32.totalorder %s22, 0
      %p168 = por %p166, %p167
      %p169 = scmp.ne.s32.totalorder %s161, %s163
      %p170 = scmp.eq.s32.totalorder %s27, 1
      %p171 = por %p169, %p170
      %p172 = scmp.ne.s32.totalorder %s163, %s164
      %p173 = scmp.eq.s32.totalorder %s27, 0
      %p174 = por %p172, %p173
      %p175 = scmp.ne.s32.totalorder %s163, %s164
      %p176 = scmp.eq.s32.totalorder %s28, 1
      %p177 = por %p175, %p176
      %p179 = scmp.ne.s32.totalorder %s164, %s178
      %p180 = scmp.eq.s32.totalorder %s28, 0
      %p181 = por %p179, %p180
      %s183 = sadd.s32 %s182, 1
      %p186 = scmp.eq.s32.totalorder %s22, 1
      %p187 = scmp.ne.s32.totalorder %s182, %s184
      %p188 = scmp.eq.s32.totalorder %s22, 0
      %p189 = por %p187, %p188
      %p190 = scmp.ne.s32.totalorder %s182, %s184
      %p191 = scmp.eq.s32.totalorder %s27, 1
      %p192 = por %p190, %p191
      %p193 = scmp.ne.s32.totalorder %s184, %s185
      %p194 = scmp.eq.s32.totalorder %s27, 0
      %p195 = por %p193, %p194
      %p196 = scmp.ne.s32.totalorder %s184, %s185
      %p197 = scmp.eq.s32.totalorder %s28, 1
      %p198 = por %p196, %p197
      %p200 = scmp.ne.s32.totalorder %s185, %s199
      %p201 = scmp.eq.s32.totalorder %s28, 0
      %p202 = por %p200, %p201
      %s204 = sadd.s32 %s203, 1
      %p207 = scmp.eq.s32.totalorder %s22, 1
      %p208 = scmp.ne.s32.totalorder %s203, %s205
      %p209 = scmp.eq.s32.totalorder %s22, 0
      %p210 = por %p208, %p209
      %p211 = scmp.ne.s32.totalorder %s203, %s205
      %p212 = scmp.eq.s32.totalorder %s27, 1
      %p213 = por %p211, %p212
      %p214 = scmp.ne.s32.totalorder %s205, %s206
      %p215 = scmp.eq.s32.totalorder %s27, 0
      %p216 = por %p214, %p215
      %p217 = scmp.ne.s32.totalorder %s205, %s206
      %p218 = scmp.eq.s32.totalorder %s28, 1
      %p219 = por %p217, %p218
      %p221 = scmp.ne.s32.totalorder %s206, %s220
      %p222 = scmp.eq.s32.totalorder %s28, 0
      %p223 = por %p221, %p222
      %s225 = sadd.s32 %s224, 1
      %p228 = scmp.eq.s32.totalorder %s22, 1
      %p229 = scmp.ne.s32.totalorder %s224, %s226
      %p230 = scmp.eq.s32.totalorder %s22, 0
      %p231 = por %p229, %p230
      %p232 = scmp.ne.s32.totalorder %s224, %s226
      %p233 = scmp.eq.s32.totalorder %s27, 1
      %p234 = por %p232, %p233
      %p235 = scmp.ne.s32.totalorder %s226, %s227
      %p236 = scmp.eq.s32.totalorder %s27, 0
      %p237 = por %p235, %p236
      %p238 = scmp.ne.s32.totalorder %s226, %s227
      %p239 = scmp.eq.s32.totalorder %s28, 1
      %p240 = por %p238, %p239
      %p242 = scmp.ne.s32.totalorder %s227, %s241
      %p243 = scmp.eq.s32.totalorder %s28, 0
      %p244 = por %p242, %p243
      %s246 = sadd.s32 %s245, 1
      %p249 = scmp.eq.s32.totalorder %s22, 1
      %p250 = scmp.ne.s32.totalorder %s245, %s247
      %p251 = scmp.eq.s32.totalorder %s22, 0
      %p252 = por %p250, %p251
      %p253 = scmp.ne.s32.totalorder %s245, %s247
      %p254 = scmp.eq.s32.totalorder %s27, 1
      %p255 = por %p253, %p254
      %p256 = scmp.ne.s32.totalorder %s247, %s248
      %p257 = scmp.eq.s32.totalorder %s27, 0
      %p258 = por %p256, %p257
      %p259 = scmp.ne.s32.totalorder %s247, %s248
      %p260 = scmp.eq.s32.totalorder %s28, 1
      %p261 = por %p259, %p260
      %p263 = scmp.ne.s32.totalorder %s248, %s262
      %p264 = scmp.eq.s32.totalorder %s28, 0
      %p265 = por %p263, %p264
      %s267 = sadd.s32 %s266, 1
      %p270 = scmp.eq.s32.totalorder %s22, 1
      %p271 = scmp.ne.s32.totalorder %s266, %s268
      %p272 = scmp.eq.s32.totalorder %s22, 0
      %p273 = por %p271, %p272
      %p274 = scmp.ne.s32.totalorder %s266, %s268
      %p275 = scmp.eq.s32.totalorder %s27, 1
      %p276 = por %p274, %p275
      %p277 = scmp.ne.s32.totalorder %s268, %s269
      %p278 = scmp.eq.s32.totalorder %s27, 0
      %p279 = por %p277, %p278
      %p280 = scmp.ne.s32.totalorder %s268, %s269
      %p281 = scmp.eq.s32.totalorder %s28, 1
      %p282 = por %p280, %p281
      %p284 = scmp.ne.s32.totalorder %s269, %s283
      %p285 = scmp.eq.s32.totalorder %s28, 0
      %p286 = por %p284, %p285
      %s288 = sadd.s32 %s287, 1
      %p291 = scmp.eq.s32.totalorder %s22, 1
      %p292 = scmp.ne.s32.totalorder %s287, %s289
      %p293 = scmp.eq.s32.totalorder %s22, 0
      %p294 = por %p292, %p293
      %p295 = scmp.ne.s32.totalorder %s287, %s289
      %p296 = scmp.eq.s32.totalorder %s27, 1
      %p297 = por %p295, %p296
      %p298 = scmp.ne.s32.totalorder %s289, %s290
      %p299 = scmp.eq.s32.totalorder %s27, 0
      %p300 = por %p298, %p299
      %p301 = scmp.ne.s32.totalorder %s289, %s290
      %p302 = scmp.eq.s32.totalorder %s28, 1
      %p303 = por %p301, %p302
      %p305 = scmp.ne.s32.totalorder %s290, %s304
      %p306 = scmp.eq.s32.totalorder %s28, 0
      %p307 = por %p305, %p306
      %s308 = ssub.s32 %s22, %s29
      %p309 = scmp.eq.s32.totalorder %s308, 0
      %s311 = sadd.s32 %s310, 1
      %s312 = scalar_select %p309, %s310, %s311
      %p315 = pneg %p309
      %p316 = scmp.eq.s32.totalorder %s22, 1
      %p317 = por %p315, %p316
      %p318 = scmp.ne.s32.totalorder %s310, %s313
      %p319 = scmp.eq.s32.totalorder %s22, 0
      %p320 = por %p318, %p319
      %p321 = scmp.ne.s32.totalorder %s310, %s313
      %p322 = scmp.eq.s32.totalorder %s27, 1
      %p323 = por %p321, %p322
      %p324 = scmp.ne.s32.totalorder %s313, %s314
      %p325 = scmp.eq.s32.totalorder %s27, 0
      %p326 = por %p324, %p325
      %p327 = scmp.ne.s32.totalorder %s313, %s314
      %p328 = scmp.eq.s32.totalorder %s28, 1
      %p329 = por %p327, %p328
      %p331 = scmp.ne.s32.totalorder %s314, %s330
      %p332 = scmp.eq.s32.totalorder %s28, 0
      %p333 = por %p331, %p332
      %p334 = scmp.le.s32.totalorder 1, %s22
      %p335 = scmp.lt.s32.totalorder %s22, 3
      %p336 = pnand %p334, %p335
      %p337 = pneg %p336
      // Predicated region
      $region9: #{convnet_basic_forward.1} parent=5 // pred_check
        _
      $region10: #{convnet_basic_forward.1} parent=5 // pred_check_branch
        %339 = sbr.rel (%p336) target = $region12
      $region11: #{convnet_basic_forward.1} parent=5 // pred_region
        %s340 = ssub.s32 %s22, 1
        // Predicated region
        $region13: #{convnet_basic_forward.1} parent=11 // pred_check
          %p341 = pneg %p69
        $region14: #{convnet_basic_forward.1} parent=11 // pred_check_branch
          %343 = sbr.rel (%p341) target = $region16
        $region15: #{convnet_basic_forward.1} parent=11 // pred_region
          _
        $region16: #{convnet_basic_forward.1} parent=11 // pred_fallthru
          _
        // Predicated region
        $region17: #{convnet_basic_forward.1} parent=11 // pred_check
          %p344 = pneg %p90
        $region18: #{convnet_basic_forward.1} parent=11 // pred_check_branch
          %346 = sbr.rel (%p344) target = $region20
        $region19: #{convnet_basic_forward.1} parent=11 // pred_region
          _
        $region20: #{convnet_basic_forward.1} parent=11 // pred_fallthru
          _
        // Predicated region
        $region21: #{convnet_basic_forward.1} parent=11 // pred_check
          %p347 = pneg %p111
        $region22: #{convnet_basic_forward.1} parent=11 // pred_check_branch
          %349 = sbr.rel (%p347) target = $region24
        $region23: #{convnet_basic_forward.1} parent=11 // pred_region
          _
        $region24: #{convnet_basic_forward.1} parent=11 // pred_fallthru
          _
        // Predicated region
        $region25: #{convnet_basic_forward.1} parent=11 // pred_check
          %p350 = pneg %p132
        $region26: #{convnet_basic_forward.1} parent=11 // pred_check_branch
          %352 = sbr.rel (%p350) target = $region28
        $region27: #{convnet_basic_forward.1} parent=11 // pred_region
          _
        $region28: #{convnet_basic_forward.1} parent=11 // pred_fallthru
          _
        // Predicated region
        $region29: #{convnet_basic_forward.1} parent=11 // pred_check
          %p353 = pneg %p153
        $region30: #{convnet_basic_forward.1} parent=11 // pred_check_branch
          %355 = sbr.rel (%p353) target = $region32
        $region31: #{convnet_basic_forward.1} parent=11 // pred_region
          _
        $region32: #{convnet_basic_forward.1} parent=11 // pred_fallthru
          _
        // Predicated region
        $region33: #{convnet_basic_forward.1} parent=11 // pred_check
          %p356 = pneg %p174
        $region34: #{convnet_basic_forward.1} parent=11 // pred_check_branch
          %358 = sbr.rel (%p356) target = $region36
        $region35: #{convnet_basic_forward.1} parent=11 // pred_region
          _
        $region36: #{convnet_basic_forward.1} parent=11 // pred_fallthru
          _
        // Predicated region
        $region37: #{convnet_basic_forward.1} parent=11 // pred_check
          %p359 = pneg %p195
        $region38: #{convnet_basic_forward.1} parent=11 // pred_check_branch
          %361 = sbr.rel (%p359) target = $region40
        $region39: #{convnet_basic_forward.1} parent=11 // pred_region
          _
        $region40: #{convnet_basic_forward.1} parent=11 // pred_fallthru
          _
        // Predicated region
        $region41: #{convnet_basic_forward.1} parent=11 // pred_check
          %p362 = pneg %p216
        $region42: #{convnet_basic_forward.1} parent=11 // pred_check_branch
          %364 = sbr.rel (%p362) target = $region44
        $region43: #{convnet_basic_forward.1} parent=11 // pred_region
          _
        $region44: #{convnet_basic_forward.1} parent=11 // pred_fallthru
          _
        // Predicated region
        $region45: #{convnet_basic_forward.1} parent=11 // pred_check
          %p365 = pneg %p237
        $region46: #{convnet_basic_forward.1} parent=11 // pred_check_branch
          %367 = sbr.rel (%p365) target = $region48
        $region47: #{convnet_basic_forward.1} parent=11 // pred_region
          _
        $region48: #{convnet_basic_forward.1} parent=11 // pred_fallthru
          _
        // Predicated region
        $region49: #{convnet_basic_forward.1} parent=11 // pred_check
          %p368 = pneg %p258
        $region50: #{convnet_basic_forward.1} parent=11 // pred_check_branch
          %370 = sbr.rel (%p368) target = $region52
        $region51: #{convnet_basic_forward.1} parent=11 // pred_region
          _
        $region52: #{convnet_basic_forward.1} parent=11 // pred_fallthru
          _
        // Predicated region
        $region53: #{convnet_basic_forward.1} parent=11 // pred_check
          %p371 = pneg %p279
        $region54: #{convnet_basic_forward.1} parent=11 // pred_check_branch
          %373 = sbr.rel (%p371) target = $region56
        $region55: #{convnet_basic_forward.1} parent=11 // pred_region
          _
        $region56: #{convnet_basic_forward.1} parent=11 // pred_fallthru
          _
        // Predicated region
        $region57: #{convnet_basic_forward.1} parent=11 // pred_check
          %p374 = pneg %p300
        $region58: #{convnet_basic_forward.1} parent=11 // pred_check_branch
          %376 = sbr.rel (%p374) target = $region60
        $region59: #{convnet_basic_forward.1} parent=11 // pred_region
          _
        $region60: #{convnet_basic_forward.1} parent=11 // pred_fallthru
          _
      $region12: #{convnet_basic_forward.1} parent=5 // pred_fallthru
        _
      %p377 = scmp.lt.s32.totalorder %s22, 2
      // Predicated region
      $region61: #{convnet_basic_forward.1} parent=5 // pred_check
        %p378 = pneg %p377
      $region62: #{convnet_basic_forward.1} parent=5 // pred_check_branch
        %380 = sbr.rel (%p378) target = $region64
      $region63: #{convnet_basic_forward.1} parent=5 // pred_region
        // Predicated region
        $region65: #{convnet_basic_forward.1} parent=63 // pred_check
          %p381 = pneg %p42
        $region66: #{convnet_basic_forward.1} parent=63 // pred_check_branch
          %383 = sbr.rel (%p381) target = $region68
        $region67: #{convnet_basic_forward.1} parent=63 // pred_region
          %p384 = scmp.lt.s32.totalorder %s22, 1
          %s385 = scalar_select %p384, %s22, 1
          %s386 = smul.addr %s385, 12
          %s387 = smul.addr %s386, 8
          %s388 = scalar_lea.vmem %s0, %s387
        $region68: #{convnet_basic_forward.1} parent=63 // pred_fallthru
          _
      $region64: #{convnet_basic_forward.1} parent=5 // pred_fallthru
        _
      %p389 = scmp.le.s32.totalorder 1, %s22
      %p390 = scmp.lt.s32.totalorder %s22, 3
      %p391 = pnand %p389, %p390
      %p392 = pneg %p391
      // Predicated region
      $region69: #{convnet_basic_forward.1} parent=5 // pred_check
        _
      $region70: #{convnet_basic_forward.1} parent=5 // pred_check_branch
        %394 = sbr.rel (%p391) target = $region72
      $region71: #{convnet_basic_forward.1} parent=5 // pred_region
        %s395 = ssub.s32 %s22, 1
        %p396 = scmp.lt.s32.totalorder %s27, 1
        %s397 = scalar_select %p396, %s27, 1
        %s398 = smul.addr %s397, 12
        %s399 = smul.addr %s398, 8
        %s400 = scalar_lea.vmem %s0, %s399
        %p401 = pneg %p48
        %p402 = pneg %p45
        %p403 = pneg %p69
        %p404 = pneg %p66
        %p405 = pneg %p90
        %p406 = pneg %p87
        %p407 = pneg %p111
        %p408 = pneg %p108
        %p409 = pneg %p132
        %p410 = pneg %p129
        %p411 = pneg %p153
        %p412 = pneg %p150
        %p413 = pneg %p174
        %p414 = pneg %p171
        %p415 = pneg %p195
        %p416 = pneg %p192
        %p417 = pneg %p216
        %p418 = pneg %p213
        %p419 = pneg %p237
        %p420 = pneg %p234
        %p421 = pneg %p258
        %p422 = pneg %p255
        %p423 = pneg %p279
        %p424 = pneg %p276
        %p425 = pneg %p300
        %p426 = pneg %p297
        %p427 = pneg %p326
        %p428 = pneg %p323
        %s429 = sand.u32 %s313, 1
        %s430 = scalar_lea.sflag [#allocation9], %s429
        %s431 = sand.u32 %s313, 1
        %s432 = scalar_lea.vmem [#allocation8], %s431
        %p433 = scmp.lt.s32.totalorder %s27, 1
        %s434 = scalar_select %p433, %s27, 1
        %s435 = smul.addr %s434, 12
        %s436 = smul.addr %s435, 8
        %s437 = scalar_lea.vmem %s0, %s436
        %v438 = vld [vmem:[%s437] sm:$0xff]
        %v439 = vld [vmem:[%s437 + $0x8] sm:$0xff]
        %v440 = vld [vmem:[%s437 + $0x10] sm:$0xff]
        %v441 = vld [vmem:[%s437 + $0x18] sm:$0x3f]
        %v442 = vld [vmem:[%s1] sm:$0xff]
        %v443 = vld [vmem:[%s1 + $0x8] sm:$0xff]
        %v444 = vld [vmem:[%s1 + $0x10] sm:$0xff]
        %v445 = vld [vmem:[%s1 + $0x18] sm:$0xff]
        %v446 = vld [vmem:[%s1 + $0x20] sm:$0xff]
        %v447 = vld [vmem:[%s1 + $0x28] sm:$0xff]
        %v448 = vld [vmem:[%s1 + $0x30] sm:$0xff]
        %v449 = vld [vmem:[%s1 + $0x38] sm:$0xff]
        %v450 = vld [vmem:[%s1 + $0x40] sm:$0xff]
        %v451 = vld [vmem:[%s1 + $0x48] sm:$0xff]
        %v452 = vld [vmem:[%s1 + $0x50] sm:$0xff]
        %v453 = vld [vmem:[%s1 + $0x58] sm:$0xff]
        %v454 = vld [vmem:[%s437 + $0x20] sm:$0xff]
        %v455 = vld [vmem:[%s437 + $0x28] sm:$0xff]
        %v456 = vld [vmem:[%s437 + $0x30] sm:$0xff]
        %v457 = vld [vmem:[%s437 + $0x38] sm:$0x3f]
        %s458 = scalar_lea.vmem %s1, 96
        %v459 = vld [vmem:[%s458] sm:$0xff]
        %v460 = vld [vmem:[%s458 + $0x8] sm:$0xff]
        %v461 = vld [vmem:[%s458 + $0x10] sm:$0xff]
        %v462 = vld [vmem:[%s458 + $0x18] sm:$0xff]
        %v463 = vld [vmem:[%s458 + $0x20] sm:$0xff]
        %v464 = vld [vmem:[%s458 + $0x28] sm:$0xff]
        %v465 = vld [vmem:[%s458 + $0x30] sm:$0xff]
        %v466 = vld [vmem:[%s458 + $0x38] sm:$0xff]
        %v467 = vld [vmem:[%s458 + $0x40] sm:$0xff]
        %v468 = vld [vmem:[%s458 + $0x48] sm:$0xff]
        %v469 = vld [vmem:[%s458 + $0x50] sm:$0xff]
        %v470 = vld [vmem:[%s458 + $0x58] sm:$0xff]
        %vm471 = vcmask 261120
        %v473 = vsel %vm471, %v454, 0
        %v476 = vsel %vm471, %v455, 0
        %v479 = vsel %vm471, %v456, 0
        %v482 = vsel %vm471, %v457, 0
        %484 = vmatprep.subr.mxu0 0.0
        %485 = vmatpush1.msra.mxu0 0.0
        %486 = vmatprep.subr.mxu0 0.0
        %487 = vmatpush1.msra.mxu0 0.0
        %488 = vmatprep.subr.mxu0 0.0
        %489 = vmatpush1.msra.mxu0 0.0
        %490 = vmatprep.subr.mxu0 0.0
        %491 = vmatpush1.msra.mxu0 0.0
        %492 = vmatprep.subr.mxu0 0.0
        %493 = vmatpush1.msra.mxu0 0.0
        %494 = vmatprep.subr.mxu0 0.0
        %495 = vmatpush1.msra.mxu0 0.0
        %496 = vmatprep.subr.mxu0 0.0
        %497 = vmatpush1.msra.mxu0 0.0
        %498 = vmatprep.subr.mxu0 0.0
        %499 = vmatpush1.msra.mxu0 0.0
        %500 = vmatprep.subr.mxu0 0.0
        %501 = vmatpush1.msra.mxu0 0.0
        %502 = vmatprep.subr.mxu0 0.0
        %503 = vmatpush1.msra.mxu0 0.0
        %504 = vmatprep.subr.mxu0 0.0
        %505 = vmatpush1.msra.mxu0 0.0
        %506 = vmatprep.subr.mxu0 0.0
        %507 = vmatpush1.msra.mxu0 0.0
        %508 = vmatprep.subr.mxu0 %v469
        %509 = vmatpush1.msra.mxu0 %v468
        %510 = vmatprep.subr.mxu0 %v466
        %511 = vmatpush1.msra.mxu0 %v465
        %512 = vmatprep.subr.mxu0 %v463
        %513 = vmatpush1.msra.mxu0 %v462
        %514 = vmatprep.subr.mxu0 %v460
        %515 = vmatpush1.msra.mxu0 %v459
        %516 = vmatprep.subr.mxu0 0.0
        %517 = vmatpush2.msra.mxu0 0.0
        %518 = vmatprep.subr.mxu0 0.0
        %519 = vmatpush2.msra.mxu0 0.0
        %520 = vmatprep.subr.mxu0 0.0
        %521 = vmatpush2.msra.mxu0 0.0
        %522 = vmatprep.subr.mxu0 0.0
        %523 = vmatpush2.msra.mxu0 0.0
        %524 = vmatprep.subr.mxu0 0.0
        %525 = vmatpush2.msra.mxu0 0.0
        %526 = vmatprep.subr.mxu0 0.0
        %527 = vmatpush2.msra.mxu0 0.0
        %528 = vmatprep.subr.mxu0 0.0
        %529 = vmatpush2.msra.mxu0 0.0
        %530 = vmatprep.subr.mxu0 0.0
        %531 = vmatpush2.msra.mxu0 0.0
        %532 = vmatprep.subr.mxu0 0.0
        %533 = vmatpush2.msra.mxu0 0.0
        %534 = vmatprep.subr.mxu0 0.0
        %535 = vmatpush2.msra.mxu0 0.0
        %536 = vmatprep.subr.mxu0 0.0
        %537 = vmatpush2.msra.mxu0 0.0
        %538 = vmatprep.subr.mxu0 0.0
        %539 = vmatpush2.msra.mxu0 0.0
        %540 = vmatprep.subr.mxu0 0.0
        %541 = vmatpush2.msra.mxu0 0.0
        %542 = vmatprep.subr.mxu0 0.0
        %543 = vmatpush2.msra.mxu0 0.0
        %544 = vmatprep.subr.mxu0 0.0
        %545 = vmatpush2.msra.mxu0 0.0
        %546 = vmatprep.subr.mxu0 0.0
        %547 = vmatpush2.msra.mxu0 0.0
        %548 = vmatprep.mubr.f32.mxu0 0.0
        %549 = vmatmul.mubr.f32.gmra.mxu0 %v473
        %v550 = vpop.f32.mrf.mxu0
        %v551 = vadd.f32 0.0, %v550
        %v552 = vpop.f32.mrf.mxu0
        %v553 = vadd.f32 0.0, %v552
        %554 = vmatprep.mubr.f32.mxu0 0.0
        %555 = vmatmul.mubr.f32.gmra.mxu0 %v476
        %v556 = vpop.f32.mrf.mxu0
        %v557 = vadd.f32 0.0, %v556
        %v558 = vpop.f32.mrf.mxu0
        %v559 = vadd.f32 0.0, %v558
        %560 = vmatprep.mubr.f32.mxu0 0.0
        %561 = vmatmul.mubr.f32.gmra.mxu0 %v479
        %v562 = vpop.f32.mrf.mxu0
        %v563 = vadd.f32 0.0, %v562
        %v564 = vpop.f32.mrf.mxu0
        %v565 = vadd.f32 0.0, %v564
        %566 = vmatprep.mubr.f32.mxu0 0.0
        %567 = vmatmul.mubr.f32.gmra.mxu0 %v482
        %v568 = vpop.f32.mrf.mxu0
        %v569 = vadd.f32 0.0, %v568
        %v570 = vpop.f32.mrf.mxu0
        %v571 = vadd.f32 0.0, %v570
        %572 = vdwg.mxu0
        %573 = vmatprep.subr.mxu0 0.0
        %574 = vmatpush1.msra.mxu0 0.0
        %575 = vmatprep.subr.mxu0 0.0
        %576 = vmatpush1.msra.mxu0 0.0
        %577 = vmatprep.subr.mxu0 0.0
        %578 = vmatpush1.msra.mxu0 0.0
        %579 = vmatprep.subr.mxu0 0.0
        %580 = vmatpush1.msra.mxu0 0.0
        %581 = vmatprep.subr.mxu0 0.0
        %582 = vmatpush1.msra.mxu0 0.0
        %583 = vmatprep.subr.mxu0 0.0
        %584 = vmatpush1.msra.mxu0 0.0
        %585 = vmatprep.subr.mxu0 0.0
        %586 = vmatpush1.msra.mxu0 0.0
        %587 = vmatprep.subr.mxu0 0.0
        %588 = vmatpush1.msra.mxu0 0.0
        %589 = vmatprep.subr.mxu0 0.0
        %590 = vmatpush1.msra.mxu0 0.0
        %591 = vmatprep.subr.mxu0 0.0
        %592 = vmatpush1.msra.mxu0 0.0
        %593 = vmatprep.subr.mxu0 0.0
        %594 = vmatpush1.msra.mxu0 0.0
        %595 = vmatprep.subr.mxu0 0.0
        %596 = vmatpush1.msra.mxu0 0.0
        %597 = vmatprep.subr.mxu0 0.0
        %598 = vmatpush1.msra.mxu0 %v470
        %599 = vmatprep.subr.mxu0 0.0
        %600 = vmatpush1.msra.mxu0 %v467
        %601 = vmatprep.subr.mxu0 0.0
        %602 = vmatpush1.msra.mxu0 %v464
        %603 = vmatprep.subr.mxu0 0.0
        %604 = vmatpush1.msra.mxu0 %v461
        %605 = vmatprep.subr.mxu0 0.0
        %606 = vmatpush2.msra.mxu0 0.0
        %607 = vmatprep.subr.mxu0 0.0
        %608 = vmatpush2.msra.mxu0 0.0
        %609 = vmatprep.subr.mxu0 0.0
        %610 = vmatpush2.msra.mxu0 0.0
        %611 = vmatprep.subr.mxu0 0.0
        %612 = vmatpush2.msra.mxu0 0.0
        %613 = vmatprep.subr.mxu0 0.0
        %614 = vmatpush2.msra.mxu0 0.0
        %615 = vmatprep.subr.mxu0 0.0
        %616 = vmatpush2.msra.mxu0 0.0
        %617 = vmatprep.subr.mxu0 0.0
        %618 = vmatpush2.msra.mxu0 0.0
        %619 = vmatprep.subr.mxu0 0.0
        %620 = vmatpush2.msra.mxu0 0.0
        %621 = vmatprep.subr.mxu0 0.0
        %622 = vmatpush2.msra.mxu0 0.0
        %623 = vmatprep.subr.mxu0 0.0
        %624 = vmatpush2.msra.mxu0 0.0
        %625 = vmatprep.subr.mxu0 0.0
        %626 = vmatpush2.msra.mxu0 0.0
        %627 = vmatprep.subr.mxu0 0.0
        %628 = vmatpush2.msra.mxu0 0.0
        %629 = vmatprep.subr.mxu0 0.0
        %630 = vmatpush2.msra.mxu0 0.0
        %631 = vmatprep.subr.mxu0 0.0
        %632 = vmatpush2.msra.mxu0 0.0
        %633 = vmatprep.subr.mxu0 0.0
        %634 = vmatpush2.msra.mxu0 0.0
        %635 = vmatprep.subr.mxu0 0.0
        %636 = vmatpush2.msra.mxu0 0.0
        %637 = vmatprep.mubr.f32.mxu0 0.0
        %638 = vmatmul.mubr.f32.gmra.mxu0 %v473
        %v639 = vpop.f32.mrf.mxu0
        %v640 = vadd.f32 0.0, %v639
        %v641 = vpop.f32.mrf.mxu0
        %642 = vmatprep.mubr.f32.mxu0 0.0
        %643 = vmatmul.mubr.f32.gmra.mxu0 %v476
        %v644 = vpop.f32.mrf.mxu0
        %v645 = vadd.f32 0.0, %v644
        %v646 = vpop.f32.mrf.mxu0
        %647 = vmatprep.mubr.f32.mxu0 0.0
        %648 = vmatmul.mubr.f32.gmra.mxu0 %v479
        %v649 = vpop.f32.mrf.mxu0
        %v650 = vadd.f32 0.0, %v649
        %v651 = vpop.f32.mrf.mxu0
        %652 = vmatprep.mubr.f32.mxu0 0.0
        %653 = vmatmul.mubr.f32.gmra.mxu0 %v482
        %v654 = vpop.f32.mrf.mxu0
        %v655 = vadd.f32 0.0, %v654
        %v656 = vpop.f32.mrf.mxu0
        %657 = vdwg.mxu0
        %v659 = vsel %vm471, %v438, 0
        %v662 = vsel %vm471, %v439, 0
        %v665 = vsel %vm471, %v440, 0
        %v668 = vsel %vm471, %v441, 0
        %670 = vmatprep.subr.mxu0 0.0
        %671 = vmatpush1.msra.mxu0 0.0
        %672 = vmatprep.subr.mxu0 0.0
        %673 = vmatpush1.msra.mxu0 0.0
        %674 = vmatprep.subr.mxu0 0.0
        %675 = vmatpush1.msra.mxu0 0.0
        %676 = vmatprep.subr.mxu0 0.0
        %677 = vmatpush1.msra.mxu0 0.0
        %678 = vmatprep.subr.mxu0 0.0
        %679 = vmatpush1.msra.mxu0 0.0
        %680 = vmatprep.subr.mxu0 0.0
        %681 = vmatpush1.msra.mxu0 0.0
        %682 = vmatprep.subr.mxu0 0.0
        %683 = vmatpush1.msra.mxu0 0.0
        %684 = vmatprep.subr.mxu0 0.0
        %685 = vmatpush1.msra.mxu0 0.0
        %686 = vmatprep.subr.mxu0 0.0
        %687 = vmatpush1.msra.mxu0 0.0
        %688 = vmatprep.subr.mxu0 0.0
        %689 = vmatpush1.msra.mxu0 0.0
        %690 = vmatprep.subr.mxu0 0.0
        %691 = vmatpush1.msra.mxu0 0.0
        %692 = vmatprep.subr.mxu0 0.0
        %693 = vmatpush1.msra.mxu0 0.0
        %694 = vmatprep.subr.mxu0 %v452
        %695 = vmatpush1.msra.mxu0 %v451
        %696 = vmatprep.subr.mxu0 %v449
        %697 = vmatpush1.msra.mxu0 %v448
        %698 = vmatprep.subr.mxu0 %v446
        %699 = vmatpush1.msra.mxu0 %v445
        %700 = vmatprep.subr.mxu0 %v443
        %701 = vmatpush1.msra.mxu0 %v442
        %702 = vmatprep.subr.mxu0 0.0
        %703 = vmatpush2.msra.mxu0 0.0
        %704 = vmatprep.subr.mxu0 0.0
        %705 = vmatpush2.msra.mxu0 0.0
        %706 = vmatprep.subr.mxu0 0.0
        %707 = vmatpush2.msra.mxu0 0.0
        %708 = vmatprep.subr.mxu0 0.0
        %709 = vmatpush2.msra.mxu0 0.0
        %710 = vmatprep.subr.mxu0 0.0
        %711 = vmatpush2.msra.mxu0 0.0
        %712 = vmatprep.subr.mxu0 0.0
        %713 = vmatpush2.msra.mxu0 0.0
        %714 = vmatprep.subr.mxu0 0.0
        %715 = vmatpush2.msra.mxu0 0.0
        %716 = vmatprep.subr.mxu0 0.0
        %717 = vmatpush2.msra.mxu0 0.0
        %718 = vmatprep.subr.mxu0 0.0
        %719 = vmatpush2.msra.mxu0 0.0
        %720 = vmatprep.subr.mxu0 0.0
        %721 = vmatpush2.msra.mxu0 0.0
        %722 = vmatprep.subr.mxu0 0.0
        %723 = vmatpush2.msra.mxu0 0.0
        %724 = vmatprep.subr.mxu0 0.0
        %725 = vmatpush2.msra.mxu0 0.0
        %726 = vmatprep.subr.mxu0 0.0
        %727 = vmatpush2.msra.mxu0 0.0
        %728 = vmatprep.subr.mxu0 0.0
        %729 = vmatpush2.msra.mxu0 0.0
        %730 = vmatprep.subr.mxu0 0.0
        %731 = vmatpush2.msra.mxu0 0.0
        %732 = vmatprep.subr.mxu0 0.0
        %733 = vmatpush2.msra.mxu0 0.0
        %734 = vmatprep.mubr.f32.mxu0 0.0
        %735 = vmatmul.mubr.f32.gmra.mxu0 %v659
        %v736 = vpop.f32.mrf.mxu0
        %v737 = vadd.f32 %v551, %v736
        %v738 = vpop.f32.mrf.mxu0
        %v739 = vadd.f32 %v553, %v738
        %740 = vmatprep.mubr.f32.mxu0 0.0
        %741 = vmatmul.mubr.f32.gmra.mxu0 %v662
        %v742 = vpop.f32.mrf.mxu0
        %v743 = vadd.f32 %v557, %v742
        %v744 = vpop.f32.mrf.mxu0
        %v745 = vadd.f32 %v559, %v744
        %746 = vmatprep.mubr.f32.mxu0 0.0
        %747 = vmatmul.mubr.f32.gmra.mxu0 %v665
        %v748 = vpop.f32.mrf.mxu0
        %v749 = vadd.f32 %v563, %v748
        %v750 = vpop.f32.mrf.mxu0
        %v751 = vadd.f32 %v565, %v750
        %752 = vmatprep.mubr.f32.mxu0 0.0
        %753 = vmatmul.mubr.f32.gmra.mxu0 %v668
        %v754 = vpop.f32.mrf.mxu0
        %v755 = vadd.f32 %v569, %v754
        %v756 = vpop.f32.mrf.mxu0
        %v757 = vadd.f32 %v571, %v756
        %758 = vdwg.mxu0
        %759 = vmatprep.subr.mxu0 0.0
        %760 = vmatpush1.msra.mxu0 0.0
        %761 = vmatprep.subr.mxu0 0.0
        %762 = vmatpush1.msra.mxu0 0.0
        %763 = vmatprep.subr.mxu0 0.0
        %764 = vmatpush1.msra.mxu0 0.0
        %765 = vmatprep.subr.mxu0 0.0
        %766 = vmatpush1.msra.mxu0 0.0
        %767 = vmatprep.subr.mxu0 0.0
        %768 = vmatpush1.msra.mxu0 0.0
        %769 = vmatprep.subr.mxu0 0.0
        %770 = vmatpush1.msra.mxu0 0.0
        %771 = vmatprep.subr.mxu0 0.0
        %772 = vmatpush1.msra.mxu0 0.0
        %773 = vmatprep.subr.mxu0 0.0
        %774 = vmatpush1.msra.mxu0 0.0
        %775 = vmatprep.subr.mxu0 0.0
        %776 = vmatpush1.msra.mxu0 0.0
        %777 = vmatprep.subr.mxu0 0.0
        %778 = vmatpush1.msra.mxu0 0.0
        %779 = vmatprep.subr.mxu0 0.0
        %780 = vmatpush1.msra.mxu0 0.0
        %781 = vmatprep.subr.mxu0 0.0
        %782 = vmatpush1.msra.mxu0 0.0
        %783 = vmatprep.subr.mxu0 0.0
        %784 = vmatpush1.msra.mxu0 %v453
        %785 = vmatprep.subr.mxu0 0.0
        %786 = vmatpush1.msra.mxu0 %v450
        %787 = vmatprep.subr.mxu0 0.0
        %788 = vmatpush1.msra.mxu0 %v447
        %789 = vmatprep.subr.mxu0 0.0
        %790 = vmatpush1.msra.mxu0 %v444
        %791 = vmatprep.subr.mxu0 0.0
        %792 = vmatpush2.msra.mxu0 0.0
        %793 = vmatprep.subr.mxu0 0.0
        %794 = vmatpush2.msra.mxu0 0.0
        %795 = vmatprep.subr.mxu0 0.0
        %796 = vmatpush2.msra.mxu0 0.0
        %797 = vmatprep.subr.mxu0 0.0
        %798 = vmatpush2.msra.mxu0 0.0
        %799 = vmatprep.subr.mxu0 0.0
        %800 = vmatpush2.msra.mxu0 0.0
        %801 = vmatprep.subr.mxu0 0.0
        %802 = vmatpush2.msra.mxu0 0.0
        %803 = vmatprep.subr.mxu0 0.0
        %804 = vmatpush2.msra.mxu0 0.0
        %805 = vmatprep.subr.mxu0 0.0
        %806 = vmatpush2.msra.mxu0 0.0
        %807 = vmatprep.subr.mxu0 0.0
        %808 = vmatpush2.msra.mxu0 0.0
        %809 = vmatprep.subr.mxu0 0.0
        %810 = vmatpush2.msra.mxu0 0.0
        %811 = vmatprep.subr.mxu0 0.0
        %812 = vmatpush2.msra.mxu0 0.0
        %813 = vmatprep.subr.mxu0 0.0
        %814 = vmatpush2.msra.mxu0 0.0
        %815 = vmatprep.subr.mxu0 0.0
        %816 = vmatpush2.msra.mxu0 0.0
        %817 = vmatprep.subr.mxu0 0.0
        %818 = vmatpush2.msra.mxu0 0.0
        %819 = vmatprep.subr.mxu0 0.0
        %820 = vmatpush2.msra.mxu0 0.0
        %821 = vmatprep.subr.mxu0 0.0
        %822 = vmatpush2.msra.mxu0 0.0
        %823 = vmatprep.mubr.f32.mxu0 0.0
        %824 = vmatmul.mubr.f32.gmra.mxu0 %v659
        %v825 = vpop.f32.mrf.mxu0
        %v826 = vadd.f32 %v640, %v825
        %v827 = vpop.f32.mrf.mxu0
        %828 = vmatprep.mubr.f32.mxu0 0.0
        %829 = vmatmul.mubr.f32.gmra.mxu0 %v662
        %v830 = vpop.f32.mrf.mxu0
        %v831 = vadd.f32 %v645, %v830
        %v832 = vpop.f32.mrf.mxu0
        %833 = vmatprep.mubr.f32.mxu0 0.0
        %834 = vmatmul.mubr.f32.gmra.mxu0 %v665
        %v835 = vpop.f32.mrf.mxu0
        %v836 = vadd.f32 %v650, %v835
        %v837 = vpop.f32.mrf.mxu0
        %838 = vmatprep.mubr.f32.mxu0 0.0
        %839 = vmatmul.mubr.f32.gmra.mxu0 %v668
        %v840 = vpop.f32.mrf.mxu0
        %v841 = vadd.f32 %v655, %v840
        %v842 = vpop.f32.mrf.mxu0
        %843 = vdwg.mxu0
        %v844 = vld [vmem:[%s437 + $0x40] sm:$0xff]
        %v845 = vld [vmem:[%s437 + $0x48] sm:$0xff]
        %v846 = vld [vmem:[%s437 + $0x50] sm:$0xff]
        %v847 = vld [vmem:[%s437 + $0x58] sm:$0x3f]
        %s848 = scalar_lea.vmem %s1, 192
        %v849 = vld [vmem:[%s848] sm:$0xff]
        %v850 = vld [vmem:[%s848 + $0x8] sm:$0xff]
        %v851 = vld [vmem:[%s848 + $0x10] sm:$0xff]
        %v852 = vld [vmem:[%s848 + $0x18] sm:$0xff]
        %v853 = vld [vmem:[%s848 + $0x20] sm:$0xff]
        %v854 = vld [vmem:[%s848 + $0x28] sm:$0xff]
        %v855 = vld [vmem:[%s848 + $0x30] sm:$0xff]
        %v856 = vld [vmem:[%s848 + $0x38] sm:$0xff]
        %v857 = vld [vmem:[%s848 + $0x40] sm:$0xff]
        %v858 = vld [vmem:[%s848 + $0x48] sm:$0xff]
        %v859 = vld [vmem:[%s848 + $0x50] sm:$0xff]
        %v860 = vld [vmem:[%s848 + $0x58] sm:$0xff]
        %v862 = vsel %vm471, %v844, 0
        %v865 = vsel %vm471, %v845, 0
        %v868 = vsel %vm471, %v846, 0
        %v871 = vsel %vm471, %v847, 0
        %873 = vmatprep.subr.mxu0 0.0
        %874 = vmatpush1.msra.mxu0 0.0
        %875 = vmatprep.subr.mxu0 0.0
        %876 = vmatpush1.msra.mxu0 0.0
        %877 = vmatprep.subr.mxu0 0.0
        %878 = vmatpush1.msra.mxu0 0.0
        %879 = vmatprep.subr.mxu0 0.0
        %880 = vmatpush1.msra.mxu0 0.0
        %881 = vmatprep.subr.mxu0 0.0
        %882 = vmatpush1.msra.mxu0 0.0
        %883 = vmatprep.subr.mxu0 0.0
        %884 = vmatpush1.msra.mxu0 0.0
        %885 = vmatprep.subr.mxu0 0.0
        %886 = vmatpush1.msra.mxu0 0.0
        %887 = vmatprep.subr.mxu0 0.0
        %888 = vmatpush1.msra.mxu0 0.0
        %889 = vmatprep.subr.mxu0 0.0
        %890 = vmatpush1.msra.mxu0 0.0
        %891 = vmatprep.subr.mxu0 0.0
        %892 = vmatpush1.msra.mxu0 0.0
        %893 = vmatprep.subr.mxu0 0.0
        %894 = vmatpush1.msra.mxu0 0.0
        %895 = vmatprep.subr.mxu0 0.0
        %896 = vmatpush1.msra.mxu0 0.0
        %897 = vmatprep.subr.mxu0 %v859
        %898 = vmatpush1.msra.mxu0 %v858
        %899 = vmatprep.subr.mxu0 %v856
        %900 = vmatpush1.msra.mxu0 %v855
        %901 = vmatprep.subr.mxu0 %v853
        %902 = vmatpush1.msra.mxu0 %v852
        %903 = vmatprep.subr.mxu0 %v850
        %904 = vmatpush1.msra.mxu0 %v849
        %905 = vmatprep.subr.mxu0 0.0
        %906 = vmatpush2.msra.mxu0 0.0
        %907 = vmatprep.subr.mxu0 0.0
        %908 = vmatpush2.msra.mxu0 0.0
        %909 = vmatprep.subr.mxu0 0.0
        %910 = vmatpush2.msra.mxu0 0.0
        %911 = vmatprep.subr.mxu0 0.0
        %912 = vmatpush2.msra.mxu0 0.0
        %913 = vmatprep.subr.mxu0 0.0
        %914 = vmatpush2.msra.mxu0 0.0
        %915 = vmatprep.subr.mxu0 0.0
        %916 = vmatpush2.msra.mxu0 0.0
        %917 = vmatprep.subr.mxu0 0.0
        %918 = vmatpush2.msra.mxu0 0.0
        %919 = vmatprep.subr.mxu0 0.0
        %920 = vmatpush2.msra.mxu0 0.0
        %921 = vmatprep.subr.mxu0 0.0
        %922 = vmatpush2.msra.mxu0 0.0
        %923 = vmatprep.subr.mxu0 0.0
        %924 = vmatpush2.msra.mxu0 0.0
        %925 = vmatprep.subr.mxu0 0.0
        %926 = vmatpush2.msra.mxu0 0.0
        %927 = vmatprep.subr.mxu0 0.0
        %928 = vmatpush2.msra.mxu0 0.0
        %929 = vmatprep.subr.mxu0 0.0
        %930 = vmatpush2.msra.mxu0 0.0
        %931 = vmatprep.subr.mxu0 0.0
        %932 = vmatpush2.msra.mxu0 0.0
        %933 = vmatprep.subr.mxu0 0.0
        %934 = vmatpush2.msra.mxu0 0.0
        %935 = vmatprep.subr.mxu0 0.0
        %936 = vmatpush2.msra.mxu0 0.0
        %937 = vmatprep.mubr.f32.mxu0 0.0
        %938 = vmatmul.mubr.f32.gmra.mxu0 %v862
        %v939 = vpop.f32.mrf.mxu0
        %v940 = vadd.f32 0.0, %v939
        %v941 = vpop.f32.mrf.mxu0
        %v942 = vadd.f32 0.0, %v941
        %943 = vmatprep.mubr.f32.mxu0 0.0
        %944 = vmatmul.mubr.f32.gmra.mxu0 %v865
        %v945 = vpop.f32.mrf.mxu0
        %v946 = vadd.f32 0.0, %v945
        %v947 = vpop.f32.mrf.mxu0
        %v948 = vadd.f32 0.0, %v947
        %949 = vmatprep.mubr.f32.mxu0 0.0
        %950 = vmatmul.mubr.f32.gmra.mxu0 %v868
        %v951 = vpop.f32.mrf.mxu0
        %v952 = vadd.f32 0.0, %v951
        %v953 = vpop.f32.mrf.mxu0
        %v954 = vadd.f32 0.0, %v953
        %955 = vmatprep.mubr.f32.mxu0 0.0
        %956 = vmatmul.mubr.f32.gmra.mxu0 %v871
        %v957 = vpop.f32.mrf.mxu0
        %v958 = vadd.f32 0.0, %v957
        %v959 = vpop.f32.mrf.mxu0
        %v960 = vadd.f32 0.0, %v959
        %961 = vdwg.mxu0
        %962 = vmatprep.subr.mxu0 0.0
        %963 = vmatpush1.msra.mxu0 0.0
        %964 = vmatprep.subr.mxu0 0.0
        %965 = vmatpush1.msra.mxu0 0.0
        %966 = vmatprep.subr.mxu0 0.0
        %967 = vmatpush1.msra.mxu0 0.0
        %968 = vmatprep.subr.mxu0 0.0
        %969 = vmatpush1.msra.mxu0 0.0
        %970 = vmatprep.subr.mxu0 0.0
        %971 = vmatpush1.msra.mxu0 0.0
        %972 = vmatprep.subr.mxu0 0.0
        %973 = vmatpush1.msra.mxu0 0.0
        %974 = vmatprep.subr.mxu0 0.0
        %975 = vmatpush1.msra.mxu0 0.0
        %976 = vmatprep.subr.mxu0 0.0
        %977 = vmatpush1.msra.mxu0 0.0
        %978 = vmatprep.subr.mxu0 0.0
        %979 = vmatpush1.msra.mxu0 0.0
        %980 = vmatprep.subr.mxu0 0.0
        %981 = vmatpush1.msra.mxu0 0.0
        %982 = vmatprep.subr.mxu0 0.0
        %983 = vmatpush1.msra.mxu0 0.0
        %984 = vmatprep.subr.mxu0 0.0
        %985 = vmatpush1.msra.mxu0 0.0
        %986 = vmatprep.subr.mxu0 0.0
        %987 = vmatpush1.msra.mxu0 %v860
        %988 = vmatprep.subr.mxu0 0.0
        %989 = vmatpush1.msra.mxu0 %v857
        %990 = vmatprep.subr.mxu0 0.0
        %991 = vmatpush1.msra.mxu0 %v854
        %992 = vmatprep.subr.mxu0 0.0
        %993 = vmatpush1.msra.mxu0 %v851
        %994 = vmatprep.subr.mxu0 0.0
        %995 = vmatpush2.msra.mxu0 0.0
        %996 = vmatprep.subr.mxu0 0.0
        %997 = vmatpush2.msra.mxu0 0.0
        %998 = vmatprep.subr.mxu0 0.0
        %999 = vmatpush2.msra.mxu0 0.0
        %1000 = vmatprep.subr.mxu0 0.0
        %1001 = vmatpush2.msra.mxu0 0.0
        %1002 = vmatprep.subr.mxu0 0.0
        %1003 = vmatpush2.msra.mxu0 0.0
        %1004 = vmatprep.subr.mxu0 0.0
        %1005 = vmatpush2.msra.mxu0 0.0
        %1006 = vmatprep.subr.mxu0 0.0
        %1007 = vmatpush2.msra.mxu0 0.0
        %1008 = vmatprep.subr.mxu0 0.0
        %1009 = vmatpush2.msra.mxu0 0.0
        %1010 = vmatprep.subr.mxu0 0.0
        %1011 = vmatpush2.msra.mxu0 0.0
        %1012 = vmatprep.subr.mxu0 0.0
        %1013 = vmatpush2.msra.mxu0 0.0
        %1014 = vmatprep.subr.mxu0 0.0
        %1015 = vmatpush2.msra.mxu0 0.0
        %1016 = vmatprep.subr.mxu0 0.0
        %1017 = vmatpush2.msra.mxu0 0.0
        %1018 = vmatprep.subr.mxu0 0.0
        %1019 = vmatpush2.msra.mxu0 0.0
        %1020 = vmatprep.subr.mxu0 0.0
        %1021 = vmatpush2.msra.mxu0 0.0
        %1022 = vmatprep.subr.mxu0 0.0
        %1023 = vmatpush2.msra.mxu0 0.0
        %1024 = vmatprep.subr.mxu0 0.0
        %1025 = vmatpush2.msra.mxu0 0.0
        %1026 = vmatprep.mubr.f32.mxu0 0.0
        %1027 = vmatmul.mubr.f32.gmra.mxu0 %v862
        %v1028 = vpop.f32.mrf.mxu0
        %v1029 = vadd.f32 0.0, %v1028
        %v1030 = vpop.f32.mrf.mxu0
        %1031 = vmatprep.mubr.f32.mxu0 0.0
        %1032 = vmatmul.mubr.f32.gmra.mxu0 %v865
        %v1033 = vpop.f32.mrf.mxu0
        %v1034 = vadd.f32 0.0, %v1033
        %v1035 = vpop.f32.mrf.mxu0
        %1036 = vmatprep.mubr.f32.mxu0 0.0
        %1037 = vmatmul.mubr.f32.gmra.mxu0 %v868
        %v1038 = vpop.f32.mrf.mxu0
        %v1039 = vadd.f32 0.0, %v1038
        %v1040 = vpop.f32.mrf.mxu0
        %1041 = vmatprep.mubr.f32.mxu0 0.0
        %1042 = vmatmul.mubr.f32.gmra.mxu0 %v871
        %v1043 = vpop.f32.mrf.mxu0
        %v1044 = vadd.f32 0.0, %v1043
        %v1045 = vpop.f32.mrf.mxu0
        %1046 = vdwg.mxu0
        %v1047 = vadd.f32 %v737, %v940
        %v1048 = vadd.f32 %v739, %v942
        %v1049 = vadd.f32 %v826, %v1029
        %v1050 = vadd.f32 %v743, %v946
        %v1051 = vadd.f32 %v745, %v948
        %v1052 = vadd.f32 %v831, %v1034
        %v1053 = vadd.f32 %v749, %v952
        %v1054 = vadd.f32 %v751, %v954
        %v1055 = vadd.f32 %v836, %v1039
        %v1056 = vadd.f32 %v755, %v958
        %v1057 = vadd.f32 %v757, %v960
        %v1058 = vadd.f32 %v841, %v1044
        %v1059 = vld [vmem:[%s437 + $0x1] sm:$0xff]
        %v1060 = vld [vmem:[%s437 + $0x9] sm:$0xff]
        %v1061 = vld [vmem:[%s437 + $0x11] sm:$0xff]
        %v1062 = vld [vmem:[%s437 + $0x19] sm:$0x3f]
        %s1063 = scalar_lea.vmem %s1, 288
        %v1064 = vld [vmem:[%s1063] sm:$0xff]
        %v1065 = vld [vmem:[%s1063 + $0x8] sm:$0xff]
        %v1066 = vld [vmem:[%s1063 + $0x10] sm:$0xff]
        %v1067 = vld [vmem:[%s1063 + $0x18] sm:$0xff]
        %v1068 = vld [vmem:[%s1063 + $0x20] sm:$0xff]
        %v1069 = vld [vmem:[%s1063 + $0x28] sm:$0xff]
        %v1070 = vld [vmem:[%s1063 + $0x30] sm:$0xff]
        %v1071 = vld [vmem:[%s1063 + $0x38] sm:$0xff]
        %v1072 = vld [vmem:[%s1063 + $0x40] sm:$0xff]
        %v1073 = vld [vmem:[%s1063 + $0x48] sm:$0xff]
        %v1074 = vld [vmem:[%s1063 + $0x50] sm:$0xff]
        %v1075 = vld [vmem:[%s1063 + $0x58] sm:$0xff]
        %v1077 = vsel %vm471, %v1059, 0
        %v1080 = vsel %vm471, %v1060, 0
        %v1083 = vsel %vm471, %v1061, 0
        %v1086 = vsel %vm471, %v1062, 0
        %1088 = vmatprep.subr.mxu0 0.0
        %1089 = vmatpush1.msra.mxu0 0.0
        %1090 = vmatprep.subr.mxu0 0.0
        %1091 = vmatpush1.msra.mxu0 0.0
        %1092 = vmatprep.subr.mxu0 0.0
        %1093 = vmatpush1.msra.mxu0 0.0
        %1094 = vmatprep.subr.mxu0 0.0
        %1095 = vmatpush1.msra.mxu0 0.0
        %1096 = vmatprep.subr.mxu0 0.0
        %1097 = vmatpush1.msra.mxu0 0.0
        %1098 = vmatprep.subr.mxu0 0.0
        %1099 = vmatpush1.msra.mxu0 0.0
        %1100 = vmatprep.subr.mxu0 0.0
        %1101 = vmatpush1.msra.mxu0 0.0
        %1102 = vmatprep.subr.mxu0 0.0
        %1103 = vmatpush1.msra.mxu0 0.0
        %1104 = vmatprep.subr.mxu0 0.0
        %1105 = vmatpush1.msra.mxu0 0.0
        %1106 = vmatprep.subr.mxu0 0.0
        %1107 = vmatpush1.msra.mxu0 0.0
        %1108 = vmatprep.subr.mxu0 0.0
        %1109 = vmatpush1.msra.mxu0 0.0
        %1110 = vmatprep.subr.mxu0 0.0
        %1111 = vmatpush1.msra.mxu0 0.0
        %1112 = vmatprep.subr.mxu0 %v1074
        %1113 = vmatpush1.msra.mxu0 %v1073
        %1114 = vmatprep.subr.mxu0 %v1071
        %1115 = vmatpush1.msra.mxu0 %v1070
        %1116 = vmatprep.subr.mxu0 %v1068
        %1117 = vmatpush1.msra.mxu0 %v1067
        %1118 = vmatprep.subr.mxu0 %v1065
        %1119 = vmatpush1.msra.mxu0 %v1064
        %1120 = vmatprep.subr.mxu0 0.0
        %1121 = vmatpush2.msra.mxu0 0.0
        %1122 = vmatprep.subr.mxu0 0.0
        %1123 = vmatpush2.msra.mxu0 0.0
        %1124 = vmatprep.subr.mxu0 0.0
        %1125 = vmatpush2.msra.mxu0 0.0
        %1126 = vmatprep.subr.mxu0 0.0
        %1127 = vmatpush2.msra.mxu0 0.0
        %1128 = vmatprep.subr.mxu0 0.0
        %1129 = vmatpush2.msra.mxu0 0.0
        %1130 = vmatprep.subr.mxu0 0.0
        %1131 = vmatpush2.msra.mxu0 0.0
        %1132 = vmatprep.subr.mxu0 0.0
        %1133 = vmatpush2.msra.mxu0 0.0
        %1134 = vmatprep.subr.mxu0 0.0
        %1135 = vmatpush2.msra.mxu0 0.0
        %1136 = vmatprep.subr.mxu0 0.0
        %1137 = vmatpush2.msra.mxu0 0.0
        %1138 = vmatprep.subr.mxu0 0.0
        %1139 = vmatpush2.msra.mxu0 0.0
        %1140 = vmatprep.subr.mxu0 0.0
        %1141 = vmatpush2.msra.mxu0 0.0
        %1142 = vmatprep.subr.mxu0 0.0
        %1143 = vmatpush2.msra.mxu0 0.0
        %1144 = vmatprep.subr.mxu0 0.0
        %1145 = vmatpush2.msra.mxu0 0.0
        %1146 = vmatprep.subr.mxu0 0.0
        %1147 = vmatpush2.msra.mxu0 0.0
        %1148 = vmatprep.subr.mxu0 0.0
        %1149 = vmatpush2.msra.mxu0 0.0
        %1150 = vmatprep.subr.mxu0 0.0
        %1151 = vmatpush2.msra.mxu0 0.0
        %1152 = vmatprep.mubr.f32.mxu0 0.0
        %1153 = vmatmul.mubr.f32.gmra.mxu0 %v1077
        %v1154 = vpop.f32.mrf.mxu0
        %v1155 = vadd.f32 0.0, %v1154
        %v1156 = vpop.f32.mrf.mxu0
        %v1157 = vadd.f32 0.0, %v1156
        %1158 = vmatprep.mubr.f32.mxu0 0.0
        %1159 = vmatmul.mubr.f32.gmra.mxu0 %v1080
        %v1160 = vpop.f32.mrf.mxu0
        %v1161 = vadd.f32 0.0, %v1160
        %v1162 = vpop.f32.mrf.mxu0
        %v1163 = vadd.f32 0.0, %v1162
        %1164 = vmatprep.mubr.f32.mxu0 0.0
        %1165 = vmatmul.mubr.f32.gmra.mxu0 %v1083
        %v1166 = vpop.f32.mrf.mxu0
        %v1167 = vadd.f32 0.0, %v1166
        %v1168 = vpop.f32.mrf.mxu0
        %v1169 = vadd.f32 0.0, %v1168
        %1170 = vmatprep.mubr.f32.mxu0 0.0
        %1171 = vmatmul.mubr.f32.gmra.mxu0 %v1086
        %v1172 = vpop.f32.mrf.mxu0
        %v1173 = vadd.f32 0.0, %v1172
        %v1174 = vpop.f32.mrf.mxu0
        %v1175 = vadd.f32 0.0, %v1174
        %1176 = vdwg.mxu0
        %1177 = vmatprep.subr.mxu0 0.0
        %1178 = vmatpush1.msra.mxu0 0.0
        %1179 = vmatprep.subr.mxu0 0.0
        %1180 = vmatpush1.msra.mxu0 0.0
        %1181 = vmatprep.subr.mxu0 0.0
        %1182 = vmatpush1.msra.mxu0 0.0
        %1183 = vmatprep.subr.mxu0 0.0
        %1184 = vmatpush1.msra.mxu0 0.0
        %1185 = vmatprep.subr.mxu0 0.0
        %1186 = vmatpush1.msra.mxu0 0.0
        %1187 = vmatprep.subr.mxu0 0.0
        %1188 = vmatpush1.msra.mxu0 0.0
        %1189 = vmatprep.subr.mxu0 0.0
        %1190 = vmatpush1.msra.mxu0 0.0
        %1191 = vmatprep.subr.mxu0 0.0
        %1192 = vmatpush1.msra.mxu0 0.0
        %1193 = vmatprep.subr.mxu0 0.0
        %1194 = vmatpush1.msra.mxu0 0.0
        %1195 = vmatprep.subr.mxu0 0.0
        %1196 = vmatpush1.msra.mxu0 0.0
        %1197 = vmatprep.subr.mxu0 0.0
        %1198 = vmatpush1.msra.mxu0 0.0
        %1199 = vmatprep.subr.mxu0 0.0
        %1200 = vmatpush1.msra.mxu0 0.0
        %1201 = vmatprep.subr.mxu0 0.0
        %1202 = vmatpush1.msra.mxu0 %v1075
        %1203 = vmatprep.subr.mxu0 0.0
        %1204 = vmatpush1.msra.mxu0 %v1072
        %1205 = vmatprep.subr.mxu0 0.0
        %1206 = vmatpush1.msra.mxu0 %v1069
        %1207 = vmatprep.subr.mxu0 0.0
        %1208 = vmatpush1.msra.mxu0 %v1066
        %1209 = vmatprep.subr.mxu0 0.0
        %1210 = vmatpush2.msra.mxu0 0.0
        %1211 = vmatprep.subr.mxu0 0.0
        %1212 = vmatpush2.msra.mxu0 0.0
        %1213 = vmatprep.subr.mxu0 0.0
        %1214 = vmatpush2.msra.mxu0 0.0
        %1215 = vmatprep.subr.mxu0 0.0
        %1216 = vmatpush2.msra.mxu0 0.0
        %1217 = vmatprep.subr.mxu0 0.0
        %1218 = vmatpush2.msra.mxu0 0.0
        %1219 = vmatprep.subr.mxu0 0.0
        %1220 = vmatpush2.msra.mxu0 0.0
        %1221 = vmatprep.subr.mxu0 0.0
        %1222 = vmatpush2.msra.mxu0 0.0
        %1223 = vmatprep.subr.mxu0 0.0
        %1224 = vmatpush2.msra.mxu0 0.0
        %1225 = vmatprep.subr.mxu0 0.0
        %1226 = vmatpush2.msra.mxu0 0.0
        %1227 = vmatprep.subr.mxu0 0.0
        %1228 = vmatpush2.msra.mxu0 0.0
        %1229 = vmatprep.subr.mxu0 0.0
        %1230 = vmatpush2.msra.mxu0 0.0
        %1231 = vmatprep.subr.mxu0 0.0
        %1232 = vmatpush2.msra.mxu0 0.0
        %1233 = vmatprep.subr.mxu0 0.0
        %1234 = vmatpush2.msra.mxu0 0.0
        %1235 = vmatprep.subr.mxu0 0.0
        %1236 = vmatpush2.msra.mxu0 0.0
        %1237 = vmatprep.subr.mxu0 0.0
        %1238 = vmatpush2.msra.mxu0 0.0
        %1239 = vmatprep.subr.mxu0 0.0
        %1240 = vmatpush2.msra.mxu0 0.0
        %1241 = vmatprep.mubr.f32.mxu0 0.0
        %1242 = vmatmul.mubr.f32.gmra.mxu0 %v1077
        %v1243 = vpop.f32.mrf.mxu0
        %v1244 = vadd.f32 0.0, %v1243
        %v1245 = vpop.f32.mrf.mxu0
        %1246 = vmatprep.mubr.f32.mxu0 0.0
        %1247 = vmatmul.mubr.f32.gmra.mxu0 %v1080
        %v1248 = vpop.f32.mrf.mxu0
        %v1249 = vadd.f32 0.0, %v1248
        %v1250 = vpop.f32.mrf.mxu0
        %1251 = vmatprep.mubr.f32.mxu0 0.0
        %1252 = vmatmul.mubr.f32.gmra.mxu0 %v1083
        %v1253 = vpop.f32.mrf.mxu0
        %v1254 = vadd.f32 0.0, %v1253
        %v1255 = vpop.f32.mrf.mxu0
        %1256 = vmatprep.mubr.f32.mxu0 0.0
        %1257 = vmatmul.mubr.f32.gmra.mxu0 %v1086
        %v1258 = vpop.f32.mrf.mxu0
        %v1259 = vadd.f32 0.0, %v1258
        %v1260 = vpop.f32.mrf.mxu0
        %1261 = vdwg.mxu0
        %v1262 = vadd.f32 %v1047, %v1155
        %v1263 = vadd.f32 %v1048, %v1157
        %v1264 = vadd.f32 %v1049, %v1244
        %v1265 = vadd.f32 %v1050, %v1161
        %v1266 = vadd.f32 %v1051, %v1163
        %v1267 = vadd.f32 %v1052, %v1249
        %v1268 = vadd.f32 %v1053, %v1167
        %v1269 = vadd.f32 %v1054, %v1169
        %v1270 = vadd.f32 %v1055, %v1254
        %v1271 = vadd.f32 %v1056, %v1173
        %v1272 = vadd.f32 %v1057, %v1175
        %v1273 = vadd.f32 %v1058, %v1259
        %v1274 = vld [vmem:[%s437 + $0x21] sm:$0xff]
        %v1275 = vld [vmem:[%s437 + $0x29] sm:$0xff]
        %v1276 = vld [vmem:[%s437 + $0x31] sm:$0xff]
        %v1277 = vld [vmem:[%s437 + $0x39] sm:$0x3f]
        %s1278 = scalar_lea.vmem %s1, 384
        %v1279 = vld [vmem:[%s1278] sm:$0xff]
        %v1280 = vld [vmem:[%s1278 + $0x8] sm:$0xff]
        %v1281 = vld [vmem:[%s1278 + $0x10] sm:$0xff]
        %v1282 = vld [vmem:[%s1278 + $0x18] sm:$0xff]
        %v1283 = vld [vmem:[%s1278 + $0x20] sm:$0xff]
        %v1284 = vld [vmem:[%s1278 + $0x28] sm:$0xff]
        %v1285 = vld [vmem:[%s1278 + $0x30] sm:$0xff]
        %v1286 = vld [vmem:[%s1278 + $0x38] sm:$0xff]
        %v1287 = vld [vmem:[%s1278 + $0x40] sm:$0xff]
        %v1288 = vld [vmem:[%s1278 + $0x48] sm:$0xff]
        %v1289 = vld [vmem:[%s1278 + $0x50] sm:$0xff]
        %v1290 = vld [vmem:[%s1278 + $0x58] sm:$0xff]
        %v1292 = vsel %vm471, %v1274, 0
        %v1295 = vsel %vm471, %v1275, 0
        %v1298 = vsel %vm471, %v1276, 0
        %v1301 = vsel %vm471, %v1277, 0
        %1303 = vmatprep.subr.mxu0 0.0
        %1304 = vmatpush1.msra.mxu0 0.0
        %1305 = vmatprep.subr.mxu0 0.0
        %1306 = vmatpush1.msra.mxu0 0.0
        %1307 = vmatprep.subr.mxu0 0.0
        %1308 = vmatpush1.msra.mxu0 0.0
        %1309 = vmatprep.subr.mxu0 0.0
        %1310 = vmatpush1.msra.mxu0 0.0
        %1311 = vmatprep.subr.mxu0 0.0
        %1312 = vmatpush1.msra.mxu0 0.0
        %1313 = vmatprep.subr.mxu0 0.0
        %1314 = vmatpush1.msra.mxu0 0.0
        %1315 = vmatprep.subr.mxu0 0.0
        %1316 = vmatpush1.msra.mxu0 0.0
        %1317 = vmatprep.subr.mxu0 0.0
        %1318 = vmatpush1.msra.mxu0 0.0
        %1319 = vmatprep.subr.mxu0 0.0
        %1320 = vmatpush1.msra.mxu0 0.0
        %1321 = vmatprep.subr.mxu0 0.0
        %1322 = vmatpush1.msra.mxu0 0.0
        %1323 = vmatprep.subr.mxu0 0.0
        %1324 = vmatpush1.msra.mxu0 0.0
        %1325 = vmatprep.subr.mxu0 0.0
        %1326 = vmatpush1.msra.mxu0 0.0
        %1327 = vmatprep.subr.mxu0 %v1289
        %1328 = vmatpush1.msra.mxu0 %v1288
        %1329 = vmatprep.subr.mxu0 %v1286
        %1330 = vmatpush1.msra.mxu0 %v1285
        %1331 = vmatprep.subr.mxu0 %v1283
        %1332 = vmatpush1.msra.mxu0 %v1282
        %1333 = vmatprep.subr.mxu0 %v1280
        %1334 = vmatpush1.msra.mxu0 %v1279
        %1335 = vmatprep.subr.mxu0 0.0
        %1336 = vmatpush2.msra.mxu0 0.0
        %1337 = vmatprep.subr.mxu0 0.0
        %1338 = vmatpush2.msra.mxu0 0.0
        %1339 = vmatprep.subr.mxu0 0.0
        %1340 = vmatpush2.msra.mxu0 0.0
        %1341 = vmatprep.subr.mxu0 0.0
        %1342 = vmatpush2.msra.mxu0 0.0
        %1343 = vmatprep.subr.mxu0 0.0
        %1344 = vmatpush2.msra.mxu0 0.0
        %1345 = vmatprep.subr.mxu0 0.0
        %1346 = vmatpush2.msra.mxu0 0.0
        %1347 = vmatprep.subr.mxu0 0.0
        %1348 = vmatpush2.msra.mxu0 0.0
        %1349 = vmatprep.subr.mxu0 0.0
        %1350 = vmatpush2.msra.mxu0 0.0
        %1351 = vmatprep.subr.mxu0 0.0
        %1352 = vmatpush2.msra.mxu0 0.0
        %1353 = vmatprep.subr.mxu0 0.0
        %1354 = vmatpush2.msra.mxu0 0.0
        %1355 = vmatprep.subr.mxu0 0.0
        %1356 = vmatpush2.msra.mxu0 0.0
        %1357 = vmatprep.subr.mxu0 0.0
        %1358 = vmatpush2.msra.mxu0 0.0
        %1359 = vmatprep.subr.mxu0 0.0
        %1360 = vmatpush2.msra.mxu0 0.0
        %1361 = vmatprep.subr.mxu0 0.0
        %1362 = vmatpush2.msra.mxu0 0.0
        %1363 = vmatprep.subr.mxu0 0.0
        %1364 = vmatpush2.msra.mxu0 0.0
        %1365 = vmatprep.subr.mxu0 0.0
        %1366 = vmatpush2.msra.mxu0 0.0
        %1367 = vmatprep.mubr.f32.mxu0 0.0
        %1368 = vmatmul.mubr.f32.gmra.mxu0 %v1292
        %v1369 = vpop.f32.mrf.mxu0
        %v1370 = vadd.f32 0.0, %v1369
        %v1371 = vpop.f32.mrf.mxu0
        %v1372 = vadd.f32 0.0, %v1371
        %1373 = vmatprep.mubr.f32.mxu0 0.0
        %1374 = vmatmul.mubr.f32.gmra.mxu0 %v1295
        %v1375 = vpop.f32.mrf.mxu0
        %v1376 = vadd.f32 0.0, %v1375
        %v1377 = vpop.f32.mrf.mxu0
        %v1378 = vadd.f32 0.0, %v1377
        %1379 = vmatprep.mubr.f32.mxu0 0.0
        %1380 = vmatmul.mubr.f32.gmra.mxu0 %v1298
        %v1381 = vpop.f32.mrf.mxu0
        %v1382 = vadd.f32 0.0, %v1381
        %v1383 = vpop.f32.mrf.mxu0
        %v1384 = vadd.f32 0.0, %v1383
        %1385 = vmatprep.mubr.f32.mxu0 0.0
        %1386 = vmatmul.mubr.f32.gmra.mxu0 %v1301
        %v1387 = vpop.f32.mrf.mxu0
        %v1388 = vadd.f32 0.0, %v1387
        %v1389 = vpop.f32.mrf.mxu0
        %v1390 = vadd.f32 0.0, %v1389
        %1391 = vdwg.mxu0
        %1392 = vmatprep.subr.mxu0 0.0
        %1393 = vmatpush1.msra.mxu0 0.0
        %1394 = vmatprep.subr.mxu0 0.0
        %1395 = vmatpush1.msra.mxu0 0.0
        %1396 = vmatprep.subr.mxu0 0.0
        %1397 = vmatpush1.msra.mxu0 0.0
        %1398 = vmatprep.subr.mxu0 0.0
        %1399 = vmatpush1.msra.mxu0 0.0
        %1400 = vmatprep.subr.mxu0 0.0
        %1401 = vmatpush1.msra.mxu0 0.0
        %1402 = vmatprep.subr.mxu0 0.0
        %1403 = vmatpush1.msra.mxu0 0.0
        %1404 = vmatprep.subr.mxu0 0.0
        %1405 = vmatpush1.msra.mxu0 0.0
        %1406 = vmatprep.subr.mxu0 0.0
        %1407 = vmatpush1.msra.mxu0 0.0
        %1408 = vmatprep.subr.mxu0 0.0
        %1409 = vmatpush1.msra.mxu0 0.0
        %1410 = vmatprep.subr.mxu0 0.0
        %1411 = vmatpush1.msra.mxu0 0.0
        %1412 = vmatprep.subr.mxu0 0.0
        %1413 = vmatpush1.msra.mxu0 0.0
        %1414 = vmatprep.subr.mxu0 0.0
        %1415 = vmatpush1.msra.mxu0 0.0
        %1416 = vmatprep.subr.mxu0 0.0
        %1417 = vmatpush1.msra.mxu0 %v1290
        %1418 = vmatprep.subr.mxu0 0.0
        %1419 = vmatpush1.msra.mxu0 %v1287
        %1420 = vmatprep.subr.mxu0 0.0
        %1421 = vmatpush1.msra.mxu0 %v1284
        %1422 = vmatprep.subr.mxu0 0.0
        %1423 = vmatpush1.msra.mxu0 %v1281
        %1424 = vmatprep.subr.mxu0 0.0
        %1425 = vmatpush2.msra.mxu0 0.0
        %1426 = vmatprep.subr.mxu0 0.0
        %1427 = vmatpush2.msra.mxu0 0.0
        %1428 = vmatprep.subr.mxu0 0.0
        %1429 = vmatpush2.msra.mxu0 0.0
        %1430 = vmatprep.subr.mxu0 0.0
        %1431 = vmatpush2.msra.mxu0 0.0
        %1432 = vmatprep.subr.mxu0 0.0
        %1433 = vmatpush2.msra.mxu0 0.0
        %1434 = vmatprep.subr.mxu0 0.0
        %1435 = vmatpush2.msra.mxu0 0.0
        %1436 = vmatprep.subr.mxu0 0.0
        %1437 = vmatpush2.msra.mxu0 0.0
        %1438 = vmatprep.subr.mxu0 0.0
        %1439 = vmatpush2.msra.mxu0 0.0
        %1440 = vmatprep.subr.mxu0 0.0
        %1441 = vmatpush2.msra.mxu0 0.0
        %1442 = vmatprep.subr.mxu0 0.0
        %1443 = vmatpush2.msra.mxu0 0.0
        %1444 = vmatprep.subr.mxu0 0.0
        %1445 = vmatpush2.msra.mxu0 0.0
        %1446 = vmatprep.subr.mxu0 0.0
        %1447 = vmatpush2.msra.mxu0 0.0
        %1448 = vmatprep.subr.mxu0 0.0
        %1449 = vmatpush2.msra.mxu0 0.0
        %1450 = vmatprep.subr.mxu0 0.0
        %1451 = vmatpush2.msra.mxu0 0.0
        %1452 = vmatprep.subr.mxu0 0.0
        %1453 = vmatpush2.msra.mxu0 0.0
        %1454 = vmatprep.subr.mxu0 0.0
        %1455 = vmatpush2.msra.mxu0 0.0
        %1456 = vmatprep.mubr.f32.mxu0 0.0
        %1457 = vmatmul.mubr.f32.gmra.mxu0 %v1292
        %v1458 = vpop.f32.mrf.mxu0
        %v1459 = vadd.f32 0.0, %v1458
        %v1460 = vpop.f32.mrf.mxu0
        %1461 = vmatprep.mubr.f32.mxu0 0.0
        %1462 = vmatmul.mubr.f32.gmra.mxu0 %v1295
        %v1463 = vpop.f32.mrf.mxu0
        %v1464 = vadd.f32 0.0, %v1463
        %v1465 = vpop.f32.mrf.mxu0
        %1466 = vmatprep.mubr.f32.mxu0 0.0
        %1467 = vmatmul.mubr.f32.gmra.mxu0 %v1298
        %v1468 = vpop.f32.mrf.mxu0
        %v1469 = vadd.f32 0.0, %v1468
        %v1470 = vpop.f32.mrf.mxu0
        %1471 = vmatprep.mubr.f32.mxu0 0.0
        %1472 = vmatmul.mubr.f32.gmra.mxu0 %v1301
        %v1473 = vpop.f32.mrf.mxu0
        %v1474 = vadd.f32 0.0, %v1473
        %v1475 = vpop.f32.mrf.mxu0
        %1476 = vdwg.mxu0
        %v1477 = vadd.f32 %v1262, %v1370
        %v1478 = vadd.f32 %v1263, %v1372
        %v1479 = vadd.f32 %v1264, %v1459
        %v1480 = vadd.f32 %v1265, %v1376
        %v1481 = vadd.f32 %v1266, %v1378
        %v1482 = vadd.f32 %v1267, %v1464
        %v1483 = vadd.f32 %v1268, %v1382
        %v1484 = vadd.f32 %v1269, %v1384
        %v1485 = vadd.f32 %v1270, %v1469
        %v1486 = vadd.f32 %v1271, %v1388
        %v1487 = vadd.f32 %v1272, %v1390
        %v1488 = vadd.f32 %v1273, %v1474
        %v1489 = vld [vmem:[%s437 + $0x41] sm:$0xff]
        %v1490 = vld [vmem:[%s437 + $0x49] sm:$0xff]
        %v1491 = vld [vmem:[%s437 + $0x51] sm:$0xff]
        %v1492 = vld [vmem:[%s437 + $0x59] sm:$0x3f]
        %s1493 = scalar_lea.vmem %s1, 480
        %v1494 = vld [vmem:[%s1493] sm:$0xff]
        %v1495 = vld [vmem:[%s1493 + $0x8] sm:$0xff]
        %v1496 = vld [vmem:[%s1493 + $0x10] sm:$0xff]
        %v1497 = vld [vmem:[%s1493 + $0x18] sm:$0xff]
        %v1498 = vld [vmem:[%s1493 + $0x20] sm:$0xff]
        %v1499 = vld [vmem:[%s1493 + $0x28] sm:$0xff]
        %v1500 = vld [vmem:[%s1493 + $0x30] sm:$0xff]
        %v1501 = vld [vmem:[%s1493 + $0x38] sm:$0xff]
        %v1502 = vld [vmem:[%s1493 + $0x40] sm:$0xff]
        %v1503 = vld [vmem:[%s1493 + $0x48] sm:$0xff]
        %v1504 = vld [vmem:[%s1493 + $0x50] sm:$0xff]
        %v1505 = vld [vmem:[%s1493 + $0x58] sm:$0xff]
        %v1507 = vsel %vm471, %v1489, 0
        %v1510 = vsel %vm471, %v1490, 0
        %v1513 = vsel %vm471, %v1491, 0
        %v1516 = vsel %vm471, %v1492, 0
        %1518 = vmatprep.subr.mxu0 0.0
        %1519 = vmatpush1.msra.mxu0 0.0
        %1520 = vmatprep.subr.mxu0 0.0
        %1521 = vmatpush1.msra.mxu0 0.0
        %1522 = vmatprep.subr.mxu0 0.0
        %1523 = vmatpush1.msra.mxu0 0.0
        %1524 = vmatprep.subr.mxu0 0.0
        %1525 = vmatpush1.msra.mxu0 0.0
        %1526 = vmatprep.subr.mxu0 0.0
        %1527 = vmatpush1.msra.mxu0 0.0
        %1528 = vmatprep.subr.mxu0 0.0
        %1529 = vmatpush1.msra.mxu0 0.0
        %1530 = vmatprep.subr.mxu0 0.0
        %1531 = vmatpush1.msra.mxu0 0.0
        %1532 = vmatprep.subr.mxu0 0.0
        %1533 = vmatpush1.msra.mxu0 0.0
        %1534 = vmatprep.subr.mxu0 0.0
        %1535 = vmatpush1.msra.mxu0 0.0
        %1536 = vmatprep.subr.mxu0 0.0
        %1537 = vmatpush1.msra.mxu0 0.0
        %1538 = vmatprep.subr.mxu0 0.0
        %1539 = vmatpush1.msra.mxu0 0.0
        %1540 = vmatprep.subr.mxu0 0.0
        %1541 = vmatpush1.msra.mxu0 0.0
        %1542 = vmatprep.subr.mxu0 %v1504
        %1543 = vmatpush1.msra.mxu0 %v1503
        %1544 = vmatprep.subr.mxu0 %v1501
        %1545 = vmatpush1.msra.mxu0 %v1500
        %1546 = vmatprep.subr.mxu0 %v1498
        %1547 = vmatpush1.msra.mxu0 %v1497
        %1548 = vmatprep.subr.mxu0 %v1495
        %1549 = vmatpush1.msra.mxu0 %v1494
        %1550 = vmatprep.subr.mxu0 0.0
        %1551 = vmatpush2.msra.mxu0 0.0
        %1552 = vmatprep.subr.mxu0 0.0
        %1553 = vmatpush2.msra.mxu0 0.0
        %1554 = vmatprep.subr.mxu0 0.0
        %1555 = vmatpush2.msra.mxu0 0.0
        %1556 = vmatprep.subr.mxu0 0.0
        %1557 = vmatpush2.msra.mxu0 0.0
        %1558 = vmatprep.subr.mxu0 0.0
        %1559 = vmatpush2.msra.mxu0 0.0
        %1560 = vmatprep.subr.mxu0 0.0
        %1561 = vmatpush2.msra.mxu0 0.0
        %1562 = vmatprep.subr.mxu0 0.0
        %1563 = vmatpush2.msra.mxu0 0.0
        %1564 = vmatprep.subr.mxu0 0.0
        %1565 = vmatpush2.msra.mxu0 0.0
        %1566 = vmatprep.subr.mxu0 0.0
        %1567 = vmatpush2.msra.mxu0 0.0
        %1568 = vmatprep.subr.mxu0 0.0
        %1569 = vmatpush2.msra.mxu0 0.0
        %1570 = vmatprep.subr.mxu0 0.0
        %1571 = vmatpush2.msra.mxu0 0.0
        %1572 = vmatprep.subr.mxu0 0.0
        %1573 = vmatpush2.msra.mxu0 0.0
        %1574 = vmatprep.subr.mxu0 0.0
        %1575 = vmatpush2.msra.mxu0 0.0
        %1576 = vmatprep.subr.mxu0 0.0
        %1577 = vmatpush2.msra.mxu0 0.0
        %1578 = vmatprep.subr.mxu0 0.0
        %1579 = vmatpush2.msra.mxu0 0.0
        %1580 = vmatprep.subr.mxu0 0.0
        %1581 = vmatpush2.msra.mxu0 0.0
        %1582 = vmatprep.mubr.f32.mxu0 0.0
        %1583 = vmatmul.mubr.f32.gmra.mxu0 %v1507
        %v1584 = vpop.f32.mrf.mxu0
        %v1585 = vadd.f32 0.0, %v1584
        %v1586 = vpop.f32.mrf.mxu0
        %v1587 = vadd.f32 0.0, %v1586
        %1588 = vmatprep.mubr.f32.mxu0 0.0
        %1589 = vmatmul.mubr.f32.gmra.mxu0 %v1510
        %v1590 = vpop.f32.mrf.mxu0
        %v1591 = vadd.f32 0.0, %v1590
        %v1592 = vpop.f32.mrf.mxu0
        %v1593 = vadd.f32 0.0, %v1592
        %1594 = vmatprep.mubr.f32.mxu0 0.0
        %1595 = vmatmul.mubr.f32.gmra.mxu0 %v1513
        %v1596 = vpop.f32.mrf.mxu0
        %v1597 = vadd.f32 0.0, %v1596
        %v1598 = vpop.f32.mrf.mxu0
        %v1599 = vadd.f32 0.0, %v1598
        %1600 = vmatprep.mubr.f32.mxu0 0.0
        %1601 = vmatmul.mubr.f32.gmra.mxu0 %v1516
        %v1602 = vpop.f32.mrf.mxu0
        %v1603 = vadd.f32 0.0, %v1602
        %v1604 = vpop.f32.mrf.mxu0
        %v1605 = vadd.f32 0.0, %v1604
        %1606 = vdwg.mxu0
        %1607 = vmatprep.subr.mxu0 0.0
        %1608 = vmatpush1.msra.mxu0 0.0
        %1609 = vmatprep.subr.mxu0 0.0
        %1610 = vmatpush1.msra.mxu0 0.0
        %1611 = vmatprep.subr.mxu0 0.0
        %1612 = vmatpush1.msra.mxu0 0.0
        %1613 = vmatprep.subr.mxu0 0.0
        %1614 = vmatpush1.msra.mxu0 0.0
        %1615 = vmatprep.subr.mxu0 0.0
        %1616 = vmatpush1.msra.mxu0 0.0
        %1617 = vmatprep.subr.mxu0 0.0
        %1618 = vmatpush1.msra.mxu0 0.0
        %1619 = vmatprep.subr.mxu0 0.0
        %1620 = vmatpush1.msra.mxu0 0.0
        %1621 = vmatprep.subr.mxu0 0.0
        %1622 = vmatpush1.msra.mxu0 0.0
        %1623 = vmatprep.subr.mxu0 0.0
        %1624 = vmatpush1.msra.mxu0 0.0
        %1625 = vmatprep.subr.mxu0 0.0
        %1626 = vmatpush1.msra.mxu0 0.0
        %1627 = vmatprep.subr.mxu0 0.0
        %1628 = vmatpush1.msra.mxu0 0.0
        %1629 = vmatprep.subr.mxu0 0.0
        %1630 = vmatpush1.msra.mxu0 0.0
        %1631 = vmatprep.subr.mxu0 0.0
        %1632 = vmatpush1.msra.mxu0 %v1505
        %1633 = vmatprep.subr.mxu0 0.0
        %1634 = vmatpush1.msra.mxu0 %v1502
        %1635 = vmatprep.subr.mxu0 0.0
        %1636 = vmatpush1.msra.mxu0 %v1499
        %1637 = vmatprep.subr.mxu0 0.0
        %1638 = vmatpush1.msra.mxu0 %v1496
        %1639 = vmatprep.subr.mxu0 0.0
        %1640 = vmatpush2.msra.mxu0 0.0
        %1641 = vmatprep.subr.mxu0 0.0
        %1642 = vmatpush2.msra.mxu0 0.0
        %1643 = vmatprep.subr.mxu0 0.0
        %1644 = vmatpush2.msra.mxu0 0.0
        %1645 = vmatprep.subr.mxu0 0.0
        %1646 = vmatpush2.msra.mxu0 0.0
        %1647 = vmatprep.subr.mxu0 0.0
        %1648 = vmatpush2.msra.mxu0 0.0
        %1649 = vmatprep.subr.mxu0 0.0
        %1650 = vmatpush2.msra.mxu0 0.0
        %1651 = vmatprep.subr.mxu0 0.0
        %1652 = vmatpush2.msra.mxu0 0.0
        %1653 = vmatprep.subr.mxu0 0.0
        %1654 = vmatpush2.msra.mxu0 0.0
        %1655 = vmatprep.subr.mxu0 0.0
        %1656 = vmatpush2.msra.mxu0 0.0
        %1657 = vmatprep.subr.mxu0 0.0
        %1658 = vmatpush2.msra.mxu0 0.0
        %1659 = vmatprep.subr.mxu0 0.0
        %1660 = vmatpush2.msra.mxu0 0.0
        %1661 = vmatprep.subr.mxu0 0.0
        %1662 = vmatpush2.msra.mxu0 0.0
        %1663 = vmatprep.subr.mxu0 0.0
        %1664 = vmatpush2.msra.mxu0 0.0
        %1665 = vmatprep.subr.mxu0 0.0
        %1666 = vmatpush2.msra.mxu0 0.0
        %1667 = vmatprep.subr.mxu0 0.0
        %1668 = vmatpush2.msra.mxu0 0.0
        %1669 = vmatprep.subr.mxu0 0.0
        %1670 = vmatpush2.msra.mxu0 0.0
        %1671 = vmatprep.mubr.f32.mxu0 0.0
        %1672 = vmatmul.mubr.f32.gmra.mxu0 %v1507
        %v1673 = vpop.f32.mrf.mxu0
        %v1674 = vadd.f32 0.0, %v1673
        %v1675 = vpop.f32.mrf.mxu0
        %1676 = vmatprep.mubr.f32.mxu0 0.0
        %1677 = vmatmul.mubr.f32.gmra.mxu0 %v1510
        %v1678 = vpop.f32.mrf.mxu0
        %v1679 = vadd.f32 0.0, %v1678
        %v1680 = vpop.f32.mrf.mxu0
        %1681 = vmatprep.mubr.f32.mxu0 0.0
        %1682 = vmatmul.mubr.f32.gmra.mxu0 %v1513
        %v1683 = vpop.f32.mrf.mxu0
        %v1684 = vadd.f32 0.0, %v1683
        %v1685 = vpop.f32.mrf.mxu0
        %1686 = vmatprep.mubr.f32.mxu0 0.0
        %1687 = vmatmul.mubr.f32.gmra.mxu0 %v1516
        %v1688 = vpop.f32.mrf.mxu0
        %v1689 = vadd.f32 0.0, %v1688
        %v1690 = vpop.f32.mrf.mxu0
        %1691 = vdwg.mxu0
        %v1692 = vadd.f32 %v1477, %v1585
        %v1693 = vadd.f32 %v1478, %v1587
        %v1694 = vadd.f32 %v1479, %v1674
        %v1695 = vadd.f32 %v1480, %v1591
        %v1696 = vadd.f32 %v1481, %v1593
        %v1697 = vadd.f32 %v1482, %v1679
        %v1698 = vadd.f32 %v1483, %v1597
        %v1699 = vadd.f32 %v1484, %v1599
        %v1700 = vadd.f32 %v1485, %v1684
        %v1701 = vadd.f32 %v1486, %v1603
        %v1702 = vadd.f32 %v1487, %v1605
        %v1703 = vadd.f32 %v1488, %v1689
        %v1704 = vld [vmem:[%s437 + $0x2] sm:$0xff]
        %v1705 = vld [vmem:[%s437 + $0xa] sm:$0xff]
        %v1706 = vld [vmem:[%s437 + $0x12] sm:$0xff]
        %v1707 = vld [vmem:[%s437 + $0x1a] sm:$0x3f]
        %s1708 = scalar_lea.vmem %s1, 576
        %v1709 = vld [vmem:[%s1708] sm:$0xff]
        %v1710 = vld [vmem:[%s1708 + $0x8] sm:$0xff]
        %v1711 = vld [vmem:[%s1708 + $0x10] sm:$0xff]
        %v1712 = vld [vmem:[%s1708 + $0x18] sm:$0xff]
        %v1713 = vld [vmem:[%s1708 + $0x20] sm:$0xff]
        %v1714 = vld [vmem:[%s1708 + $0x28] sm:$0xff]
        %v1715 = vld [vmem:[%s1708 + $0x30] sm:$0xff]
        %v1716 = vld [vmem:[%s1708 + $0x38] sm:$0xff]
        %v1717 = vld [vmem:[%s1708 + $0x40] sm:$0xff]
        %v1718 = vld [vmem:[%s1708 + $0x48] sm:$0xff]
        %v1719 = vld [vmem:[%s1708 + $0x50] sm:$0xff]
        %v1720 = vld [vmem:[%s1708 + $0x58] sm:$0xff]
        %v1722 = vsel %vm471, %v1704, 0
        %v1725 = vsel %vm471, %v1705, 0
        %v1728 = vsel %vm471, %v1706, 0
        %v1731 = vsel %vm471, %v1707, 0
        %1733 = vmatprep.subr.mxu0 0.0
        %1734 = vmatpush1.msra.mxu0 0.0
        %1735 = vmatprep.subr.mxu0 0.0
        %1736 = vmatpush1.msra.mxu0 0.0
        %1737 = vmatprep.subr.mxu0 0.0
        %1738 = vmatpush1.msra.mxu0 0.0
        %1739 = vmatprep.subr.mxu0 0.0
        %1740 = vmatpush1.msra.mxu0 0.0
        %1741 = vmatprep.subr.mxu0 0.0
        %1742 = vmatpush1.msra.mxu0 0.0
        %1743 = vmatprep.subr.mxu0 0.0
        %1744 = vmatpush1.msra.mxu0 0.0
        %1745 = vmatprep.subr.mxu0 0.0
        %1746 = vmatpush1.msra.mxu0 0.0
        %1747 = vmatprep.subr.mxu0 0.0
        %1748 = vmatpush1.msra.mxu0 0.0
        %1749 = vmatprep.subr.mxu0 0.0
        %1750 = vmatpush1.msra.mxu0 0.0
        %1751 = vmatprep.subr.mxu0 0.0
        %1752 = vmatpush1.msra.mxu0 0.0
        %1753 = vmatprep.subr.mxu0 0.0
        %1754 = vmatpush1.msra.mxu0 0.0
        %1755 = vmatprep.subr.mxu0 0.0
        %1756 = vmatpush1.msra.mxu0 0.0
        %1757 = vmatprep.subr.mxu0 %v1719
        %1758 = vmatpush1.msra.mxu0 %v1718
        %1759 = vmatprep.subr.mxu0 %v1716
        %1760 = vmatpush1.msra.mxu0 %v1715
        %1761 = vmatprep.subr.mxu0 %v1713
        %1762 = vmatpush1.msra.mxu0 %v1712
        %1763 = vmatprep.subr.mxu0 %v1710
        %1764 = vmatpush1.msra.mxu0 %v1709
        %1765 = vmatprep.subr.mxu0 0.0
        %1766 = vmatpush2.msra.mxu0 0.0
        %1767 = vmatprep.subr.mxu0 0.0
        %1768 = vmatpush2.msra.mxu0 0.0
        %1769 = vmatprep.subr.mxu0 0.0
        %1770 = vmatpush2.msra.mxu0 0.0
        %1771 = vmatprep.subr.mxu0 0.0
        %1772 = vmatpush2.msra.mxu0 0.0
        %1773 = vmatprep.subr.mxu0 0.0
        %1774 = vmatpush2.msra.mxu0 0.0
        %1775 = vmatprep.subr.mxu0 0.0
        %1776 = vmatpush2.msra.mxu0 0.0
        %1777 = vmatprep.subr.mxu0 0.0
        %1778 = vmatpush2.msra.mxu0 0.0
        %1779 = vmatprep.subr.mxu0 0.0
        %1780 = vmatpush2.msra.mxu0 0.0
        %1781 = vmatprep.subr.mxu0 0.0
        %1782 = vmatpush2.msra.mxu0 0.0
        %1783 = vmatprep.subr.mxu0 0.0
        %1784 = vmatpush2.msra.mxu0 0.0
        %1785 = vmatprep.subr.mxu0 0.0
        %1786 = vmatpush2.msra.mxu0 0.0
        %1787 = vmatprep.subr.mxu0 0.0
        %1788 = vmatpush2.msra.mxu0 0.0
        %1789 = vmatprep.subr.mxu0 0.0
        %1790 = vmatpush2.msra.mxu0 0.0
        %1791 = vmatprep.subr.mxu0 0.0
        %1792 = vmatpush2.msra.mxu0 0.0
        %1793 = vmatprep.subr.mxu0 0.0
        %1794 = vmatpush2.msra.mxu0 0.0
        %1795 = vmatprep.subr.mxu0 0.0
        %1796 = vmatpush2.msra.mxu0 0.0
        %1797 = vmatprep.mubr.f32.mxu0 0.0
        %1798 = vmatmul.mubr.f32.gmra.mxu0 %v1722
        %v1799 = vpop.f32.mrf.mxu0
        %v1800 = vadd.f32 0.0, %v1799
        %v1801 = vpop.f32.mrf.mxu0
        %v1802 = vadd.f32 0.0, %v1801
        %1803 = vmatprep.mubr.f32.mxu0 0.0
        %1804 = vmatmul.mubr.f32.gmra.mxu0 %v1725
        %v1805 = vpop.f32.mrf.mxu0
        %v1806 = vadd.f32 0.0, %v1805
        %v1807 = vpop.f32.mrf.mxu0
        %v1808 = vadd.f32 0.0, %v1807
        %1809 = vmatprep.mubr.f32.mxu0 0.0
        %1810 = vmatmul.mubr.f32.gmra.mxu0 %v1728
        %v1811 = vpop.f32.mrf.mxu0
        %v1812 = vadd.f32 0.0, %v1811
        %v1813 = vpop.f32.mrf.mxu0
        %v1814 = vadd.f32 0.0, %v1813
        %1815 = vmatprep.mubr.f32.mxu0 0.0
        %1816 = vmatmul.mubr.f32.gmra.mxu0 %v1731
        %v1817 = vpop.f32.mrf.mxu0
        %v1818 = vadd.f32 0.0, %v1817
        %v1819 = vpop.f32.mrf.mxu0
        %v1820 = vadd.f32 0.0, %v1819
        %1821 = vdwg.mxu0
        %1822 = vmatprep.subr.mxu0 0.0
        %1823 = vmatpush1.msra.mxu0 0.0
        %1824 = vmatprep.subr.mxu0 0.0
        %1825 = vmatpush1.msra.mxu0 0.0
        %1826 = vmatprep.subr.mxu0 0.0
        %1827 = vmatpush1.msra.mxu0 0.0
        %1828 = vmatprep.subr.mxu0 0.0
        %1829 = vmatpush1.msra.mxu0 0.0
        %1830 = vmatprep.subr.mxu0 0.0
        %1831 = vmatpush1.msra.mxu0 0.0
        %1832 = vmatprep.subr.mxu0 0.0
        %1833 = vmatpush1.msra.mxu0 0.0
        %1834 = vmatprep.subr.mxu0 0.0
        %1835 = vmatpush1.msra.mxu0 0.0
        %1836 = vmatprep.subr.mxu0 0.0
        %1837 = vmatpush1.msra.mxu0 0.0
        %1838 = vmatprep.subr.mxu0 0.0
        %1839 = vmatpush1.msra.mxu0 0.0
        %1840 = vmatprep.subr.mxu0 0.0
        %1841 = vmatpush1.msra.mxu0 0.0
        %1842 = vmatprep.subr.mxu0 0.0
        %1843 = vmatpush1.msra.mxu0 0.0
        %1844 = vmatprep.subr.mxu0 0.0
        %1845 = vmatpush1.msra.mxu0 0.0
        %1846 = vmatprep.subr.mxu0 0.0
        %1847 = vmatpush1.msra.mxu0 %v1720
        %1848 = vmatprep.subr.mxu0 0.0
        %1849 = vmatpush1.msra.mxu0 %v1717
        %1850 = vmatprep.subr.mxu0 0.0
        %1851 = vmatpush1.msra.mxu0 %v1714
        %1852 = vmatprep.subr.mxu0 0.0
        %1853 = vmatpush1.msra.mxu0 %v1711
        %1854 = vmatprep.subr.mxu0 0.0
        %1855 = vmatpush2.msra.mxu0 0.0
        %1856 = vmatprep.subr.mxu0 0.0
        %1857 = vmatpush2.msra.mxu0 0.0
        %1858 = vmatprep.subr.mxu0 0.0
        %1859 = vmatpush2.msra.mxu0 0.0
        %1860 = vmatprep.subr.mxu0 0.0
        %1861 = vmatpush2.msra.mxu0 0.0
        %1862 = vmatprep.subr.mxu0 0.0
        %1863 = vmatpush2.msra.mxu0 0.0
        %1864 = vmatprep.subr.mxu0 0.0
        %1865 = vmatpush2.msra.mxu0 0.0
        %1866 = vmatprep.subr.mxu0 0.0
        %1867 = vmatpush2.msra.mxu0 0.0
        %1868 = vmatprep.subr.mxu0 0.0
        %1869 = vmatpush2.msra.mxu0 0.0
        %1870 = vmatprep.subr.mxu0 0.0
        %1871 = vmatpush2.msra.mxu0 0.0
        %1872 = vmatprep.subr.mxu0 0.0
        %1873 = vmatpush2.msra.mxu0 0.0
        %1874 = vmatprep.subr.mxu0 0.0
        %1875 = vmatpush2.msra.mxu0 0.0
        %1876 = vmatprep.subr.mxu0 0.0
        %1877 = vmatpush2.msra.mxu0 0.0
        %1878 = vmatprep.subr.mxu0 0.0
        %1879 = vmatpush2.msra.mxu0 0.0
        %1880 = vmatprep.subr.mxu0 0.0
        %1881 = vmatpush2.msra.mxu0 0.0
        %1882 = vmatprep.subr.mxu0 0.0
        %1883 = vmatpush2.msra.mxu0 0.0
        %1884 = vmatprep.subr.mxu0 0.0
        %1885 = vmatpush2.msra.mxu0 0.0
        %1886 = vmatprep.mubr.f32.mxu0 0.0
        %1887 = vmatmul.mubr.f32.gmra.mxu0 %v1722
        %v1888 = vpop.f32.mrf.mxu0
        %v1889 = vadd.f32 0.0, %v1888
        %v1890 = vpop.f32.mrf.mxu0
        %1891 = vmatprep.mubr.f32.mxu0 0.0
        %1892 = vmatmul.mubr.f32.gmra.mxu0 %v1725
        %v1893 = vpop.f32.mrf.mxu0
        %v1894 = vadd.f32 0.0, %v1893
        %v1895 = vpop.f32.mrf.mxu0
        %1896 = vmatprep.mubr.f32.mxu0 0.0
        %1897 = vmatmul.mubr.f32.gmra.mxu0 %v1728
        %v1898 = vpop.f32.mrf.mxu0
        %v1899 = vadd.f32 0.0, %v1898
        %v1900 = vpop.f32.mrf.mxu0
        %1901 = vmatprep.mubr.f32.mxu0 0.0
        %1902 = vmatmul.mubr.f32.gmra.mxu0 %v1731
        %v1903 = vpop.f32.mrf.mxu0
        %v1904 = vadd.f32 0.0, %v1903
        %v1905 = vpop.f32.mrf.mxu0
        %1906 = vdwg.mxu0
        %v1907 = vadd.f32 %v1692, %v1800
        %v1908 = vadd.f32 %v1693, %v1802
        %v1909 = vadd.f32 %v1694, %v1889
        %v1910 = vadd.f32 %v1695, %v1806
        %v1911 = vadd.f32 %v1696, %v1808
        %v1912 = vadd.f32 %v1697, %v1894
        %v1913 = vadd.f32 %v1698, %v1812
        %v1914 = vadd.f32 %v1699, %v1814
        %v1915 = vadd.f32 %v1700, %v1899
        %v1916 = vadd.f32 %v1701, %v1818
        %v1917 = vadd.f32 %v1702, %v1820
        %v1918 = vadd.f32 %v1703, %v1904
        %v1919 = vld [vmem:[%s437 + $0x22] sm:$0xff]
        %v1920 = vld [vmem:[%s437 + $0x2a] sm:$0xff]
        %v1921 = vld [vmem:[%s437 + $0x32] sm:$0xff]
        %v1922 = vld [vmem:[%s437 + $0x3a] sm:$0x3f]
        %s1923 = scalar_lea.vmem %s1, 672
        %v1924 = vld [vmem:[%s1923] sm:$0xff]
        %v1925 = vld [vmem:[%s1923 + $0x8] sm:$0xff]
        %v1926 = vld [vmem:[%s1923 + $0x10] sm:$0xff]
        %v1927 = vld [vmem:[%s1923 + $0x18] sm:$0xff]
        %v1928 = vld [vmem:[%s1923 + $0x20] sm:$0xff]
        %v1929 = vld [vmem:[%s1923 + $0x28] sm:$0xff]
        %v1930 = vld [vmem:[%s1923 + $0x30] sm:$0xff]
        %v1931 = vld [vmem:[%s1923 + $0x38] sm:$0xff]
        %v1932 = vld [vmem:[%s1923 + $0x40] sm:$0xff]
        %v1933 = vld [vmem:[%s1923 + $0x48] sm:$0xff]
        %v1934 = vld [vmem:[%s1923 + $0x50] sm:$0xff]
        %v1935 = vld [vmem:[%s1923 + $0x58] sm:$0xff]
        %v1937 = vsel %vm471, %v1919, 0
        %v1940 = vsel %vm471, %v1920, 0
        %v1943 = vsel %vm471, %v1921, 0
        %v1946 = vsel %vm471, %v1922, 0
        %1948 = vmatprep.subr.mxu0 0.0
        %1949 = vmatpush1.msra.mxu0 0.0
        %1950 = vmatprep.subr.mxu0 0.0
        %1951 = vmatpush1.msra.mxu0 0.0
        %1952 = vmatprep.subr.mxu0 0.0
        %1953 = vmatpush1.msra.mxu0 0.0
        %1954 = vmatprep.subr.mxu0 0.0
        %1955 = vmatpush1.msra.mxu0 0.0
        %1956 = vmatprep.subr.mxu0 0.0
        %1957 = vmatpush1.msra.mxu0 0.0
        %1958 = vmatprep.subr.mxu0 0.0
        %1959 = vmatpush1.msra.mxu0 0.0
        %1960 = vmatprep.subr.mxu0 0.0
        %1961 = vmatpush1.msra.mxu0 0.0
        %1962 = vmatprep.subr.mxu0 0.0
        %1963 = vmatpush1.msra.mxu0 0.0
        %1964 = vmatprep.subr.mxu0 0.0
        %1965 = vmatpush1.msra.mxu0 0.0
        %1966 = vmatprep.subr.mxu0 0.0
        %1967 = vmatpush1.msra.mxu0 0.0
        %1968 = vmatprep.subr.mxu0 0.0
        %1969 = vmatpush1.msra.mxu0 0.0
        %1970 = vmatprep.subr.mxu0 0.0
        %1971 = vmatpush1.msra.mxu0 0.0
        %1972 = vmatprep.subr.mxu0 %v1934
        %1973 = vmatpush1.msra.mxu0 %v1933
        %1974 = vmatprep.subr.mxu0 %v1931
        %1975 = vmatpush1.msra.mxu0 %v1930
        %1976 = vmatprep.subr.mxu0 %v1928
        %1977 = vmatpush1.msra.mxu0 %v1927
        %1978 = vmatprep.subr.mxu0 %v1925
        %1979 = vmatpush1.msra.mxu0 %v1924
        %1980 = vmatprep.subr.mxu0 0.0
        %1981 = vmatpush2.msra.mxu0 0.0
        %1982 = vmatprep.subr.mxu0 0.0
        %1983 = vmatpush2.msra.mxu0 0.0
        %1984 = vmatprep.subr.mxu0 0.0
        %1985 = vmatpush2.msra.mxu0 0.0
        %1986 = vmatprep.subr.mxu0 0.0
        %1987 = vmatpush2.msra.mxu0 0.0
        %1988 = vmatprep.subr.mxu0 0.0
        %1989 = vmatpush2.msra.mxu0 0.0
        %1990 = vmatprep.subr.mxu0 0.0
        %1991 = vmatpush2.msra.mxu0 0.0
        %1992 = vmatprep.subr.mxu0 0.0
        %1993 = vmatpush2.msra.mxu0 0.0
        %1994 = vmatprep.subr.mxu0 0.0
        %1995 = vmatpush2.msra.mxu0 0.0
        %1996 = vmatprep.subr.mxu0 0.0
        %1997 = vmatpush2.msra.mxu0 0.0
        %1998 = vmatprep.subr.mxu0 0.0
        %1999 = vmatpush2.msra.mxu0 0.0
        %2000 = vmatprep.subr.mxu0 0.0
        %2001 = vmatpush2.msra.mxu0 0.0
        %2002 = vmatprep.subr.mxu0 0.0
        %2003 = vmatpush2.msra.mxu0 0.0
        %2004 = vmatprep.subr.mxu0 0.0
        %2005 = vmatpush2.msra.mxu0 0.0
        %2006 = vmatprep.subr.mxu0 0.0
        %2007 = vmatpush2.msra.mxu0 0.0
        %2008 = vmatprep.subr.mxu0 0.0
        %2009 = vmatpush2.msra.mxu0 0.0
        %2010 = vmatprep.subr.mxu0 0.0
        %2011 = vmatpush2.msra.mxu0 0.0
        %2012 = vmatprep.mubr.f32.mxu0 0.0
        %2013 = vmatmul.mubr.f32.gmra.mxu0 %v1937
        %v2014 = vpop.f32.mrf.mxu0
        %v2015 = vadd.f32 0.0, %v2014
        %v2016 = vpop.f32.mrf.mxu0
        %v2017 = vadd.f32 0.0, %v2016
        %2018 = vmatprep.mubr.f32.mxu0 0.0
        %2019 = vmatmul.mubr.f32.gmra.mxu0 %v1940
        %v2020 = vpop.f32.mrf.mxu0
        %v2021 = vadd.f32 0.0, %v2020
        %v2022 = vpop.f32.mrf.mxu0
        %v2023 = vadd.f32 0.0, %v2022
        %2024 = vmatprep.mubr.f32.mxu0 0.0
        %2025 = vmatmul.mubr.f32.gmra.mxu0 %v1943
        %v2026 = vpop.f32.mrf.mxu0
        %v2027 = vadd.f32 0.0, %v2026
        %v2028 = vpop.f32.mrf.mxu0
        %v2029 = vadd.f32 0.0, %v2028
        %2030 = vmatprep.mubr.f32.mxu0 0.0
        %2031 = vmatmul.mubr.f32.gmra.mxu0 %v1946
        %v2032 = vpop.f32.mrf.mxu0
        %v2033 = vadd.f32 0.0, %v2032
        %v2034 = vpop.f32.mrf.mxu0
        %v2035 = vadd.f32 0.0, %v2034
        %2036 = vdwg.mxu0
        %2037 = vmatprep.subr.mxu0 0.0
        %2038 = vmatpush1.msra.mxu0 0.0
        %2039 = vmatprep.subr.mxu0 0.0
        %2040 = vmatpush1.msra.mxu0 0.0
        %2041 = vmatprep.subr.mxu0 0.0
        %2042 = vmatpush1.msra.mxu0 0.0
        %2043 = vmatprep.subr.mxu0 0.0
        %2044 = vmatpush1.msra.mxu0 0.0
        %2045 = vmatprep.subr.mxu0 0.0
        %2046 = vmatpush1.msra.mxu0 0.0
        %2047 = vmatprep.subr.mxu0 0.0
        %2048 = vmatpush1.msra.mxu0 0.0
        %2049 = vmatprep.subr.mxu0 0.0
        %2050 = vmatpush1.msra.mxu0 0.0
        %2051 = vmatprep.subr.mxu0 0.0
        %2052 = vmatpush1.msra.mxu0 0.0
        %2053 = vmatprep.subr.mxu0 0.0
        %2054 = vmatpush1.msra.mxu0 0.0
        %2055 = vmatprep.subr.mxu0 0.0
        %2056 = vmatpush1.msra.mxu0 0.0
        %2057 = vmatprep.subr.mxu0 0.0
        %2058 = vmatpush1.msra.mxu0 0.0
        %2059 = vmatprep.subr.mxu0 0.0
        %2060 = vmatpush1.msra.mxu0 0.0
        %2061 = vmatprep.subr.mxu0 0.0
        %2062 = vmatpush1.msra.mxu0 %v1935
        %2063 = vmatprep.subr.mxu0 0.0
        %2064 = vmatpush1.msra.mxu0 %v1932
        %2065 = vmatprep.subr.mxu0 0.0
        %2066 = vmatpush1.msra.mxu0 %v1929
        %2067 = vmatprep.subr.mxu0 0.0
        %2068 = vmatpush1.msra.mxu0 %v1926
        %2069 = vmatprep.subr.mxu0 0.0
        %2070 = vmatpush2.msra.mxu0 0.0
        %2071 = vmatprep.subr.mxu0 0.0
        %2072 = vmatpush2.msra.mxu0 0.0
        %2073 = vmatprep.subr.mxu0 0.0
        %2074 = vmatpush2.msra.mxu0 0.0
        %2075 = vmatprep.subr.mxu0 0.0
        %2076 = vmatpush2.msra.mxu0 0.0
        %2077 = vmatprep.subr.mxu0 0.0
        %2078 = vmatpush2.msra.mxu0 0.0
        %2079 = vmatprep.subr.mxu0 0.0
        %2080 = vmatpush2.msra.mxu0 0.0
        %2081 = vmatprep.subr.mxu0 0.0
        %2082 = vmatpush2.msra.mxu0 0.0
        %2083 = vmatprep.subr.mxu0 0.0
        %2084 = vmatpush2.msra.mxu0 0.0
        %2085 = vmatprep.subr.mxu0 0.0
        %2086 = vmatpush2.msra.mxu0 0.0
        %2087 = vmatprep.subr.mxu0 0.0
        %2088 = vmatpush2.msra.mxu0 0.0
        %2089 = vmatprep.subr.mxu0 0.0
        %2090 = vmatpush2.msra.mxu0 0.0
        %2091 = vmatprep.subr.mxu0 0.0
        %2092 = vmatpush2.msra.mxu0 0.0
        %2093 = vmatprep.subr.mxu0 0.0
        %2094 = vmatpush2.msra.mxu0 0.0
        %2095 = vmatprep.subr.mxu0 0.0
        %2096 = vmatpush2.msra.mxu0 0.0
        %2097 = vmatprep.subr.mxu0 0.0
        %2098 = vmatpush2.msra.mxu0 0.0
        %2099 = vmatprep.subr.mxu0 0.0
        %2100 = vmatpush2.msra.mxu0 0.0
        %2101 = vmatprep.mubr.f32.mxu0 0.0
        %2102 = vmatmul.mubr.f32.gmra.mxu0 %v1937
        %v2103 = vpop.f32.mrf.mxu0
        %v2104 = vadd.f32 0.0, %v2103
        %v2105 = vpop.f32.mrf.mxu0
        %2106 = vmatprep.mubr.f32.mxu0 0.0
        %2107 = vmatmul.mubr.f32.gmra.mxu0 %v1940
        %v2108 = vpop.f32.mrf.mxu0
        %v2109 = vadd.f32 0.0, %v2108
        %v2110 = vpop.f32.mrf.mxu0
        %2111 = vmatprep.mubr.f32.mxu0 0.0
        %2112 = vmatmul.mubr.f32.gmra.mxu0 %v1943
        %v2113 = vpop.f32.mrf.mxu0
        %v2114 = vadd.f32 0.0, %v2113
        %v2115 = vpop.f32.mrf.mxu0
        %2116 = vmatprep.mubr.f32.mxu0 0.0
        %2117 = vmatmul.mubr.f32.gmra.mxu0 %v1946
        %v2118 = vpop.f32.mrf.mxu0
        %v2119 = vadd.f32 0.0, %v2118
        %v2120 = vpop.f32.mrf.mxu0
        %2121 = vdwg.mxu0
        %v2122 = vadd.f32 %v1907, %v2015
        %v2123 = vadd.f32 %v1908, %v2017
        %v2124 = vadd.f32 %v1909, %v2104
        %v2125 = vadd.f32 %v1910, %v2021
        %v2126 = vadd.f32 %v1911, %v2023
        %v2127 = vadd.f32 %v1912, %v2109
        %v2128 = vadd.f32 %v1913, %v2027
        %v2129 = vadd.f32 %v1914, %v2029
        %v2130 = vadd.f32 %v1915, %v2114
        %v2131 = vadd.f32 %v1916, %v2033
        %v2132 = vadd.f32 %v1917, %v2035
        %v2133 = vadd.f32 %v1918, %v2119
        %v2134 = vld [vmem:[%s437 + $0x42] sm:$0xff]
        %v2135 = vld [vmem:[%s437 + $0x4a] sm:$0xff]
        %v2136 = vld [vmem:[%s437 + $0x52] sm:$0xff]
        %v2137 = vld [vmem:[%s437 + $0x5a] sm:$0x3f]
        %s2138 = scalar_lea.vmem %s1, 768
        %v2139 = vld [vmem:[%s2138] sm:$0xff]
        %v2140 = vld [vmem:[%s2138 + $0x8] sm:$0xff]
        %v2141 = vld [vmem:[%s2138 + $0x10] sm:$0xff]
        %v2142 = vld [vmem:[%s2138 + $0x18] sm:$0xff]
        %v2143 = vld [vmem:[%s2138 + $0x20] sm:$0xff]
        %v2144 = vld [vmem:[%s2138 + $0x28] sm:$0xff]
        %v2145 = vld [vmem:[%s2138 + $0x30] sm:$0xff]
        %v2146 = vld [vmem:[%s2138 + $0x38] sm:$0xff]
        %v2147 = vld [vmem:[%s2138 + $0x40] sm:$0xff]
        %v2148 = vld [vmem:[%s2138 + $0x48] sm:$0xff]
        %v2149 = vld [vmem:[%s2138 + $0x50] sm:$0xff]
        %v2150 = vld [vmem:[%s2138 + $0x58] sm:$0xff]
        %v2152 = vsel %vm471, %v2134, 0
        %v2155 = vsel %vm471, %v2135, 0
        %v2158 = vsel %vm471, %v2136, 0
        %v2161 = vsel %vm471, %v2137, 0
        %2163 = vmatprep.subr.mxu0 0.0
        %2164 = vmatpush1.msra.mxu0 0.0
        %2165 = vmatprep.subr.mxu0 0.0
        %2166 = vmatpush1.msra.mxu0 0.0
        %2167 = vmatprep.subr.mxu0 0.0
        %2168 = vmatpush1.msra.mxu0 0.0
        %2169 = vmatprep.subr.mxu0 0.0
        %2170 = vmatpush1.msra.mxu0 0.0
        %2171 = vmatprep.subr.mxu0 0.0
        %2172 = vmatpush1.msra.mxu0 0.0
        %2173 = vmatprep.subr.mxu0 0.0
        %2174 = vmatpush1.msra.mxu0 0.0
        %2175 = vmatprep.subr.mxu0 0.0
        %2176 = vmatpush1.msra.mxu0 0.0
        %2177 = vmatprep.subr.mxu0 0.0
        %2178 = vmatpush1.msra.mxu0 0.0
        %2179 = vmatprep.subr.mxu0 0.0
        %2180 = vmatpush1.msra.mxu0 0.0
        %2181 = vmatprep.subr.mxu0 0.0
        %2182 = vmatpush1.msra.mxu0 0.0
        %2183 = vmatprep.subr.mxu0 0.0
        %2184 = vmatpush1.msra.mxu0 0.0
        %2185 = vmatprep.subr.mxu0 0.0
        %2186 = vmatpush1.msra.mxu0 0.0
        %2187 = vmatprep.subr.mxu0 %v2149
        %2188 = vmatpush1.msra.mxu0 %v2148
        %2189 = vmatprep.subr.mxu0 %v2146
        %2190 = vmatpush1.msra.mxu0 %v2145
        %2191 = vmatprep.subr.mxu0 %v2143
        %2192 = vmatpush1.msra.mxu0 %v2142
        %2193 = vmatprep.subr.mxu0 %v2140
        %2194 = vmatpush1.msra.mxu0 %v2139
        %2195 = vmatprep.subr.mxu0 0.0
        %2196 = vmatpush2.msra.mxu0 0.0
        %2197 = vmatprep.subr.mxu0 0.0
        %2198 = vmatpush2.msra.mxu0 0.0
        %2199 = vmatprep.subr.mxu0 0.0
        %2200 = vmatpush2.msra.mxu0 0.0
        %2201 = vmatprep.subr.mxu0 0.0
        %2202 = vmatpush2.msra.mxu0 0.0
        %2203 = vmatprep.subr.mxu0 0.0
        %2204 = vmatpush2.msra.mxu0 0.0
        %2205 = vmatprep.subr.mxu0 0.0
        %2206 = vmatpush2.msra.mxu0 0.0
        %2207 = vmatprep.subr.mxu0 0.0
        %2208 = vmatpush2.msra.mxu0 0.0
        %2209 = vmatprep.subr.mxu0 0.0
        %2210 = vmatpush2.msra.mxu0 0.0
        %2211 = vmatprep.subr.mxu0 0.0
        %2212 = vmatpush2.msra.mxu0 0.0
        %2213 = vmatprep.subr.mxu0 0.0
        %2214 = vmatpush2.msra.mxu0 0.0
        %2215 = vmatprep.subr.mxu0 0.0
        %2216 = vmatpush2.msra.mxu0 0.0
        %2217 = vmatprep.subr.mxu0 0.0
        %2218 = vmatpush2.msra.mxu0 0.0
        %2219 = vmatprep.subr.mxu0 0.0
        %2220 = vmatpush2.msra.mxu0 0.0
        %2221 = vmatprep.subr.mxu0 0.0
        %2222 = vmatpush2.msra.mxu0 0.0
        %2223 = vmatprep.subr.mxu0 0.0
        %2224 = vmatpush2.msra.mxu0 0.0
        %2225 = vmatprep.subr.mxu0 0.0
        %2226 = vmatpush2.msra.mxu0 0.0
        %2227 = vmatprep.mubr.f32.mxu0 0.0
        %2228 = vmatmul.mubr.f32.gmra.mxu0 %v2152
        %v2229 = vpop.f32.mrf.mxu0
        %v2230 = vadd.f32 0.0, %v2229
        %v2231 = vpop.f32.mrf.mxu0
        %v2232 = vadd.f32 0.0, %v2231
        %2233 = vmatprep.mubr.f32.mxu0 0.0
        %2234 = vmatmul.mubr.f32.gmra.mxu0 %v2155
        %v2235 = vpop.f32.mrf.mxu0
        %v2236 = vadd.f32 0.0, %v2235
        %v2237 = vpop.f32.mrf.mxu0
        %v2238 = vadd.f32 0.0, %v2237
        %2239 = vmatprep.mubr.f32.mxu0 0.0
        %2240 = vmatmul.mubr.f32.gmra.mxu0 %v2158
        %v2241 = vpop.f32.mrf.mxu0
        %v2242 = vadd.f32 0.0, %v2241
        %v2243 = vpop.f32.mrf.mxu0
        %v2244 = vadd.f32 0.0, %v2243
        %2245 = vmatprep.mubr.f32.mxu0 0.0
        %2246 = vmatmul.mubr.f32.gmra.mxu0 %v2161
        %v2247 = vpop.f32.mrf.mxu0
        %v2248 = vadd.f32 0.0, %v2247
        %v2249 = vpop.f32.mrf.mxu0
        %v2250 = vadd.f32 0.0, %v2249
        %2251 = vdwg.mxu0
        %2252 = vmatprep.subr.mxu0 0.0
        %2253 = vmatpush1.msra.mxu0 0.0
        %2254 = vmatprep.subr.mxu0 0.0
        %2255 = vmatpush1.msra.mxu0 0.0
        %2256 = vmatprep.subr.mxu0 0.0
        %2257 = vmatpush1.msra.mxu0 0.0
        %2258 = vmatprep.subr.mxu0 0.0
        %2259 = vmatpush1.msra.mxu0 0.0
        %2260 = vmatprep.subr.mxu0 0.0
        %2261 = vmatpush1.msra.mxu0 0.0
        %2262 = vmatprep.subr.mxu0 0.0
        %2263 = vmatpush1.msra.mxu0 0.0
        %2264 = vmatprep.subr.mxu0 0.0
        %2265 = vmatpush1.msra.mxu0 0.0
        %2266 = vmatprep.subr.mxu0 0.0
        %2267 = vmatpush1.msra.mxu0 0.0
        %2268 = vmatprep.subr.mxu0 0.0
        %2269 = vmatpush1.msra.mxu0 0.0
        %2270 = vmatprep.subr.mxu0 0.0
        %2271 = vmatpush1.msra.mxu0 0.0
        %2272 = vmatprep.subr.mxu0 0.0
        %2273 = vmatpush1.msra.mxu0 0.0
        %2274 = vmatprep.subr.mxu0 0.0
        %2275 = vmatpush1.msra.mxu0 0.0
        %2276 = vmatprep.subr.mxu0 0.0
        %2277 = vmatpush1.msra.mxu0 %v2150
        %2278 = vmatprep.subr.mxu0 0.0
        %2279 = vmatpush1.msra.mxu0 %v2147
        %2280 = vmatprep.subr.mxu0 0.0
        %2281 = vmatpush1.msra.mxu0 %v2144
        %2282 = vmatprep.subr.mxu0 0.0
        %2283 = vmatpush1.msra.mxu0 %v2141
        %2284 = vmatprep.subr.mxu0 0.0
        %2285 = vmatpush2.msra.mxu0 0.0
        %2286 = vmatprep.subr.mxu0 0.0
        %2287 = vmatpush2.msra.mxu0 0.0
        %2288 = vmatprep.subr.mxu0 0.0
        %2289 = vmatpush2.msra.mxu0 0.0
        %2290 = vmatprep.subr.mxu0 0.0
        %2291 = vmatpush2.msra.mxu0 0.0
        %2292 = vmatprep.subr.mxu0 0.0
        %2293 = vmatpush2.msra.mxu0 0.0
        %2294 = vmatprep.subr.mxu0 0.0
        %2295 = vmatpush2.msra.mxu0 0.0
        %2296 = vmatprep.subr.mxu0 0.0
        %2297 = vmatpush2.msra.mxu0 0.0
        %2298 = vmatprep.subr.mxu0 0.0
        %2299 = vmatpush2.msra.mxu0 0.0
        %2300 = vmatprep.subr.mxu0 0.0
        %2301 = vmatpush2.msra.mxu0 0.0
        %2302 = vmatprep.subr.mxu0 0.0
        %2303 = vmatpush2.msra.mxu0 0.0
        %2304 = vmatprep.subr.mxu0 0.0
        %2305 = vmatpush2.msra.mxu0 0.0
        %2306 = vmatprep.subr.mxu0 0.0
        %2307 = vmatpush2.msra.mxu0 0.0
        %2308 = vmatprep.subr.mxu0 0.0
        %2309 = vmatpush2.msra.mxu0 0.0
        %2310 = vmatprep.subr.mxu0 0.0
        %2311 = vmatpush2.msra.mxu0 0.0
        %2312 = vmatprep.subr.mxu0 0.0
        %2313 = vmatpush2.msra.mxu0 0.0
        %2314 = vmatprep.subr.mxu0 0.0
        %2315 = vmatpush2.msra.mxu0 0.0
        %2316 = vmatprep.mubr.f32.mxu0 0.0
        %2317 = vmatmul.mubr.f32.gmra.mxu0 %v2152
        %v2318 = vpop.f32.mrf.mxu0
        %v2319 = vadd.f32 0.0, %v2318
        %v2320 = vpop.f32.mrf.mxu0
        %2321 = vmatprep.mubr.f32.mxu0 0.0
        %2322 = vmatmul.mubr.f32.gmra.mxu0 %v2155
        %v2323 = vpop.f32.mrf.mxu0
        %v2324 = vadd.f32 0.0, %v2323
        %v2325 = vpop.f32.mrf.mxu0
        %2326 = vmatprep.mubr.f32.mxu0 0.0
        %2327 = vmatmul.mubr.f32.gmra.mxu0 %v2158
        %v2328 = vpop.f32.mrf.mxu0
        %v2329 = vadd.f32 0.0, %v2328
        %v2330 = vpop.f32.mrf.mxu0
        %2331 = vmatprep.mubr.f32.mxu0 0.0
        %2332 = vmatmul.mubr.f32.gmra.mxu0 %v2161
        %v2333 = vpop.f32.mrf.mxu0
        %v2334 = vadd.f32 0.0, %v2333
        %v2335 = vpop.f32.mrf.mxu0
        %2336 = vdwg.mxu0
        %v2337 = vadd.f32 %v2122, %v2230
        %v2338 = vadd.f32 %v2123, %v2232
        %v2339 = vadd.f32 %v2124, %v2319
        %v2340 = vadd.f32 %v2125, %v2236
        %v2341 = vadd.f32 %v2126, %v2238
        %v2342 = vadd.f32 %v2127, %v2324
        %v2343 = vadd.f32 %v2128, %v2242
        %v2344 = vadd.f32 %v2129, %v2244
        %v2345 = vadd.f32 %v2130, %v2329
        %v2346 = vadd.f32 %v2131, %v2248
        %v2347 = vadd.f32 %v2132, %v2250
        %v2348 = vadd.f32 %v2133, %v2334
        %v2349 = vld [vmem:[%s2] sm:$0x7]
        %v2351 = vlaneseq
        %v2352 = vshrl.u32 %v2351, 7
        %v2353 = vsub.s32 0, %v2352
        %v2354 = vrot.slane %v2349, %v2353
        %v2355 = vlaneseq
        %v2356 = vshrl.u32 %v2355, 7
        %v2357 = vsub.s32 1, %v2356
        %v2358 = vrot.slane %v2349, %v2357
        %v2359 = vlaneseq
        %v2360 = vshrl.u32 %v2359, 7
        %v2361 = vsub.s32 2, %v2360
        %v2362 = vrot.slane %v2349, %v2361
        %v2366 = vadd.f32 %v2337, %v2354
        %v2367 = vadd.f32 %v2338, %v2358
        %v2368 = vadd.f32 %v2339, %v2362
        %v2369 = vadd.f32 %v2340, %v2354
        %v2370 = vadd.f32 %v2341, %v2358
        %v2371 = vadd.f32 %v2342, %v2362
        %v2372 = vadd.f32 %v2343, %v2354
        %v2373 = vadd.f32 %v2344, %v2358
        %v2374 = vadd.f32 %v2345, %v2362
        %v2375 = vadd.f32 %v2346, %v2354
        %v2376 = vadd.f32 %v2347, %v2358
        %v2377 = vadd.f32 %v2348, %v2362
        %v2378 = vmax.f32 %v2366, 0.0
        %v2379 = vmax.f32 %v2367, 0.0
        %v2380 = vmax.f32 %v2368, 0.0
        %v2381 = vmax.f32 %v2369, 0.0
        %v2382 = vmax.f32 %v2370, 0.0
        %v2383 = vmax.f32 %v2371, 0.0
        %v2384 = vmax.f32 %v2372, 0.0
        %v2385 = vmax.f32 %v2373, 0.0
        %v2386 = vmax.f32 %v2374, 0.0
        %v2387 = vmax.f32 %v2375, 0.0
        %v2388 = vmax.f32 %v2376, 0.0
        %v2389 = vmax.f32 %v2377, 0.0
        %2390 = vst [vmem:[#allocation2] sm:$0xff] %v2378
        %2391 = vst [vmem:[#allocation2 + $0x8] sm:$0xff] %v2379
        %vm2392 = vcmask 850944
        %2393 = vst.msk [vmem:[#allocation2 + $0x10] sm:$0xff] %vm2392, %v2380
        %2394 = vst [vmem:[#allocation2 + $0x18] sm:$0xff] %v2381
        %2395 = vst [vmem:[#allocation2 + $0x20] sm:$0xff] %v2382
        %2396 = vst.msk [vmem:[#allocation2 + $0x28] sm:$0xff] %vm2392, %v2383
        %2397 = vst [vmem:[#allocation2 + $0x30] sm:$0xff] %v2384
        %2398 = vst [vmem:[#allocation2 + $0x38] sm:$0xff] %v2385
        %2399 = vst.msk [vmem:[#allocation2 + $0x40] sm:$0xff] %vm2392, %v2386
        %2400 = vst [vmem:[#allocation2 + $0x48] sm:$0x3f] %v2387
        %2401 = vst [vmem:[#allocation2 + $0x50] sm:$0x3f] %v2388
        %vm2402 = vcmask 848896
        %2403 = vst.msk [vmem:[#allocation2 + $0x58] sm:$0x3f] %vm2402, %v2389
        %v2404 = vld [vmem:[#allocation2] ss:$8 sm:$0x7]
        %s2405 = scalar_lea.vmem [#allocation2], 1
        %v2406 = vld [vmem:[%s2405] ss:$8 sm:$0x7]
        %v2407 = vmax.f32 %v2404, %v2406
        %v2408 = vlaneseq
        %vm2409 = vcmp.ge.s32.totalorder %v2408, 0
        %vm2410 = vcmp.lt.s32.totalorder %v2408, 360
        %vm2411 = vmand %vm2409, %vm2410
        %2412 = vst.msk [vmem:[#allocation3] ss:$8 sm:$0x7] %vm2411, %v2407
        %2413 = vst.msk [vmem:[#allocation3] ss:$8 sm:$0x0] %vm2411, %v2407
        %s2414 = scalar_lea.vmem [#allocation2], 2
        %v2415 = vld [vmem:[%s2414] ss:$8 sm:$0x7]
        %s2416 = scalar_lea.vmem [#allocation2], 3
        %v2417 = vld [vmem:[%s2416] ss:$8 sm:$0x7]
        %v2418 = vmax.f32 %v2415, %v2417
        %s2419 = scalar_lea.vmem [#allocation3], 1
        %2420 = vst.msk [vmem:[%s2419] ss:$8 sm:$0x7] %vm2411, %v2418
        %2421 = vst.msk [vmem:[%s2419] ss:$8 sm:$0x0] %vm2411, %v2418
        %s2422 = scalar_lea.vmem [#allocation2], 4
        %v2423 = vld [vmem:[%s2422] ss:$8 sm:$0x7]
        %s2424 = scalar_lea.vmem [#allocation2], 5
        %v2425 = vld [vmem:[%s2424] ss:$8 sm:$0x7]
        %v2426 = vmax.f32 %v2423, %v2425
        %s2427 = scalar_lea.vmem [#allocation3], 2
        %2428 = vst.msk [vmem:[%s2427] ss:$8 sm:$0x7] %vm2411, %v2426
        %2429 = vst.msk [vmem:[%s2427] ss:$8 sm:$0x0] %vm2411, %v2426
        %s2430 = scalar_lea.vmem [#allocation2], 6
        %v2431 = vld [vmem:[%s2430] ss:$8 sm:$0x7]
        %s2432 = scalar_lea.vmem [#allocation2], 7
        %v2433 = vld [vmem:[%s2432] ss:$8 sm:$0x7]
        %v2434 = vmax.f32 %v2431, %v2433
        %s2435 = scalar_lea.vmem [#allocation3], 3
        %2436 = vst.msk [vmem:[%s2435] ss:$8 sm:$0x7] %vm2411, %v2434
        %2437 = vst.msk [vmem:[%s2435] ss:$8 sm:$0x0] %vm2411, %v2434
        %s2438 = scalar_lea.vmem [#allocation2], 24
        %v2439 = vld [vmem:[%s2438] ss:$8 sm:$0x7]
        %s2440 = scalar_lea.vmem [#allocation2], 25
        %v2441 = vld [vmem:[%s2440] ss:$8 sm:$0x7]
        %v2442 = vmax.f32 %v2439, %v2441
        %s2443 = scalar_lea.vmem [#allocation3], 4
        %2444 = vst.msk [vmem:[%s2443] ss:$8 sm:$0x7] %vm2411, %v2442
        %2445 = vst.msk [vmem:[%s2443] ss:$8 sm:$0x0] %vm2411, %v2442
        %s2446 = scalar_lea.vmem [#allocation2], 26
        %v2447 = vld [vmem:[%s2446] ss:$8 sm:$0x7]
        %s2448 = scalar_lea.vmem [#allocation2], 27
        %v2449 = vld [vmem:[%s2448] ss:$8 sm:$0x7]
        %v2450 = vmax.f32 %v2447, %v2449
        %s2451 = scalar_lea.vmem [#allocation3], 5
        %2452 = vst.msk [vmem:[%s2451] ss:$8 sm:$0x7] %vm2411, %v2450
        %2453 = vst.msk [vmem:[%s2451] ss:$8 sm:$0x0] %vm2411, %v2450
        %s2454 = scalar_lea.vmem [#allocation2], 28
        %v2455 = vld [vmem:[%s2454] ss:$8 sm:$0x7]
        %s2456 = scalar_lea.vmem [#allocation2], 29
        %v2457 = vld [vmem:[%s2456] ss:$8 sm:$0x7]
        %v2458 = vmax.f32 %v2455, %v2457
        %s2459 = scalar_lea.vmem [#allocation3], 6
        %2460 = vst.msk [vmem:[%s2459] ss:$8 sm:$0x7] %vm2411, %v2458
        %2461 = vst.msk [vmem:[%s2459] ss:$8 sm:$0x0] %vm2411, %v2458
        %s2462 = scalar_lea.vmem [#allocation2], 30
        %v2463 = vld [vmem:[%s2462] ss:$8 sm:$0x7]
        %s2464 = scalar_lea.vmem [#allocation2], 31
        %v2465 = vld [vmem:[%s2464] ss:$8 sm:$0x7]
        %v2466 = vmax.f32 %v2463, %v2465
        %s2467 = scalar_lea.vmem [#allocation3], 7
        %2468 = vst.msk [vmem:[%s2467] ss:$8 sm:$0x7] %vm2411, %v2466
        %2469 = vst.msk [vmem:[%s2467] ss:$8 sm:$0x0] %vm2411, %v2466
        %s2470 = scalar_lea.vmem [#allocation2], 48
        %v2471 = vld [vmem:[%s2470] ss:$8 sm:$0x7]
        %s2472 = scalar_lea.vmem [#allocation2], 49
        %v2473 = vld [vmem:[%s2472] ss:$8 sm:$0x7]
        %v2474 = vmax.f32 %v2471, %v2473
        %s2475 = scalar_lea.vmem [#allocation3], 24
        %2476 = vst.msk [vmem:[%s2475] ss:$8 sm:$0x7] %vm2411, %v2474
        %2477 = vst.msk [vmem:[%s2475] ss:$8 sm:$0x0] %vm2411, %v2474
        %s2478 = scalar_lea.vmem [#allocation2], 50
        %v2479 = vld [vmem:[%s2478] ss:$8 sm:$0x7]
        %s2480 = scalar_lea.vmem [#allocation2], 51
        %v2481 = vld [vmem:[%s2480] ss:$8 sm:$0x7]
        %v2482 = vmax.f32 %v2479, %v2481
        %s2483 = scalar_lea.vmem [#allocation3], 25
        %2484 = vst.msk [vmem:[%s2483] ss:$8 sm:$0x7] %vm2411, %v2482
        %2485 = vst.msk [vmem:[%s2483] ss:$8 sm:$0x0] %vm2411, %v2482
        %s2486 = scalar_lea.vmem [#allocation2], 52
        %v2487 = vld [vmem:[%s2486] ss:$8 sm:$0x7]
        %s2488 = scalar_lea.vmem [#allocation2], 53
        %v2489 = vld [vmem:[%s2488] ss:$8 sm:$0x7]
        %v2490 = vmax.f32 %v2487, %v2489
        %s2491 = scalar_lea.vmem [#allocation3], 26
        %2492 = vst.msk [vmem:[%s2491] ss:$8 sm:$0x7] %vm2411, %v2490
        %2493 = vst.msk [vmem:[%s2491] ss:$8 sm:$0x0] %vm2411, %v2490
        %s2494 = scalar_lea.vmem [#allocation2], 54
        %v2495 = vld [vmem:[%s2494] ss:$8 sm:$0x7]
        %s2496 = scalar_lea.vmem [#allocation2], 55
        %v2497 = vld [vmem:[%s2496] ss:$8 sm:$0x7]
        %v2498 = vmax.f32 %v2495, %v2497
        %s2499 = scalar_lea.vmem [#allocation3], 27
        %2500 = vst.msk [vmem:[%s2499] ss:$8 sm:$0x7] %vm2411, %v2498
        %2501 = vst.msk [vmem:[%s2499] ss:$8 sm:$0x0] %vm2411, %v2498
        %s2502 = scalar_lea.vmem [#allocation2], 72
        %v2503 = vld [vmem:[%s2502] ss:$8 sm:$0x7]
        %s2504 = scalar_lea.vmem [#allocation2], 73
        %v2505 = vld [vmem:[%s2504] ss:$8 sm:$0x7]
        %v2506 = vmax.f32 %v2503, %v2505
        %s2507 = scalar_lea.vmem [#allocation3], 28
        %2508 = vst.msk [vmem:[%s2507] ss:$8 sm:$0x7] %vm2411, %v2506
        %2509 = vst.msk [vmem:[%s2507] ss:$8 sm:$0x0] %vm2411, %v2506
        %s2510 = scalar_lea.vmem [#allocation2], 74
        %v2511 = vld [vmem:[%s2510] ss:$8 sm:$0x7]
        %s2512 = scalar_lea.vmem [#allocation2], 75
        %v2513 = vld [vmem:[%s2512] ss:$8 sm:$0x7]
        %v2514 = vmax.f32 %v2511, %v2513
        %s2515 = scalar_lea.vmem [#allocation3], 29
        %2516 = vst.msk [vmem:[%s2515] ss:$8 sm:$0x7] %vm2411, %v2514
        %2517 = vst.msk [vmem:[%s2515] ss:$8 sm:$0x0] %vm2411, %v2514
        %s2518 = scalar_lea.vmem [#allocation2], 76
        %v2519 = vld [vmem:[%s2518] ss:$8 sm:$0x7]
        %s2520 = scalar_lea.vmem [#allocation2], 77
        %v2521 = vld [vmem:[%s2520] ss:$8 sm:$0x7]
        %v2522 = vmax.f32 %v2519, %v2521
        %s2523 = scalar_lea.vmem [#allocation3], 30
        %2524 = vst.msk [vmem:[%s2523] ss:$8 sm:$0x7] %vm2411, %v2522
        %2525 = vst.msk [vmem:[%s2523] ss:$8 sm:$0x0] %vm2411, %v2522
        %v2526 = vld [vmem:[#allocation3] sm:$0xff]
        %v2527 = vld [vmem:[#allocation3 + $0x8] sm:$0xff]
        %v2528 = vld [vmem:[#allocation3 + $0x10] sm:$0xff]
        %v2529 = vld [vmem:[#allocation3 + $0x18] sm:$0x7f]
        %v2530 = vld [vmem:[#allocation3 + $0x20] sm:$0x7f]
        %v2531 = vld [vmem:[#allocation3 + $0x28] sm:$0x7f]
        %v2532 = vld [vmem:[%s3] sm:$0xff]
        %v2533 = vld [vmem:[%s3 + $0x8] sm:$0xff]
        %v2534 = vld [vmem:[%s3 + $0x10] sm:$0xff]
        %v2535 = vld [vmem:[%s3 + $0x18] sm:$0xff]
        %v2536 = vld [vmem:[%s3 + $0x20] sm:$0xff]
        %v2537 = vld [vmem:[%s3 + $0x28] sm:$0xff]
        %v2538 = vld [vmem:[%s3 + $0x30] sm:$0xff]
        %v2539 = vld [vmem:[%s3 + $0x38] sm:$0xff]
        %v2540 = vld [vmem:[%s3 + $0x40] sm:$0xff]
        %v2541 = vld [vmem:[%s3 + $0x48] sm:$0xff]
        %v2542 = vld [vmem:[%s3 + $0x50] sm:$0xff]
        %v2543 = vld [vmem:[%s3 + $0x58] sm:$0xff]
        %v2544 = vld [vmem:[%s3 + $0x60] sm:$0xff]
        %v2545 = vld [vmem:[%s3 + $0x68] sm:$0xff]
        %v2546 = vld [vmem:[%s3 + $0x70] sm:$0xff]
        %v2547 = vld [vmem:[%s3 + $0x78] sm:$0xff]
        %v2548 = vld [vmem:[%s3 + $0x80] sm:$0xff]
        %v2549 = vld [vmem:[%s3 + $0x88] sm:$0xff]
        %v2550 = vld [vmem:[%s3 + $0x90] sm:$0xff]
        %v2551 = vld [vmem:[%s3 + $0x98] sm:$0xff]
        %v2552 = vld [vmem:[%s3 + $0xa0] sm:$0xff]
        %v2553 = vld [vmem:[%s3 + $0xa8] sm:$0xff]
        %v2554 = vld [vmem:[%s3 + $0xb0] sm:$0xff]
        %v2555 = vld [vmem:[%s3 + $0xb8] sm:$0xff]
        %v2556 = vld [vmem:[%s3 + $0xc0] sm:$0xff]
        %v2557 = vld [vmem:[%s3 + $0xc8] sm:$0xff]
        %v2558 = vld [vmem:[%s3 + $0xd0] sm:$0xff]
        %v2559 = vld [vmem:[%s3 + $0xd8] sm:$0xff]
        %v2560 = vld [vmem:[%s3 + $0xe0] sm:$0xff]
        %v2561 = vld [vmem:[%s3 + $0xe8] sm:$0xff]
        %v2562 = vld [vmem:[%s3 + $0xf0] sm:$0xff]
        %v2563 = vld [vmem:[%s3 + $0xf8] sm:$0xff]
        %v2564 = vld [vmem:[%s3 + $0x100] sm:$0xff]
        %v2565 = vld [vmem:[%s3 + $0x108] sm:$0xff]
        %v2566 = vld [vmem:[%s3 + $0x110] sm:$0xff]
        %v2567 = vld [vmem:[%s3 + $0x118] sm:$0xff]
        %v2568 = vld [vmem:[%s3 + $0x120] sm:$0xff]
        %v2569 = vld [vmem:[%s3 + $0x128] sm:$0xff]
        %v2570 = vld [vmem:[%s3 + $0x130] sm:$0xff]
        %v2571 = vld [vmem:[%s3 + $0x138] sm:$0xff]
        %v2572 = vld [vmem:[%s3 + $0x140] sm:$0xff]
        %v2573 = vld [vmem:[%s3 + $0x148] sm:$0xff]
        %v2574 = vld [vmem:[%s3 + $0x150] sm:$0xff]
        %v2575 = vld [vmem:[%s3 + $0x158] sm:$0xff]
        %v2576 = vld [vmem:[%s3 + $0x160] sm:$0xff]
        %v2577 = vld [vmem:[%s3 + $0x168] sm:$0xff]
        %v2578 = vld [vmem:[%s3 + $0x170] sm:$0xff]
        %v2579 = vld [vmem:[%s3 + $0x178] sm:$0xff]
        %v2580 = vld [vmem:[%s3 + $0x180] sm:$0xff]
        %v2581 = vld [vmem:[%s3 + $0x188] sm:$0xff]
        %v2582 = vld [vmem:[%s3 + $0x190] sm:$0xff]
        %v2583 = vld [vmem:[%s3 + $0x198] sm:$0xff]
        %v2584 = vld [vmem:[%s3 + $0x1a0] sm:$0xff]
        %v2585 = vld [vmem:[%s3 + $0x1a8] sm:$0xff]
        %v2586 = vld [vmem:[%s3 + $0x1b0] sm:$0xff]
        %v2587 = vld [vmem:[%s3 + $0x1b8] sm:$0xff]
        %v2588 = vld [vmem:[%s3 + $0x1c0] sm:$0xff]
        %v2589 = vld [vmem:[%s3 + $0x1c8] sm:$0xff]
        %v2590 = vld [vmem:[%s3 + $0x1d0] sm:$0xff]
        %v2591 = vld [vmem:[%s3 + $0x1d8] sm:$0xff]
        %v2592 = vld [vmem:[%s3 + $0x1e0] sm:$0xff]
        %v2593 = vld [vmem:[%s3 + $0x1e8] sm:$0xff]
        %v2594 = vld [vmem:[%s3 + $0x1f0] sm:$0xff]
        %v2595 = vld [vmem:[%s3 + $0x1f8] sm:$0xff]
        %v2596 = vld [vmem:[%s3 + $0x200] sm:$0xff]
        %v2597 = vld [vmem:[%s3 + $0x208] sm:$0xff]
        %v2598 = vld [vmem:[%s3 + $0x210] sm:$0xff]
        %v2599 = vld [vmem:[%s3 + $0x218] sm:$0xff]
        %v2600 = vld [vmem:[%s3 + $0x220] sm:$0xff]
        %v2601 = vld [vmem:[%s3 + $0x228] sm:$0xff]
        %v2602 = vld [vmem:[%s3 + $0x230] sm:$0xff]
        %v2603 = vld [vmem:[%s3 + $0x238] sm:$0xff]
        %v2604 = vld [vmem:[%s3 + $0x240] sm:$0xff]
        %v2605 = vld [vmem:[%s3 + $0x248] sm:$0xff]
        %v2606 = vld [vmem:[%s3 + $0x250] sm:$0xff]
        %v2607 = vld [vmem:[%s3 + $0x258] sm:$0xff]
        %v2608 = vld [vmem:[%s3 + $0x260] sm:$0xff]
        %v2609 = vld [vmem:[%s3 + $0x268] sm:$0xff]
        %v2610 = vld [vmem:[%s3 + $0x270] sm:$0xff]
        %v2611 = vld [vmem:[%s3 + $0x278] sm:$0xff]
        %v2612 = vld [vmem:[%s3 + $0x280] sm:$0xff]
        %v2613 = vld [vmem:[%s3 + $0x288] sm:$0xff]
        %v2614 = vld [vmem:[%s3 + $0x290] sm:$0xff]
        %v2615 = vld [vmem:[%s3 + $0x298] sm:$0xff]
        %v2616 = vld [vmem:[%s3 + $0x2a0] sm:$0xff]
        %v2617 = vld [vmem:[%s3 + $0x2a8] sm:$0xff]
        %v2618 = vld [vmem:[%s3 + $0x2b0] sm:$0xff]
        %v2619 = vld [vmem:[%s3 + $0x2b8] sm:$0xff]
        %v2620 = vld [vmem:[%s3 + $0x2c0] sm:$0xff]
        %v2621 = vld [vmem:[%s3 + $0x2c8] sm:$0xff]
        %v2623 = vsel %vm2392, %v2528, 0
        %v2626 = vsel %vm2392, %v2531, 0
        %2628 = vmatprep.subr.mxu0 %v2563
        %2629 = vmatpush1.msra.mxu0 %v2562
        %2630 = vmatprep.subr.mxu0 %v2561
        %2631 = vmatpush1.msra.mxu0 %v2560
        %2632 = vmatprep.subr.mxu0 %v2559
        %2633 = vmatpush1.msra.mxu0 %v2558
        %2634 = vmatprep.subr.mxu0 %v2557
        %2635 = vmatpush1.msra.mxu0 %v2556
        %2636 = vmatprep.subr.mxu0 %v2555
        %2637 = vmatpush1.msra.mxu0 %v2554
        %2638 = vmatprep.subr.mxu0 %v2553
        %2639 = vmatpush1.msra.mxu0 %v2552
        %2640 = vmatprep.subr.mxu0 %v2551
        %2641 = vmatpush1.msra.mxu0 %v2550
        %2642 = vmatprep.subr.mxu0 %v2549
        %2643 = vmatpush1.msra.mxu0 %v2548
        %2644 = vmatprep.subr.mxu0 %v2547
        %2645 = vmatpush1.msra.mxu0 %v2546
        %2646 = vmatprep.subr.mxu0 %v2545
        %2647 = vmatpush1.msra.mxu0 %v2544
        %2648 = vmatprep.subr.mxu0 %v2543
        %2649 = vmatpush1.msra.mxu0 %v2542
        %2650 = vmatprep.subr.mxu0 %v2541
        %2651 = vmatpush1.msra.mxu0 %v2540
        %2652 = vmatprep.subr.mxu0 %v2539
        %2653 = vmatpush1.msra.mxu0 %v2538
        %2654 = vmatprep.subr.mxu0 %v2537
        %2655 = vmatpush1.msra.mxu0 %v2536
        %2656 = vmatprep.subr.mxu0 %v2535
        %2657 = vmatpush1.msra.mxu0 %v2534
        %2658 = vmatprep.subr.mxu0 %v2533
        %2659 = vmatpush1.msra.mxu0 %v2532
        %2660 = vmatprep.subr.mxu0 %v2595
        %2661 = vmatpush2.msra.mxu0 %v2594
        %2662 = vmatprep.subr.mxu0 %v2593
        %2663 = vmatpush2.msra.mxu0 %v2592
        %2664 = vmatprep.subr.mxu0 %v2591
        %2665 = vmatpush2.msra.mxu0 %v2590
        %2666 = vmatprep.subr.mxu0 %v2589
        %2667 = vmatpush2.msra.mxu0 %v2588
        %2668 = vmatprep.subr.mxu0 %v2587
        %2669 = vmatpush2.msra.mxu0 %v2586
        %2670 = vmatprep.subr.mxu0 %v2585
        %2671 = vmatpush2.msra.mxu0 %v2584
        %2672 = vmatprep.subr.mxu0 %v2583
        %2673 = vmatpush2.msra.mxu0 %v2582
        %2674 = vmatprep.subr.mxu0 %v2581
        %2675 = vmatpush2.msra.mxu0 %v2580
        %2676 = vmatprep.subr.mxu0 %v2579
        %2677 = vmatpush2.msra.mxu0 %v2578
        %2678 = vmatprep.subr.mxu0 %v2577
        %2679 = vmatpush2.msra.mxu0 %v2576
        %2680 = vmatprep.subr.mxu0 %v2575
        %2681 = vmatpush2.msra.mxu0 %v2574
        %2682 = vmatprep.subr.mxu0 %v2573
        %2683 = vmatpush2.msra.mxu0 %v2572
        %2684 = vmatprep.subr.mxu0 %v2571
        %2685 = vmatpush2.msra.mxu0 %v2570
        %2686 = vmatprep.subr.mxu0 %v2569
        %2687 = vmatpush2.msra.mxu0 %v2568
        %2688 = vmatprep.subr.mxu0 %v2567
        %2689 = vmatpush2.msra.mxu0 %v2566
        %2690 = vmatprep.subr.mxu0 %v2565
        %2691 = vmatpush2.msra.mxu0 %v2564
        %2692 = vmatprep.mubr.f32.mxu0 %v2527
        %2693 = vmatmul.mubr.f32.gmra.mxu0 %v2526
        %v2694 = vpop.f32.mrf.mxu0
        %v2695 = vadd.f32 0.0, %v2694
        %v2696 = vpop.f32.mrf.mxu0
        %v2697 = vadd.f32 0.0, %v2696
        %2698 = vmatprep.mubr.f32.mxu0 %v2530
        %2699 = vmatmul.mubr.f32.gmra.mxu0 %v2529
        %v2700 = vpop.f32.mrf.mxu0
        %v2701 = vadd.f32 0.0, %v2700
        %v2702 = vpop.f32.mrf.mxu0
        %v2703 = vadd.f32 0.0, %v2702
        %2704 = vdwg.mxu0
        %2705 = vmatprep.subr.mxu0 0.0
        %2706 = vmatpush1.msra.mxu0 0.0
        %2707 = vmatprep.subr.mxu0 0.0
        %2708 = vmatpush1.msra.mxu0 0.0
        %2709 = vmatprep.subr.mxu0 0.0
        %2710 = vmatpush1.msra.mxu0 0.0
        %2711 = vmatprep.subr.mxu0 %v2621
        %2712 = vmatpush1.msra.mxu0 %v2620
        %2713 = vmatprep.subr.mxu0 %v2619
        %2714 = vmatpush1.msra.mxu0 %v2618
        %2715 = vmatprep.subr.mxu0 %v2617
        %2716 = vmatpush1.msra.mxu0 %v2616
        %2717 = vmatprep.subr.mxu0 %v2615
        %2718 = vmatpush1.msra.mxu0 %v2614
        %2719 = vmatprep.subr.mxu0 %v2613
        %2720 = vmatpush1.msra.mxu0 %v2612
        %2721 = vmatprep.subr.mxu0 %v2611
        %2722 = vmatpush1.msra.mxu0 %v2610
        %2723 = vmatprep.subr.mxu0 %v2609
        %2724 = vmatpush1.msra.mxu0 %v2608
        %2725 = vmatprep.subr.mxu0 %v2607
        %2726 = vmatpush1.msra.mxu0 %v2606
        %2727 = vmatprep.subr.mxu0 %v2605
        %2728 = vmatpush1.msra.mxu0 %v2604
        %2729 = vmatprep.subr.mxu0 %v2603
        %2730 = vmatpush1.msra.mxu0 %v2602
        %2731 = vmatprep.subr.mxu0 %v2601
        %2732 = vmatpush1.msra.mxu0 %v2600
        %2733 = vmatprep.subr.mxu0 %v2599
        %2734 = vmatpush1.msra.mxu0 %v2598
        %2735 = vmatprep.subr.mxu0 %v2597
        %2736 = vmatpush1.msra.mxu0 %v2596
        %2737 = vmatprep.subr.mxu0 0.0
        %2738 = vmatpush2.msra.mxu0 0.0
        %2739 = vmatprep.subr.mxu0 0.0
        %2740 = vmatpush2.msra.mxu0 0.0
        %2741 = vmatprep.subr.mxu0 0.0
        %2742 = vmatpush2.msra.mxu0 0.0
        %2743 = vmatprep.subr.mxu0 0.0
        %2744 = vmatpush2.msra.mxu0 0.0
        %2745 = vmatprep.subr.mxu0 0.0
        %2746 = vmatpush2.msra.mxu0 0.0
        %2747 = vmatprep.subr.mxu0 0.0
        %2748 = vmatpush2.msra.mxu0 0.0
        %2749 = vmatprep.subr.mxu0 0.0
        %2750 = vmatpush2.msra.mxu0 0.0
        %2751 = vmatprep.subr.mxu0 0.0
        %2752 = vmatpush2.msra.mxu0 0.0
        %2753 = vmatprep.subr.mxu0 0.0
        %2754 = vmatpush2.msra.mxu0 0.0
        %2755 = vmatprep.subr.mxu0 0.0
        %2756 = vmatpush2.msra.mxu0 0.0
        %2757 = vmatprep.subr.mxu0 0.0
        %2758 = vmatpush2.msra.mxu0 0.0
        %2759 = vmatprep.subr.mxu0 0.0
        %2760 = vmatpush2.msra.mxu0 0.0
        %2761 = vmatprep.subr.mxu0 0.0
        %2762 = vmatpush2.msra.mxu0 0.0
        %2763 = vmatprep.subr.mxu0 0.0
        %2764 = vmatpush2.msra.mxu0 0.0
        %2765 = vmatprep.subr.mxu0 0.0
        %2766 = vmatpush2.msra.mxu0 0.0
        %2767 = vmatprep.subr.mxu0 0.0
        %2768 = vmatpush2.msra.mxu0 0.0
        %2769 = vmatprep.mubr.f32.mxu0 0.0
        %2770 = vmatmul.mubr.f32.gmra.mxu0 %v2623
        %v2771 = vpop.f32.mrf.mxu0
        %v2772 = vadd.f32 %v2695, %v2771
        %v2773 = vpop.f32.mrf.mxu0
        %v2774 = vadd.f32 %v2697, %v2773
        %2775 = vmatprep.mubr.f32.mxu0 0.0
        %2776 = vmatmul.mubr.f32.gmra.mxu0 %v2626
        %v2777 = vpop.f32.mrf.mxu0
        %v2778 = vadd.f32 %v2701, %v2777
        %v2779 = vpop.f32.mrf.mxu0
        %v2780 = vadd.f32 %v2703, %v2779
        %2781 = vdwg.mxu0
        %v2782 = vld [vmem:[%s4] sm:$0xff]
        %v2783 = vld [vmem:[%s4 + $0x8] sm:$0xff]
        %v2784 = vld [vmem:[%s4 + $0x10] sm:$0xff]
        %v2785 = vld [vmem:[%s4 + $0x18] sm:$0xff]
        %v2786 = vld [vmem:[%s4 + $0x20] sm:$0xff]
        %v2787 = vld [vmem:[%s4 + $0x28] sm:$0xff]
        %v2788 = vld [vmem:[%s4 + $0x30] sm:$0xff]
        %v2789 = vld [vmem:[%s4 + $0x38] sm:$0xff]
        %v2790 = vld [vmem:[%s4 + $0x40] sm:$0xff]
        %v2791 = vld [vmem:[%s4 + $0x48] sm:$0xff]
        %v2792 = vld [vmem:[%s4 + $0x50] sm:$0xff]
        %v2793 = vld [vmem:[%s4 + $0x58] sm:$0xff]
        %v2794 = vld [vmem:[%s4 + $0x60] sm:$0xff]
        %v2795 = vld [vmem:[%s4 + $0x68] sm:$0xff]
        %v2796 = vld [vmem:[%s4 + $0x70] sm:$0xff]
        %v2797 = vld [vmem:[%s4 + $0x78] sm:$0xff]
        %v2798 = vld [vmem:[%s4 + $0x80] sm:$0xff]
        %v2799 = vld [vmem:[%s4 + $0x88] sm:$0xff]
        %v2800 = vld [vmem:[%s4 + $0x90] sm:$0xff]
        %v2801 = vld [vmem:[%s4 + $0x98] sm:$0xff]
        %v2802 = vld [vmem:[%s4 + $0xa0] sm:$0xff]
        %v2803 = vld [vmem:[%s4 + $0xa8] sm:$0xff]
        %v2804 = vld [vmem:[%s4 + $0xb0] sm:$0xff]
        %v2805 = vld [vmem:[%s4 + $0xb8] sm:$0xff]
        %v2806 = vld [vmem:[%s4 + $0xc0] sm:$0xff]
        %v2807 = vld [vmem:[%s4 + $0xc8] sm:$0xff]
        %v2808 = vld [vmem:[%s4 + $0xd0] sm:$0xff]
        %v2809 = vld [vmem:[%s4 + $0xd8] sm:$0xff]
        %v2810 = vld [vmem:[%s4 + $0xe0] sm:$0xff]
        %v2811 = vld [vmem:[%s4 + $0xe8] sm:$0xff]
        %v2812 = vld [vmem:[%s4 + $0xf0] sm:$0xff]
        %v2813 = vld [vmem:[%s4 + $0xf8] sm:$0xff]
        %v2814 = vld [vmem:[%s4 + $0x100] sm:$0xff]
        %v2815 = vld [vmem:[%s4 + $0x108] sm:$0xff]
        %v2816 = vld [vmem:[%s4 + $0x110] sm:$0xff]
        %v2817 = vld [vmem:[%s4 + $0x118] sm:$0xff]
        %v2818 = vld [vmem:[%s4 + $0x120] sm:$0xff]
        %v2819 = vld [vmem:[%s4 + $0x128] sm:$0xff]
        %v2820 = vld [vmem:[%s4 + $0x130] sm:$0xff]
        %v2821 = vld [vmem:[%s4 + $0x138] sm:$0xff]
        %v2822 = vld [vmem:[%s4 + $0x140] sm:$0xff]
        %v2823 = vld [vmem:[%s4 + $0x148] sm:$0xff]
        %v2824 = vld [vmem:[%s4 + $0x150] sm:$0xff]
        %v2825 = vld [vmem:[%s4 + $0x158] sm:$0xff]
        %v2826 = vld [vmem:[%s4 + $0x160] sm:$0xff]
        %v2827 = vld [vmem:[%s4 + $0x168] sm:$0xff]
        %v2828 = vld [vmem:[%s4 + $0x170] sm:$0xff]
        %v2829 = vld [vmem:[%s4 + $0x178] sm:$0xff]
        %v2830 = vld [vmem:[%s4 + $0x180] sm:$0xff]
        %v2831 = vld [vmem:[%s4 + $0x188] sm:$0xff]
        %v2832 = vld [vmem:[%s4 + $0x190] sm:$0xff]
        %v2833 = vld [vmem:[%s4 + $0x198] sm:$0xff]
        %v2834 = vld [vmem:[%s4 + $0x1a0] sm:$0xff]
        %v2835 = vld [vmem:[%s4 + $0x1a8] sm:$0xff]
        %v2836 = vld [vmem:[%s4 + $0x1b0] sm:$0xff]
        %v2837 = vld [vmem:[%s4 + $0x1b8] sm:$0xff]
        %v2838 = vld [vmem:[%s4 + $0x1c0] sm:$0xff]
        %v2839 = vld [vmem:[%s4 + $0x1c8] sm:$0xff]
        %v2840 = vld [vmem:[%s4 + $0x1d0] sm:$0xff]
        %v2841 = vld [vmem:[%s4 + $0x1d8] sm:$0xff]
        %v2842 = vld [vmem:[%s4 + $0x1e0] sm:$0xff]
        %v2843 = vld [vmem:[%s4 + $0x1e8] sm:$0xff]
        %v2844 = vld [vmem:[%s4 + $0x1f0] sm:$0xff]
        %v2845 = vld [vmem:[%s4 + $0x1f8] sm:$0xff]
        %v2846 = vld [vmem:[%s4 + $0x200] sm:$0xff]
        %v2847 = vld [vmem:[%s4 + $0x208] sm:$0xff]
        %v2848 = vld [vmem:[%s4 + $0x210] sm:$0xff]
        %v2849 = vld [vmem:[%s4 + $0x218] sm:$0xff]
        %v2850 = vld [vmem:[%s4 + $0x220] sm:$0xff]
        %v2851 = vld [vmem:[%s4 + $0x228] sm:$0xff]
        %v2852 = vld [vmem:[%s4 + $0x230] sm:$0xff]
        %v2853 = vld [vmem:[%s4 + $0x238] sm:$0xff]
        %v2854 = vld [vmem:[%s4 + $0x240] sm:$0xff]
        %v2855 = vld [vmem:[%s4 + $0x248] sm:$0xff]
        %v2856 = vld [vmem:[%s4 + $0x250] sm:$0xff]
        %v2857 = vld [vmem:[%s4 + $0x258] sm:$0xff]
        %v2858 = vld [vmem:[%s4 + $0x260] sm:$0xff]
        %v2859 = vld [vmem:[%s4 + $0x268] sm:$0xff]
        %v2860 = vld [vmem:[%s4 + $0x270] sm:$0xff]
        %v2861 = vld [vmem:[%s4 + $0x278] sm:$0xff]
        %v2862 = vld [vmem:[%s4 + $0x280] sm:$0xff]
        %v2863 = vld [vmem:[%s4 + $0x288] sm:$0xff]
        %v2864 = vld [vmem:[%s4 + $0x290] sm:$0xff]
        %v2865 = vld [vmem:[%s4 + $0x298] sm:$0xff]
        %v2866 = vld [vmem:[%s4 + $0x2a0] sm:$0xff]
        %v2867 = vld [vmem:[%s4 + $0x2a8] sm:$0xff]
        %v2868 = vld [vmem:[%s4 + $0x2b0] sm:$0xff]
        %v2869 = vld [vmem:[%s4 + $0x2b8] sm:$0xff]
        %v2870 = vld [vmem:[%s4 + $0x2c0] sm:$0xff]
        %v2871 = vld [vmem:[%s4 + $0x2c8] sm:$0xff]
        %2872 = vmatprep.subr.mxu0 %v2813
        %2873 = vmatpush1.msra.mxu0 %v2812
        %2874 = vmatprep.subr.mxu0 %v2811
        %2875 = vmatpush1.msra.mxu0 %v2810
        %2876 = vmatprep.subr.mxu0 %v2809
        %2877 = vmatpush1.msra.mxu0 %v2808
        %2878 = vmatprep.subr.mxu0 %v2807
        %2879 = vmatpush1.msra.mxu0 %v2806
        %2880 = vmatprep.subr.mxu0 %v2805
        %2881 = vmatpush1.msra.mxu0 %v2804
        %2882 = vmatprep.subr.mxu0 %v2803
        %2883 = vmatpush1.msra.mxu0 %v2802
        %2884 = vmatprep.subr.mxu0 %v2801
        %2885 = vmatpush1.msra.mxu0 %v2800
        %2886 = vmatprep.subr.mxu0 %v2799
        %2887 = vmatpush1.msra.mxu0 %v2798
        %2888 = vmatprep.subr.mxu0 %v2797
        %2889 = vmatpush1.msra.mxu0 %v2796
        %2890 = vmatprep.subr.mxu0 %v2795
        %2891 = vmatpush1.msra.mxu0 %v2794
        %2892 = vmatprep.subr.mxu0 %v2793
        %2893 = vmatpush1.msra.mxu0 %v2792
        %2894 = vmatprep.subr.mxu0 %v2791
        %2895 = vmatpush1.msra.mxu0 %v2790
        %2896 = vmatprep.subr.mxu0 %v2789
        %2897 = vmatpush1.msra.mxu0 %v2788
        %2898 = vmatprep.subr.mxu0 %v2787
        %2899 = vmatpush1.msra.mxu0 %v2786
        %2900 = vmatprep.subr.mxu0 %v2785
        %2901 = vmatpush1.msra.mxu0 %v2784
        %2902 = vmatprep.subr.mxu0 %v2783
        %2903 = vmatpush1.msra.mxu0 %v2782
        %2904 = vmatprep.subr.mxu0 %v2845
        %2905 = vmatpush2.msra.mxu0 %v2844
        %2906 = vmatprep.subr.mxu0 %v2843
        %2907 = vmatpush2.msra.mxu0 %v2842
        %2908 = vmatprep.subr.mxu0 %v2841
        %2909 = vmatpush2.msra.mxu0 %v2840
        %2910 = vmatprep.subr.mxu0 %v2839
        %2911 = vmatpush2.msra.mxu0 %v2838
        %2912 = vmatprep.subr.mxu0 %v2837
        %2913 = vmatpush2.msra.mxu0 %v2836
        %2914 = vmatprep.subr.mxu0 %v2835
        %2915 = vmatpush2.msra.mxu0 %v2834
        %2916 = vmatprep.subr.mxu0 %v2833
        %2917 = vmatpush2.msra.mxu0 %v2832
        %2918 = vmatprep.subr.mxu0 %v2831
        %2919 = vmatpush2.msra.mxu0 %v2830
        %2920 = vmatprep.subr.mxu0 %v2829
        %2921 = vmatpush2.msra.mxu0 %v2828
        %2922 = vmatprep.subr.mxu0 %v2827
        %2923 = vmatpush2.msra.mxu0 %v2826
        %2924 = vmatprep.subr.mxu0 %v2825
        %2925 = vmatpush2.msra.mxu0 %v2824
        %2926 = vmatprep.subr.mxu0 %v2823
        %2927 = vmatpush2.msra.mxu0 %v2822
        %2928 = vmatprep.subr.mxu0 %v2821
        %2929 = vmatpush2.msra.mxu0 %v2820
        %2930 = vmatprep.subr.mxu0 %v2819
        %2931 = vmatpush2.msra.mxu0 %v2818
        %2932 = vmatprep.subr.mxu0 %v2817
        %2933 = vmatpush2.msra.mxu0 %v2816
        %2934 = vmatprep.subr.mxu0 %v2815
        %2935 = vmatpush2.msra.mxu0 %v2814
        %2936 = vmatprep.mubr.f32.mxu0 %v2527
        %2937 = vmatmul.mubr.f32.gmra.mxu0 %v2526
        %v2938 = vpop.f32.mrf.mxu0
        %v2939 = vadd.f32 0.0, %v2938
        %v2940 = vpop.f32.mrf.mxu0
        %v2941 = vadd.f32 0.0, %v2940
        %2942 = vmatprep.mubr.f32.mxu0 %v2530
        %2943 = vmatmul.mubr.f32.gmra.mxu0 %v2529
        %v2944 = vpop.f32.mrf.mxu0
        %v2945 = vadd.f32 0.0, %v2944
        %v2946 = vpop.f32.mrf.mxu0
        %v2947 = vadd.f32 0.0, %v2946
        %2948 = vdwg.mxu0
        %2949 = vmatprep.subr.mxu0 0.0
        %2950 = vmatpush1.msra.mxu0 0.0
        %2951 = vmatprep.subr.mxu0 0.0
        %2952 = vmatpush1.msra.mxu0 0.0
        %2953 = vmatprep.subr.mxu0 0.0
        %2954 = vmatpush1.msra.mxu0 0.0
        %2955 = vmatprep.subr.mxu0 %v2871
        %2956 = vmatpush1.msra.mxu0 %v2870
        %2957 = vmatprep.subr.mxu0 %v2869
        %2958 = vmatpush1.msra.mxu0 %v2868
        %2959 = vmatprep.subr.mxu0 %v2867
        %2960 = vmatpush1.msra.mxu0 %v2866
        %2961 = vmatprep.subr.mxu0 %v2865
        %2962 = vmatpush1.msra.mxu0 %v2864
        %2963 = vmatprep.subr.mxu0 %v2863
        %2964 = vmatpush1.msra.mxu0 %v2862
        %2965 = vmatprep.subr.mxu0 %v2861
        %2966 = vmatpush1.msra.mxu0 %v2860
        %2967 = vmatprep.subr.mxu0 %v2859
        %2968 = vmatpush1.msra.mxu0 %v2858
        %2969 = vmatprep.subr.mxu0 %v2857
        %2970 = vmatpush1.msra.mxu0 %v2856
        %2971 = vmatprep.subr.mxu0 %v2855
        %2972 = vmatpush1.msra.mxu0 %v2854
        %2973 = vmatprep.subr.mxu0 %v2853
        %2974 = vmatpush1.msra.mxu0 %v2852
        %2975 = vmatprep.subr.mxu0 %v2851
        %2976 = vmatpush1.msra.mxu0 %v2850
        %2977 = vmatprep.subr.mxu0 %v2849
        %2978 = vmatpush1.msra.mxu0 %v2848
        %2979 = vmatprep.subr.mxu0 %v2847
        %2980 = vmatpush1.msra.mxu0 %v2846
        %2981 = vmatprep.subr.mxu0 0.0
        %2982 = vmatpush2.msra.mxu0 0.0
        %2983 = vmatprep.subr.mxu0 0.0
        %2984 = vmatpush2.msra.mxu0 0.0
        %2985 = vmatprep.subr.mxu0 0.0
        %2986 = vmatpush2.msra.mxu0 0.0
        %2987 = vmatprep.subr.mxu0 0.0
        %2988 = vmatpush2.msra.mxu0 0.0
        %2989 = vmatprep.subr.mxu0 0.0
        %2990 = vmatpush2.msra.mxu0 0.0
        %2991 = vmatprep.subr.mxu0 0.0
        %2992 = vmatpush2.msra.mxu0 0.0
        %2993 = vmatprep.subr.mxu0 0.0
        %2994 = vmatpush2.msra.mxu0 0.0
        %2995 = vmatprep.subr.mxu0 0.0
        %2996 = vmatpush2.msra.mxu0 0.0
        %2997 = vmatprep.subr.mxu0 0.0
        %2998 = vmatpush2.msra.mxu0 0.0
        %2999 = vmatprep.subr.mxu0 0.0
        %3000 = vmatpush2.msra.mxu0 0.0
        %3001 = vmatprep.subr.mxu0 0.0
        %3002 = vmatpush2.msra.mxu0 0.0
        %3003 = vmatprep.subr.mxu0 0.0
        %3004 = vmatpush2.msra.mxu0 0.0
        %3005 = vmatprep.subr.mxu0 0.0
        %3006 = vmatpush2.msra.mxu0 0.0
        %3007 = vmatprep.subr.mxu0 0.0
        %3008 = vmatpush2.msra.mxu0 0.0
        %3009 = vmatprep.subr.mxu0 0.0
        %3010 = vmatpush2.msra.mxu0 0.0
        %3011 = vmatprep.subr.mxu0 0.0
        %3012 = vmatpush2.msra.mxu0 0.0
        %3013 = vmatprep.mubr.f32.mxu0 0.0
        %3014 = vmatmul.mubr.f32.gmra.mxu0 %v2623
        %v3015 = vpop.f32.mrf.mxu0
        %v3016 = vadd.f32 %v2939, %v3015
        %v3017 = vpop.f32.mrf.mxu0
        %v3018 = vadd.f32 %v2941, %v3017
        %3019 = vmatprep.mubr.f32.mxu0 0.0
        %3020 = vmatmul.mubr.f32.gmra.mxu0 %v2626
        %v3021 = vpop.f32.mrf.mxu0
        %v3022 = vadd.f32 %v2945, %v3021
        %v3023 = vpop.f32.mrf.mxu0
        %v3024 = vadd.f32 %v2947, %v3023
        %3025 = vdwg.mxu0
        %v3026 = vmax.f32 %v2772, %v3016
        %v3027 = vmax.f32 %v2774, %v3018
        %v3028 = vmax.f32 %v2778, %v3022
        %v3029 = vmax.f32 %v2780, %v3024
        %3030 = vst [vmem:[#allocation4] sm:$0xff] %v3026
        %vm3031 = vcmask 424960
        %3032 = vst.msk [vmem:[#allocation4 + $0x8] sm:$0xff] %vm3031, %v3027
        %3033 = vst [vmem:[#allocation4 + $0x10] sm:$0x7f] %v3028
        %vm3034 = vcmask 423936
        %3035 = vst.msk [vmem:[#allocation4 + $0x18] sm:$0x7f] %vm3034, %v3029
        %v3036 = vld [vmem:[#allocation4] sm:$0xff]
        %v3037 = vld [vmem:[#allocation4 + $0x8] sm:$0xff]
        %v3038 = vld [vmem:[#allocation4 + $0x10] sm:$0x1f]
        %v3039 = vld [vmem:[#allocation4 + $0x18] sm:$0x1f]
        %v3040 = vld [vmem:[%s5] sm:$0xff]
        %v3041 = vld [vmem:[%s5 + $0x8] sm:$0xff]
        %v3042 = vld [vmem:[%s5 + $0x10] sm:$0xff]
        %v3043 = vld [vmem:[%s5 + $0x18] sm:$0xff]
        %v3044 = vld [vmem:[%s5 + $0x20] sm:$0xff]
        %v3045 = vld [vmem:[%s5 + $0x28] sm:$0xff]
        %v3046 = vld [vmem:[%s5 + $0x30] sm:$0xff]
        %v3047 = vld [vmem:[%s5 + $0x38] sm:$0xff]
        %v3048 = vld [vmem:[%s5 + $0x40] sm:$0xff]
        %v3049 = vld [vmem:[%s5 + $0x48] sm:$0xff]
        %v3050 = vld [vmem:[%s5 + $0x50] sm:$0xff]
        %v3051 = vld [vmem:[%s5 + $0x58] sm:$0xff]
        %v3052 = vld [vmem:[%s5 + $0x60] sm:$0xff]
        %v3053 = vld [vmem:[%s5 + $0x68] sm:$0xff]
        %v3054 = vld [vmem:[%s5 + $0x70] sm:$0xff]
        %v3055 = vld [vmem:[%s5 + $0x78] sm:$0xff]
        %v3056 = vld [vmem:[%s5 + $0x80] sm:$0xff]
        %v3057 = vld [vmem:[%s5 + $0x88] sm:$0xff]
        %v3058 = vld [vmem:[%s5 + $0x90] sm:$0xff]
        %v3059 = vld [vmem:[%s5 + $0x98] sm:$0xff]
        %v3060 = vld [vmem:[%s5 + $0xa0] sm:$0xff]
        %v3061 = vld [vmem:[%s5 + $0xa8] sm:$0xff]
        %v3062 = vld [vmem:[%s5 + $0xb0] sm:$0xff]
        %v3063 = vld [vmem:[%s5 + $0xb8] sm:$0xff]
        %v3064 = vld [vmem:[%s5 + $0xc0] sm:$0xff]
        %v3065 = vld [vmem:[%s5 + $0xc8] sm:$0xff]
        %v3066 = vld [vmem:[%s5 + $0xd0] sm:$0xff]
        %v3067 = vld [vmem:[%s5 + $0xd8] sm:$0xff]
        %v3068 = vld [vmem:[%s5 + $0xe0] sm:$0xff]
        %v3069 = vld [vmem:[%s5 + $0xe8] sm:$0xff]
        %v3070 = vld [vmem:[%s5 + $0xf0] sm:$0xff]
        %v3071 = vld [vmem:[%s5 + $0xf8] sm:$0xff]
        %v3072 = vld [vmem:[%s5 + $0x100] sm:$0xff]
        %v3073 = vld [vmem:[%s5 + $0x108] sm:$0xff]
        %v3074 = vld [vmem:[%s5 + $0x110] sm:$0xff]
        %v3075 = vld [vmem:[%s5 + $0x118] sm:$0xff]
        %v3076 = vld [vmem:[%s5 + $0x120] sm:$0xff]
        %v3077 = vld [vmem:[%s5 + $0x128] sm:$0xff]
        %v3078 = vld [vmem:[%s5 + $0x130] sm:$0xff]
        %v3079 = vld [vmem:[%s5 + $0x138] sm:$0xff]
        %v3080 = vld [vmem:[%s5 + $0x140] sm:$0xff]
        %v3081 = vld [vmem:[%s5 + $0x148] sm:$0xff]
        %v3082 = vld [vmem:[%s5 + $0x150] sm:$0xff]
        %v3083 = vld [vmem:[%s5 + $0x158] sm:$0xff]
        %v3084 = vld [vmem:[%s5 + $0x160] sm:$0xff]
        %v3085 = vld [vmem:[%s5 + $0x168] sm:$0xff]
        %v3086 = vld [vmem:[%s5 + $0x170] sm:$0xff]
        %v3087 = vld [vmem:[%s5 + $0x178] sm:$0xff]
        %v3088 = vld [vmem:[%s5 + $0x180] sm:$0xff]
        %v3089 = vld [vmem:[%s5 + $0x188] sm:$0xff]
        %v3090 = vld [vmem:[%s5 + $0x190] sm:$0xff]
        %v3091 = vld [vmem:[%s5 + $0x198] sm:$0xff]
        %v3092 = vld [vmem:[%s5 + $0x1a0] sm:$0xff]
        %v3093 = vld [vmem:[%s5 + $0x1a8] sm:$0xff]
        %v3094 = vld [vmem:[%s5 + $0x1b0] sm:$0xff]
        %v3095 = vld [vmem:[%s5 + $0x1b8] sm:$0xff]
        %v3096 = vld [vmem:[%s5 + $0x1c0] sm:$0xff]
        %v3097 = vld [vmem:[%s5 + $0x1c8] sm:$0xff]
        %v3098 = vld [vmem:[%s5 + $0x1d0] sm:$0xff]
        %v3099 = vld [vmem:[%s5 + $0x1d8] sm:$0xff]
        %v3100 = vld [vmem:[%s5 + $0x1e0] sm:$0xff]
        %v3101 = vld [vmem:[%s5 + $0x1e8] sm:$0xff]
        %v3102 = vld [vmem:[%s5 + $0x1f0] sm:$0xff]
        %v3103 = vld [vmem:[%s5 + $0x1f8] sm:$0xff]
        %v3104 = vld [vmem:[%s5 + $0x200] sm:$0xff]
        %v3105 = vld [vmem:[%s5 + $0x208] sm:$0xff]
        %v3106 = vld [vmem:[%s5 + $0x210] sm:$0xf]
        %v3107 = vld [vmem:[%s5 + $0x218] sm:$0xf]
        %v3108 = vld [vmem:[%s5 + $0x220] sm:$0xf]
        %v3109 = vld [vmem:[#allocation4] sm:$0xfe]
        %v3110 = vld [vmem:[#allocation4 + $0x8] sm:$0xfe]
        %v3111 = vld [vmem:[#allocation4 + $0x10] sm:$0x3f]
        %v3112 = vld [vmem:[#allocation4 + $0x18] sm:$0x3f]
        %s3113 = scalar_lea.vmem %s5, 552
        %v3114 = vld [vmem:[%s3113] sm:$0xff]
        %v3115 = vld [vmem:[%s3113 + $0x8] sm:$0xff]
        %v3116 = vld [vmem:[%s3113 + $0x10] sm:$0xff]
        %v3117 = vld [vmem:[%s3113 + $0x18] sm:$0xff]
        %v3118 = vld [vmem:[%s3113 + $0x20] sm:$0xff]
        %v3119 = vld [vmem:[%s3113 + $0x28] sm:$0xff]
        %v3120 = vld [vmem:[%s3113 + $0x30] sm:$0xff]
        %v3121 = vld [vmem:[%s3113 + $0x38] sm:$0xff]
        %v3122 = vld [vmem:[%s3113 + $0x40] sm:$0xff]
        %v3123 = vld [vmem:[%s3113 + $0x48] sm:$0xff]
        %v3124 = vld [vmem:[%s3113 + $0x50] sm:$0xff]
        %v3125 = vld [vmem:[%s3113 + $0x58] sm:$0xff]
        %v3126 = vld [vmem:[%s3113 + $0x60] sm:$0xff]
        %v3127 = vld [vmem:[%s3113 + $0x68] sm:$0xff]
        %v3128 = vld [vmem:[%s3113 + $0x70] sm:$0xff]
        %v3129 = vld [vmem:[%s3113 + $0x78] sm:$0xff]
        %v3130 = vld [vmem:[%s3113 + $0x80] sm:$0xff]
        %v3131 = vld [vmem:[%s3113 + $0x88] sm:$0xff]
        %v3132 = vld [vmem:[%s3113 + $0x90] sm:$0xff]
        %v3133 = vld [vmem:[%s3113 + $0x98] sm:$0xff]
        %v3134 = vld [vmem:[%s3113 + $0xa0] sm:$0xff]
        %v3135 = vld [vmem:[%s3113 + $0xa8] sm:$0xff]
        %v3136 = vld [vmem:[%s3113 + $0xb0] sm:$0xff]
        %v3137 = vld [vmem:[%s3113 + $0xb8] sm:$0xff]
        %v3138 = vld [vmem:[%s3113 + $0xc0] sm:$0xff]
        %v3139 = vld [vmem:[%s3113 + $0xc8] sm:$0xff]
        %v3140 = vld [vmem:[%s3113 + $0xd0] sm:$0xff]
        %v3141 = vld [vmem:[%s3113 + $0xd8] sm:$0xff]
        %v3142 = vld [vmem:[%s3113 + $0xe0] sm:$0xff]
        %v3143 = vld [vmem:[%s3113 + $0xe8] sm:$0xff]
        %v3144 = vld [vmem:[%s3113 + $0xf0] sm:$0xff]
        %v3145 = vld [vmem:[%s3113 + $0xf8] sm:$0xff]
        %v3146 = vld [vmem:[%s3113 + $0x100] sm:$0xff]
        %v3147 = vld [vmem:[%s3113 + $0x108] sm:$0xff]
        %v3148 = vld [vmem:[%s3113 + $0x110] sm:$0xff]
        %v3149 = vld [vmem:[%s3113 + $0x118] sm:$0xff]
        %v3150 = vld [vmem:[%s3113 + $0x120] sm:$0xff]
        %v3151 = vld [vmem:[%s3113 + $0x128] sm:$0xff]
        %v3152 = vld [vmem:[%s3113 + $0x130] sm:$0xff]
        %v3153 = vld [vmem:[%s3113 + $0x138] sm:$0xff]
        %v3154 = vld [vmem:[%s3113 + $0x140] sm:$0xff]
        %v3155 = vld [vmem:[%s3113 + $0x148] sm:$0xff]
        %v3156 = vld [vmem:[%s3113 + $0x150] sm:$0xff]
        %v3157 = vld [vmem:[%s3113 + $0x158] sm:$0xff]
        %v3158 = vld [vmem:[%s3113 + $0x160] sm:$0xff]
        %v3159 = vld [vmem:[%s3113 + $0x168] sm:$0xff]
        %v3160 = vld [vmem:[%s3113 + $0x170] sm:$0xff]
        %v3161 = vld [vmem:[%s3113 + $0x178] sm:$0xff]
        %v3162 = vld [vmem:[%s3113 + $0x180] sm:$0xff]
        %v3163 = vld [vmem:[%s3113 + $0x188] sm:$0xff]
        %v3164 = vld [vmem:[%s3113 + $0x190] sm:$0xff]
        %v3165 = vld [vmem:[%s3113 + $0x198] sm:$0xff]
        %v3166 = vld [vmem:[%s3113 + $0x1a0] sm:$0xff]
        %v3167 = vld [vmem:[%s3113 + $0x1a8] sm:$0xff]
        %v3168 = vld [vmem:[%s3113 + $0x1b0] sm:$0xff]
        %v3169 = vld [vmem:[%s3113 + $0x1b8] sm:$0xff]
        %v3170 = vld [vmem:[%s3113 + $0x1c0] sm:$0xff]
        %v3171 = vld [vmem:[%s3113 + $0x1c8] sm:$0xff]
        %v3172 = vld [vmem:[%s3113 + $0x1d0] sm:$0xff]
        %v3173 = vld [vmem:[%s3113 + $0x1d8] sm:$0xff]
        %v3174 = vld [vmem:[%s3113 + $0x1e0] sm:$0xff]
        %v3175 = vld [vmem:[%s3113 + $0x1e8] sm:$0xff]
        %v3176 = vld [vmem:[%s3113 + $0x1f0] sm:$0xff]
        %v3177 = vld [vmem:[%s3113 + $0x1f8] sm:$0xff]
        %v3178 = vld [vmem:[%s3113 + $0x200] sm:$0xff]
        %v3179 = vld [vmem:[%s3113 + $0x208] sm:$0xff]
        %v3180 = vld [vmem:[%s3113 + $0x210] sm:$0xf]
        %v3181 = vld [vmem:[%s3113 + $0x218] sm:$0xf]
        %v3182 = vld [vmem:[%s3113 + $0x220] sm:$0xf]
        %vm3187 = vcmask 1046528
        %v3188 = vrot.slane %v3109, 1
        %v3189 = vrot.slane %v3111, 1
        %v3190 = vsel %vm3187, %v3188, %v3189
        %v3191 = vrot.slane %v3110, 1
        %v3192 = vrot.slane %v3112, 1
        %v3193 = vsel %vm3187, %v3191, %v3192
        %v3196 = vsel %vm3031, %v3193, 0
        %v3198 = vsel %vm3031, %v3192, 0
        %vm3200 = vcmask 1043456
        %v3202 = vsel %vm3200, %v3180, 0
        %v3205 = vsel %vm3200, %v3181, 0
        %v3208 = vsel %vm3200, %v3182, 0
        %3210 = vmatprep.subr.mxu0 %v3160
        %3211 = vmatpush1.msra.mxu0 %v3159
        %3212 = vmatprep.subr.mxu0 %v3157
        %3213 = vmatpush1.msra.mxu0 %v3156
        %3214 = vmatprep.subr.mxu0 %v3154
        %3215 = vmatpush1.msra.mxu0 %v3153
        %3216 = vmatprep.subr.mxu0 %v3151
        %3217 = vmatpush1.msra.mxu0 %v3150
        %3218 = vmatprep.subr.mxu0 %v3148
        %3219 = vmatpush1.msra.mxu0 %v3147
        %3220 = vmatprep.subr.mxu0 %v3145
        %3221 = vmatpush1.msra.mxu0 %v3144
        %3222 = vmatprep.subr.mxu0 %v3142
        %3223 = vmatpush1.msra.mxu0 %v3141
        %3224 = vmatprep.subr.mxu0 %v3139
        %3225 = vmatpush1.msra.mxu0 %v3138
        %3226 = vmatprep.subr.mxu0 %v3136
        %3227 = vmatpush1.msra.mxu0 %v3135
        %3228 = vmatprep.subr.mxu0 %v3133
        %3229 = vmatpush1.msra.mxu0 %v3132
        %3230 = vmatprep.subr.mxu0 %v3130
        %3231 = vmatpush1.msra.mxu0 %v3129
        %3232 = vmatprep.subr.mxu0 %v3127
        %3233 = vmatpush1.msra.mxu0 %v3126
        %3234 = vmatprep.subr.mxu0 %v3124
        %3235 = vmatpush1.msra.mxu0 %v3123
        %3236 = vmatprep.subr.mxu0 %v3121
        %3237 = vmatpush1.msra.mxu0 %v3120
        %3238 = vmatprep.subr.mxu0 %v3118
        %3239 = vmatpush1.msra.mxu0 %v3117
        %3240 = vmatprep.subr.mxu0 %v3115
        %3241 = vmatpush1.msra.mxu0 %v3114
        %3242 = vmatprep.subr.mxu0 0.0
        %3243 = vmatpush2.msra.mxu0 0.0
        %3244 = vmatprep.subr.mxu0 0.0
        %3245 = vmatpush2.msra.mxu0 0.0
        %3246 = vmatprep.subr.mxu0 0.0
        %3247 = vmatpush2.msra.mxu0 0.0
        %3248 = vmatprep.subr.mxu0 0.0
        %3249 = vmatpush2.msra.mxu0 0.0
        %3250 = vmatprep.subr.mxu0 0.0
        %3251 = vmatpush2.msra.mxu0 0.0
        %3252 = vmatprep.subr.mxu0 0.0
        %3253 = vmatpush2.msra.mxu0 0.0
        %3254 = vmatprep.subr.mxu0 0.0
        %3255 = vmatpush2.msra.mxu0 0.0
        %3256 = vmatprep.subr.mxu0 0.0
        %3257 = vmatpush2.msra.mxu0 0.0
        %3258 = vmatprep.subr.mxu0 0.0
        %3259 = vmatpush2.msra.mxu0 0.0
        %3260 = vmatprep.subr.mxu0 %v3205
        %3261 = vmatpush2.msra.mxu0 %v3202
        %3262 = vmatprep.subr.mxu0 %v3178
        %3263 = vmatpush2.msra.mxu0 %v3177
        %3264 = vmatprep.subr.mxu0 %v3175
        %3265 = vmatpush2.msra.mxu0 %v3174
        %3266 = vmatprep.subr.mxu0 %v3172
        %3267 = vmatpush2.msra.mxu0 %v3171
        %3268 = vmatprep.subr.mxu0 %v3169
        %3269 = vmatpush2.msra.mxu0 %v3168
        %3270 = vmatprep.subr.mxu0 %v3166
        %3271 = vmatpush2.msra.mxu0 %v3165
        %3272 = vmatprep.subr.mxu0 %v3163
        %3273 = vmatpush2.msra.mxu0 %v3162
        %3274 = vmatprep.mubr.f32.mxu0 %v3196
        %3275 = vmatmul.mubr.f32.gmra.mxu0 %v3190
        %v3276 = vpop.f32.mrf.mxu0
        %v3277 = vadd.f32 0.0, %v3276
        %v3278 = vpop.f32.mrf.mxu0
        %v3279 = vadd.f32 0.0, %v3278
        %3280 = vmatprep.mubr.f32.mxu0 %v3198
        %3281 = vmatmul.mubr.f32.gmra.mxu0 %v3189
        %v3282 = vpop.f32.mrf.mxu0
        %v3283 = vadd.f32 0.0, %v3282
        %v3284 = vpop.f32.mrf.mxu0
        %v3285 = vadd.f32 0.0, %v3284
        %3286 = vdwg.mxu0
        %3287 = vmatprep.subr.mxu0 0.0
        %3288 = vmatpush1.msra.mxu0 %v3161
        %3289 = vmatprep.subr.mxu0 0.0
        %3290 = vmatpush1.msra.mxu0 %v3158
        %3291 = vmatprep.subr.mxu0 0.0
        %3292 = vmatpush1.msra.mxu0 %v3155
        %3293 = vmatprep.subr.mxu0 0.0
        %3294 = vmatpush1.msra.mxu0 %v3152
        %3295 = vmatprep.subr.mxu0 0.0
        %3296 = vmatpush1.msra.mxu0 %v3149
        %3297 = vmatprep.subr.mxu0 0.0
        %3298 = vmatpush1.msra.mxu0 %v3146
        %3299 = vmatprep.subr.mxu0 0.0
        %3300 = vmatpush1.msra.mxu0 %v3143
        %3301 = vmatprep.subr.mxu0 0.0
        %3302 = vmatpush1.msra.mxu0 %v3140
        %3303 = vmatprep.subr.mxu0 0.0
        %3304 = vmatpush1.msra.mxu0 %v3137
        %3305 = vmatprep.subr.mxu0 0.0
        %3306 = vmatpush1.msra.mxu0 %v3134
        %3307 = vmatprep.subr.mxu0 0.0
        %3308 = vmatpush1.msra.mxu0 %v3131
        %3309 = vmatprep.subr.mxu0 0.0
        %3310 = vmatpush1.msra.mxu0 %v3128
        %3311 = vmatprep.subr.mxu0 0.0
        %3312 = vmatpush1.msra.mxu0 %v3125
        %3313 = vmatprep.subr.mxu0 0.0
        %3314 = vmatpush1.msra.mxu0 %v3122
        %3315 = vmatprep.subr.mxu0 0.0
        %3316 = vmatpush1.msra.mxu0 %v3119
        %3317 = vmatprep.subr.mxu0 0.0
        %3318 = vmatpush1.msra.mxu0 %v3116
        %3319 = vmatprep.subr.mxu0 0.0
        %3320 = vmatpush2.msra.mxu0 0.0
        %3321 = vmatprep.subr.mxu0 0.0
        %3322 = vmatpush2.msra.mxu0 0.0
        %3323 = vmatprep.subr.mxu0 0.0
        %3324 = vmatpush2.msra.mxu0 0.0
        %3325 = vmatprep.subr.mxu0 0.0
        %3326 = vmatpush2.msra.mxu0 0.0
        %3327 = vmatprep.subr.mxu0 0.0
        %3328 = vmatpush2.msra.mxu0 0.0
        %3329 = vmatprep.subr.mxu0 0.0
        %3330 = vmatpush2.msra.mxu0 0.0
        %3331 = vmatprep.subr.mxu0 0.0
        %3332 = vmatpush2.msra.mxu0 0.0
        %3333 = vmatprep.subr.mxu0 0.0
        %3334 = vmatpush2.msra.mxu0 0.0
        %3335 = vmatprep.subr.mxu0 0.0
        %3336 = vmatpush2.msra.mxu0 0.0
        %3337 = vmatprep.subr.mxu0 0.0
        %3338 = vmatpush2.msra.mxu0 %v3208
        %3339 = vmatprep.subr.mxu0 0.0
        %3340 = vmatpush2.msra.mxu0 %v3179
        %3341 = vmatprep.subr.mxu0 0.0
        %3342 = vmatpush2.msra.mxu0 %v3176
        %3343 = vmatprep.subr.mxu0 0.0
        %3344 = vmatpush2.msra.mxu0 %v3173
        %3345 = vmatprep.subr.mxu0 0.0
        %3346 = vmatpush2.msra.mxu0 %v3170
        %3347 = vmatprep.subr.mxu0 0.0
        %3348 = vmatpush2.msra.mxu0 %v3167
        %3349 = vmatprep.subr.mxu0 0.0
        %3350 = vmatpush2.msra.mxu0 %v3164
        %3351 = vmatprep.mubr.f32.mxu0 %v3196
        %3352 = vmatmul.mubr.f32.gmra.mxu0 %v3190
        %v3353 = vpop.f32.mrf.mxu0
        %v3354 = vadd.f32 0.0, %v3353
        %v3355 = vpop.f32.mrf.mxu0
        %3356 = vmatprep.mubr.f32.mxu0 %v3198
        %3357 = vmatmul.mubr.f32.gmra.mxu0 %v3189
        %v3358 = vpop.f32.mrf.mxu0
        %v3359 = vadd.f32 0.0, %v3358
        %v3360 = vpop.f32.mrf.mxu0
        %3361 = vdwg.mxu0
        %v3363 = vsel %vm3031, %v3037, 0
        %v3366 = vsel %vm3031, %v3039, 0
        %v3369 = vsel %vm3200, %v3106, 0
        %v3372 = vsel %vm3200, %v3107, 0
        %v3375 = vsel %vm3200, %v3108, 0
        %3377 = vmatprep.subr.mxu0 %v3086
        %3378 = vmatpush1.msra.mxu0 %v3085
        %3379 = vmatprep.subr.mxu0 %v3083
        %3380 = vmatpush1.msra.mxu0 %v3082
        %3381 = vmatprep.subr.mxu0 %v3080
        %3382 = vmatpush1.msra.mxu0 %v3079
        %3383 = vmatprep.subr.mxu0 %v3077
        %3384 = vmatpush1.msra.mxu0 %v3076
        %3385 = vmatprep.subr.mxu0 %v3074
        %3386 = vmatpush1.msra.mxu0 %v3073
        %3387 = vmatprep.subr.mxu0 %v3071
        %3388 = vmatpush1.msra.mxu0 %v3070
        %3389 = vmatprep.subr.mxu0 %v3068
        %3390 = vmatpush1.msra.mxu0 %v3067
        %3391 = vmatprep.subr.mxu0 %v3065
        %3392 = vmatpush1.msra.mxu0 %v3064
        %3393 = vmatprep.subr.mxu0 %v3062
        %3394 = vmatpush1.msra.mxu0 %v3061
        %3395 = vmatprep.subr.mxu0 %v3059
        %3396 = vmatpush1.msra.mxu0 %v3058
        %3397 = vmatprep.subr.mxu0 %v3056
        %3398 = vmatpush1.msra.mxu0 %v3055
        %3399 = vmatprep.subr.mxu0 %v3053
        %3400 = vmatpush1.msra.mxu0 %v3052
        %3401 = vmatprep.subr.mxu0 %v3050
        %3402 = vmatpush1.msra.mxu0 %v3049
        %3403 = vmatprep.subr.mxu0 %v3047
        %3404 = vmatpush1.msra.mxu0 %v3046
        %3405 = vmatprep.subr.mxu0 %v3044
        %3406 = vmatpush1.msra.mxu0 %v3043
        %3407 = vmatprep.subr.mxu0 %v3041
        %3408 = vmatpush1.msra.mxu0 %v3040
        %3409 = vmatprep.subr.mxu0 0.0
        %3410 = vmatpush2.msra.mxu0 0.0
        %3411 = vmatprep.subr.mxu0 0.0
        %3412 = vmatpush2.msra.mxu0 0.0
        %3413 = vmatprep.subr.mxu0 0.0
        %3414 = vmatpush2.msra.mxu0 0.0
        %3415 = vmatprep.subr.mxu0 0.0
        %3416 = vmatpush2.msra.mxu0 0.0
        %3417 = vmatprep.subr.mxu0 0.0
        %3418 = vmatpush2.msra.mxu0 0.0
        %3419 = vmatprep.subr.mxu0 0.0
        %3420 = vmatpush2.msra.mxu0 0.0
        %3421 = vmatprep.subr.mxu0 0.0
        %3422 = vmatpush2.msra.mxu0 0.0
        %3423 = vmatprep.subr.mxu0 0.0
        %3424 = vmatpush2.msra.mxu0 0.0
        %3425 = vmatprep.subr.mxu0 0.0
        %3426 = vmatpush2.msra.mxu0 0.0
        %3427 = vmatprep.subr.mxu0 %v3372
        %3428 = vmatpush2.msra.mxu0 %v3369
        %3429 = vmatprep.subr.mxu0 %v3104
        %3430 = vmatpush2.msra.mxu0 %v3103
        %3431 = vmatprep.subr.mxu0 %v3101
        %3432 = vmatpush2.msra.mxu0 %v3100
        %3433 = vmatprep.subr.mxu0 %v3098
        %3434 = vmatpush2.msra.mxu0 %v3097
        %3435 = vmatprep.subr.mxu0 %v3095
        %3436 = vmatpush2.msra.mxu0 %v3094
        %3437 = vmatprep.subr.mxu0 %v3092
        %3438 = vmatpush2.msra.mxu0 %v3091
        %3439 = vmatprep.subr.mxu0 %v3089
        %3440 = vmatpush2.msra.mxu0 %v3088
        %3441 = vmatprep.mubr.f32.mxu0 %v3363
        %3442 = vmatmul.mubr.f32.gmra.mxu0 %v3036
        %v3443 = vpop.f32.mrf.mxu0
        %v3444 = vadd.f32 %v3277, %v3443
        %v3445 = vpop.f32.mrf.mxu0
        %v3446 = vadd.f32 %v3279, %v3445
        %3447 = vmatprep.mubr.f32.mxu0 %v3366
        %3448 = vmatmul.mubr.f32.gmra.mxu0 %v3038
        %v3449 = vpop.f32.mrf.mxu0
        %v3450 = vadd.f32 %v3283, %v3449
        %v3451 = vpop.f32.mrf.mxu0
        %v3452 = vadd.f32 %v3285, %v3451
        %3453 = vdwg.mxu0
        %3454 = vmatprep.subr.mxu0 0.0
        %3455 = vmatpush1.msra.mxu0 %v3087
        %3456 = vmatprep.subr.mxu0 0.0
        %3457 = vmatpush1.msra.mxu0 %v3084
        %3458 = vmatprep.subr.mxu0 0.0
        %3459 = vmatpush1.msra.mxu0 %v3081
        %3460 = vmatprep.subr.mxu0 0.0
        %3461 = vmatpush1.msra.mxu0 %v3078
        %3462 = vmatprep.subr.mxu0 0.0
        %3463 = vmatpush1.msra.mxu0 %v3075
        %3464 = vmatprep.subr.mxu0 0.0
        %3465 = vmatpush1.msra.mxu0 %v3072
        %3466 = vmatprep.subr.mxu0 0.0
        %3467 = vmatpush1.msra.mxu0 %v3069
        %3468 = vmatprep.subr.mxu0 0.0
        %3469 = vmatpush1.msra.mxu0 %v3066
        %3470 = vmatprep.subr.mxu0 0.0
        %3471 = vmatpush1.msra.mxu0 %v3063
        %3472 = vmatprep.subr.mxu0 0.0
        %3473 = vmatpush1.msra.mxu0 %v3060
        %3474 = vmatprep.subr.mxu0 0.0
        %3475 = vmatpush1.msra.mxu0 %v3057
        %3476 = vmatprep.subr.mxu0 0.0
        %3477 = vmatpush1.msra.mxu0 %v3054
        %3478 = vmatprep.subr.mxu0 0.0
        %3479 = vmatpush1.msra.mxu0 %v3051
        %3480 = vmatprep.subr.mxu0 0.0
        %3481 = vmatpush1.msra.mxu0 %v3048
        %3482 = vmatprep.subr.mxu0 0.0
        %3483 = vmatpush1.msra.mxu0 %v3045
        %3484 = vmatprep.subr.mxu0 0.0
        %3485 = vmatpush1.msra.mxu0 %v3042
        %3486 = vmatprep.subr.mxu0 0.0
        %3487 = vmatpush2.msra.mxu0 0.0
        %3488 = vmatprep.subr.mxu0 0.0
        %3489 = vmatpush2.msra.mxu0 0.0
        %3490 = vmatprep.subr.mxu0 0.0
        %3491 = vmatpush2.msra.mxu0 0.0
        %3492 = vmatprep.subr.mxu0 0.0
        %3493 = vmatpush2.msra.mxu0 0.0
        %3494 = vmatprep.subr.mxu0 0.0
        %3495 = vmatpush2.msra.mxu0 0.0
        %3496 = vmatprep.subr.mxu0 0.0
        %3497 = vmatpush2.msra.mxu0 0.0
        %3498 = vmatprep.subr.mxu0 0.0
        %3499 = vmatpush2.msra.mxu0 0.0
        %3500 = vmatprep.subr.mxu0 0.0
        %3501 = vmatpush2.msra.mxu0 0.0
        %3502 = vmatprep.subr.mxu0 0.0
        %3503 = vmatpush2.msra.mxu0 0.0
        %3504 = vmatprep.subr.mxu0 0.0
        %3505 = vmatpush2.msra.mxu0 %v3375
        %3506 = vmatprep.subr.mxu0 0.0
        %3507 = vmatpush2.msra.mxu0 %v3105
        %3508 = vmatprep.subr.mxu0 0.0
        %3509 = vmatpush2.msra.mxu0 %v3102
        %3510 = vmatprep.subr.mxu0 0.0
        %3511 = vmatpush2.msra.mxu0 %v3099
        %3512 = vmatprep.subr.mxu0 0.0
        %3513 = vmatpush2.msra.mxu0 %v3096
        %3514 = vmatprep.subr.mxu0 0.0
        %3515 = vmatpush2.msra.mxu0 %v3093
        %3516 = vmatprep.subr.mxu0 0.0
        %3517 = vmatpush2.msra.mxu0 %v3090
        %3518 = vmatprep.mubr.f32.mxu0 %v3363
        %3519 = vmatmul.mubr.f32.gmra.mxu0 %v3036
        %v3520 = vpop.f32.mrf.mxu0
        %v3521 = vadd.f32 %v3354, %v3520
        %v3522 = vpop.f32.mrf.mxu0
        %3523 = vmatprep.mubr.f32.mxu0 %v3366
        %3524 = vmatmul.mubr.f32.gmra.mxu0 %v3038
        %v3525 = vpop.f32.mrf.mxu0
        %v3526 = vadd.f32 %v3359, %v3525
        %v3527 = vpop.f32.mrf.mxu0
        %3528 = vdwg.mxu0
        %v3529 = vld [vmem:[#allocation4] sm:$0xfc]
        %v3530 = vld [vmem:[#allocation4 + $0x8] sm:$0xfc]
        %v3531 = vld [vmem:[#allocation4 + $0x10] sm:$0x7f]
        %v3532 = vld [vmem:[#allocation4 + $0x18] sm:$0x7f]
        %s3533 = scalar_lea.vmem %s5, 1104
        %v3534 = vld [vmem:[%s3533] sm:$0xff]
        %v3535 = vld [vmem:[%s3533 + $0x8] sm:$0xff]
        %v3536 = vld [vmem:[%s3533 + $0x10] sm:$0xff]
        %v3537 = vld [vmem:[%s3533 + $0x18] sm:$0xff]
        %v3538 = vld [vmem:[%s3533 + $0x20] sm:$0xff]
        %v3539 = vld [vmem:[%s3533 + $0x28] sm:$0xff]
        %v3540 = vld [vmem:[%s3533 + $0x30] sm:$0xff]
        %v3541 = vld [vmem:[%s3533 + $0x38] sm:$0xff]
        %v3542 = vld [vmem:[%s3533 + $0x40] sm:$0xff]
        %v3543 = vld [vmem:[%s3533 + $0x48] sm:$0xff]
        %v3544 = vld [vmem:[%s3533 + $0x50] sm:$0xff]
        %v3545 = vld [vmem:[%s3533 + $0x58] sm:$0xff]
        %v3546 = vld [vmem:[%s3533 + $0x60] sm:$0xff]
        %v3547 = vld [vmem:[%s3533 + $0x68] sm:$0xff]
        %v3548 = vld [vmem:[%s3533 + $0x70] sm:$0xff]
        %v3549 = vld [vmem:[%s3533 + $0x78] sm:$0xff]
        %v3550 = vld [vmem:[%s3533 + $0x80] sm:$0xff]
        %v3551 = vld [vmem:[%s3533 + $0x88] sm:$0xff]
        %v3552 = vld [vmem:[%s3533 + $0x90] sm:$0xff]
        %v3553 = vld [vmem:[%s3533 + $0x98] sm:$0xff]
        %v3554 = vld [vmem:[%s3533 + $0xa0] sm:$0xff]
        %v3555 = vld [vmem:[%s3533 + $0xa8] sm:$0xff]
        %v3556 = vld [vmem:[%s3533 + $0xb0] sm:$0xff]
        %v3557 = vld [vmem:[%s3533 + $0xb8] sm:$0xff]
        %v3558 = vld [vmem:[%s3533 + $0xc0] sm:$0xff]
        %v3559 = vld [vmem:[%s3533 + $0xc8] sm:$0xff]
        %v3560 = vld [vmem:[%s3533 + $0xd0] sm:$0xff]
        %v3561 = vld [vmem:[%s3533 + $0xd8] sm:$0xff]
        %v3562 = vld [vmem:[%s3533 + $0xe0] sm:$0xff]
        %v3563 = vld [vmem:[%s3533 + $0xe8] sm:$0xff]
        %v3564 = vld [vmem:[%s3533 + $0xf0] sm:$0xff]
        %v3565 = vld [vmem:[%s3533 + $0xf8] sm:$0xff]
        %v3566 = vld [vmem:[%s3533 + $0x100] sm:$0xff]
        %v3567 = vld [vmem:[%s3533 + $0x108] sm:$0xff]
        %v3568 = vld [vmem:[%s3533 + $0x110] sm:$0xff]
        %v3569 = vld [vmem:[%s3533 + $0x118] sm:$0xff]
        %v3570 = vld [vmem:[%s3533 + $0x120] sm:$0xff]
        %v3571 = vld [vmem:[%s3533 + $0x128] sm:$0xff]
        %v3572 = vld [vmem:[%s3533 + $0x130] sm:$0xff]
        %v3573 = vld [vmem:[%s3533 + $0x138] sm:$0xff]
        %v3574 = vld [vmem:[%s3533 + $0x140] sm:$0xff]
        %v3575 = vld [vmem:[%s3533 + $0x148] sm:$0xff]
        %v3576 = vld [vmem:[%s3533 + $0x150] sm:$0xff]
        %v3577 = vld [vmem:[%s3533 + $0x158] sm:$0xff]
        %v3578 = vld [vmem:[%s3533 + $0x160] sm:$0xff]
        %v3579 = vld [vmem:[%s3533 + $0x168] sm:$0xff]
        %v3580 = vld [vmem:[%s3533 + $0x170] sm:$0xff]
        %v3581 = vld [vmem:[%s3533 + $0x178] sm:$0xff]
        %v3582 = vld [vmem:[%s3533 + $0x180] sm:$0xff]
        %v3583 = vld [vmem:[%s3533 + $0x188] sm:$0xff]
        %v3584 = vld [vmem:[%s3533 + $0x190] sm:$0xff]
        %v3585 = vld [vmem:[%s3533 + $0x198] sm:$0xff]
        %v3586 = vld [vmem:[%s3533 + $0x1a0] sm:$0xff]
        %v3587 = vld [vmem:[%s3533 + $0x1a8] sm:$0xff]
        %v3588 = vld [vmem:[%s3533 + $0x1b0] sm:$0xff]
        %v3589 = vld [vmem:[%s3533 + $0x1b8] sm:$0xff]
        %v3590 = vld [vmem:[%s3533 + $0x1c0] sm:$0xff]
        %v3591 = vld [vmem:[%s3533 + $0x1c8] sm:$0xff]
        %v3592 = vld [vmem:[%s3533 + $0x1d0] sm:$0xff]
        %v3593 = vld [vmem:[%s3533 + $0x1d8] sm:$0xff]
        %v3594 = vld [vmem:[%s3533 + $0x1e0] sm:$0xff]
        %v3595 = vld [vmem:[%s3533 + $0x1e8] sm:$0xff]
        %v3596 = vld [vmem:[%s3533 + $0x1f0] sm:$0xff]
        %v3597 = vld [vmem:[%s3533 + $0x1f8] sm:$0xff]
        %v3598 = vld [vmem:[%s3533 + $0x200] sm:$0xff]
        %v3599 = vld [vmem:[%s3533 + $0x208] sm:$0xff]
        %v3600 = vld [vmem:[%s3533 + $0x210] sm:$0xf]
        %v3601 = vld [vmem:[%s3533 + $0x218] sm:$0xf]
        %v3602 = vld [vmem:[%s3533 + $0x220] sm:$0xf]
        %vm3607 = vcmask 1045504
        %v3608 = vrot.slane %v3529, 2
        %v3609 = vrot.slane %v3531, 2
        %v3610 = vsel %vm3607, %v3608, %v3609
        %v3611 = vrot.slane %v3530, 2
        %v3612 = vrot.slane %v3532, 2
        %v3613 = vsel %vm3607, %v3611, %v3612
        %v3616 = vsel %vm3031, %v3613, 0
        %v3618 = vsel %vm3031, %v3612, 0
        %v3621 = vsel %vm3200, %v3600, 0
        %v3624 = vsel %vm3200, %v3601, 0
        %v3627 = vsel %vm3200, %v3602, 0
        %3629 = vmatprep.subr.mxu0 %v3580
        %3630 = vmatpush1.msra.mxu0 %v3579
        %3631 = vmatprep.subr.mxu0 %v3577
        %3632 = vmatpush1.msra.mxu0 %v3576
        %3633 = vmatprep.subr.mxu0 %v3574
        %3634 = vmatpush1.msra.mxu0 %v3573
        %3635 = vmatprep.subr.mxu0 %v3571
        %3636 = vmatpush1.msra.mxu0 %v3570
        %3637 = vmatprep.subr.mxu0 %v3568
        %3638 = vmatpush1.msra.mxu0 %v3567
        %3639 = vmatprep.subr.mxu0 %v3565
        %3640 = vmatpush1.msra.mxu0 %v3564
        %3641 = vmatprep.subr.mxu0 %v3562
        %3642 = vmatpush1.msra.mxu0 %v3561
        %3643 = vmatprep.subr.mxu0 %v3559
        %3644 = vmatpush1.msra.mxu0 %v3558
        %3645 = vmatprep.subr.mxu0 %v3556
        %3646 = vmatpush1.msra.mxu0 %v3555
        %3647 = vmatprep.subr.mxu0 %v3553
        %3648 = vmatpush1.msra.mxu0 %v3552
        %3649 = vmatprep.subr.mxu0 %v3550
        %3650 = vmatpush1.msra.mxu0 %v3549
        %3651 = vmatprep.subr.mxu0 %v3547
        %3652 = vmatpush1.msra.mxu0 %v3546
        %3653 = vmatprep.subr.mxu0 %v3544
        %3654 = vmatpush1.msra.mxu0 %v3543
        %3655 = vmatprep.subr.mxu0 %v3541
        %3656 = vmatpush1.msra.mxu0 %v3540
        %3657 = vmatprep.subr.mxu0 %v3538
        %3658 = vmatpush1.msra.mxu0 %v3537
        %3659 = vmatprep.subr.mxu0 %v3535
        %3660 = vmatpush1.msra.mxu0 %v3534
        %3661 = vmatprep.subr.mxu0 0.0
        %3662 = vmatpush2.msra.mxu0 0.0
        %3663 = vmatprep.subr.mxu0 0.0
        %3664 = vmatpush2.msra.mxu0 0.0
        %3665 = vmatprep.subr.mxu0 0.0
        %3666 = vmatpush2.msra.mxu0 0.0
        %3667 = vmatprep.subr.mxu0 0.0
        %3668 = vmatpush2.msra.mxu0 0.0
        %3669 = vmatprep.subr.mxu0 0.0
        %3670 = vmatpush2.msra.mxu0 0.0
        %3671 = vmatprep.subr.mxu0 0.0
        %3672 = vmatpush2.msra.mxu0 0.0
        %3673 = vmatprep.subr.mxu0 0.0
        %3674 = vmatpush2.msra.mxu0 0.0
        %3675 = vmatprep.subr.mxu0 0.0
        %3676 = vmatpush2.msra.mxu0 0.0
        %3677 = vmatprep.subr.mxu0 0.0
        %3678 = vmatpush2.msra.mxu0 0.0
        %3679 = vmatprep.subr.mxu0 %v3624
        %3680 = vmatpush2.msra.mxu0 %v3621
        %3681 = vmatprep.subr.mxu0 %v3598
        %3682 = vmatpush2.msra.mxu0 %v3597
        %3683 = vmatprep.subr.mxu0 %v3595
        %3684 = vmatpush2.msra.mxu0 %v3594
        %3685 = vmatprep.subr.mxu0 %v3592
        %3686 = vmatpush2.msra.mxu0 %v3591
        %3687 = vmatprep.subr.mxu0 %v3589
        %3688 = vmatpush2.msra.mxu0 %v3588
        %3689 = vmatprep.subr.mxu0 %v3586
        %3690 = vmatpush2.msra.mxu0 %v3585
        %3691 = vmatprep.subr.mxu0 %v3583
        %3692 = vmatpush2.msra.mxu0 %v3582
        %3693 = vmatprep.mubr.f32.mxu0 %v3616
        %3694 = vmatmul.mubr.f32.gmra.mxu0 %v3610
        %v3695 = vpop.f32.mrf.mxu0
        %v3696 = vadd.f32 0.0, %v3695
        %v3697 = vpop.f32.mrf.mxu0
        %v3698 = vadd.f32 0.0, %v3697
        %3699 = vmatprep.mubr.f32.mxu0 %v3618
        %3700 = vmatmul.mubr.f32.gmra.mxu0 %v3609
        %v3701 = vpop.f32.mrf.mxu0
        %v3702 = vadd.f32 0.0, %v3701
        %v3703 = vpop.f32.mrf.mxu0
        %v3704 = vadd.f32 0.0, %v3703
        %3705 = vdwg.mxu0
        %3706 = vmatprep.subr.mxu0 0.0
        %3707 = vmatpush1.msra.mxu0 %v3581
        %3708 = vmatprep.subr.mxu0 0.0
        %3709 = vmatpush1.msra.mxu0 %v3578
        %3710 = vmatprep.subr.mxu0 0.0
        %3711 = vmatpush1.msra.mxu0 %v3575
        %3712 = vmatprep.subr.mxu0 0.0
        %3713 = vmatpush1.msra.mxu0 %v3572
        %3714 = vmatprep.subr.mxu0 0.0
        %3715 = vmatpush1.msra.mxu0 %v3569
        %3716 = vmatprep.subr.mxu0 0.0
        %3717 = vmatpush1.msra.mxu0 %v3566
        %3718 = vmatprep.subr.mxu0 0.0
        %3719 = vmatpush1.msra.mxu0 %v3563
        %3720 = vmatprep.subr.mxu0 0.0
        %3721 = vmatpush1.msra.mxu0 %v3560
        %3722 = vmatprep.subr.mxu0 0.0
        %3723 = vmatpush1.msra.mxu0 %v3557
        %3724 = vmatprep.subr.mxu0 0.0
        %3725 = vmatpush1.msra.mxu0 %v3554
        %3726 = vmatprep.subr.mxu0 0.0
        %3727 = vmatpush1.msra.mxu0 %v3551
        %3728 = vmatprep.subr.mxu0 0.0
        %3729 = vmatpush1.msra.mxu0 %v3548
        %3730 = vmatprep.subr.mxu0 0.0
        %3731 = vmatpush1.msra.mxu0 %v3545
        %3732 = vmatprep.subr.mxu0 0.0
        %3733 = vmatpush1.msra.mxu0 %v3542
        %3734 = vmatprep.subr.mxu0 0.0
        %3735 = vmatpush1.msra.mxu0 %v3539
        %3736 = vmatprep.subr.mxu0 0.0
        %3737 = vmatpush1.msra.mxu0 %v3536
        %3738 = vmatprep.subr.mxu0 0.0
        %3739 = vmatpush2.msra.mxu0 0.0
        %3740 = vmatprep.subr.mxu0 0.0
        %3741 = vmatpush2.msra.mxu0 0.0
        %3742 = vmatprep.subr.mxu0 0.0
        %3743 = vmatpush2.msra.mxu0 0.0
        %3744 = vmatprep.subr.mxu0 0.0
        %3745 = vmatpush2.msra.mxu0 0.0
        %3746 = vmatprep.subr.mxu0 0.0
        %3747 = vmatpush2.msra.mxu0 0.0
        %3748 = vmatprep.subr.mxu0 0.0
        %3749 = vmatpush2.msra.mxu0 0.0
        %3750 = vmatprep.subr.mxu0 0.0
        %3751 = vmatpush2.msra.mxu0 0.0
        %3752 = vmatprep.subr.mxu0 0.0
        %3753 = vmatpush2.msra.mxu0 0.0
        %3754 = vmatprep.subr.mxu0 0.0
        %3755 = vmatpush2.msra.mxu0 0.0
        %3756 = vmatprep.subr.mxu0 0.0
        %3757 = vmatpush2.msra.mxu0 %v3627
        %3758 = vmatprep.subr.mxu0 0.0
        %3759 = vmatpush2.msra.mxu0 %v3599
        %3760 = vmatprep.subr.mxu0 0.0
        %3761 = vmatpush2.msra.mxu0 %v3596
        %3762 = vmatprep.subr.mxu0 0.0
        %3763 = vmatpush2.msra.mxu0 %v3593
        %3764 = vmatprep.subr.mxu0 0.0
        %3765 = vmatpush2.msra.mxu0 %v3590
        %3766 = vmatprep.subr.mxu0 0.0
        %3767 = vmatpush2.msra.mxu0 %v3587
        %3768 = vmatprep.subr.mxu0 0.0
        %3769 = vmatpush2.msra.mxu0 %v3584
        %3770 = vmatprep.mubr.f32.mxu0 %v3616
        %3771 = vmatmul.mubr.f32.gmra.mxu0 %v3610
        %v3772 = vpop.f32.mrf.mxu0
        %v3773 = vadd.f32 0.0, %v3772
        %v3774 = vpop.f32.mrf.mxu0
        %3775 = vmatprep.mubr.f32.mxu0 %v3618
        %3776 = vmatmul.mubr.f32.gmra.mxu0 %v3609
        %v3777 = vpop.f32.mrf.mxu0
        %v3778 = vadd.f32 0.0, %v3777
        %v3779 = vpop.f32.mrf.mxu0
        %3780 = vdwg.mxu0
        %v3781 = vadd.f32 %v3444, %v3696
        %v3782 = vadd.f32 %v3446, %v3698
        %v3783 = vadd.f32 %v3521, %v3773
        %v3784 = vadd.f32 %v3450, %v3702
        %v3785 = vadd.f32 %v3452, %v3704
        %v3786 = vadd.f32 %v3526, %v3778
        %v3787 = vld [vmem:[%s6] sm:$0x7]
        %v3789 = vlaneseq
        %v3790 = vshrl.u32 %v3789, 7
        %v3791 = vsub.s32 0, %v3790
        %v3792 = vrot.slane %v3787, %v3791
        %v3793 = vlaneseq
        %v3794 = vshrl.u32 %v3793, 7
        %v3795 = vsub.s32 1, %v3794
        %v3796 = vrot.slane %v3787, %v3795
        %v3797 = vlaneseq
        %v3798 = vshrl.u32 %v3797, 7
        %v3799 = vsub.s32 2, %v3798
        %v3800 = vrot.slane %v3787, %v3799
        %v3804 = vadd.f32 %v3781, %v3792
        %v3805 = vadd.f32 %v3782, %v3796
        %v3806 = vadd.f32 %v3783, %v3800
        %v3807 = vadd.f32 %v3784, %v3792
        %v3808 = vadd.f32 %v3785, %v3796
        %v3809 = vadd.f32 %v3786, %v3800
        %v3810 = vmax.f32 %v3804, 0.0
        %v3811 = vmax.f32 %v3805, 0.0
        %v3812 = vmax.f32 %v3806, 0.0
        %v3813 = vmax.f32 %v3807, 0.0
        %v3814 = vmax.f32 %v3808, 0.0
        %v3815 = vmax.f32 %v3809, 0.0
        %3816 = vst [vmem:[#allocation5] sm:$0xff] %v3810
        %3817 = vst [vmem:[#allocation5 + $0x8] sm:$0xff] %v3811
        %vm3818 = vcmask 457728
        %3819 = vst.msk [vmem:[#allocation5 + $0x10] sm:$0xff] %vm3818, %v3812
        %3820 = vst [vmem:[#allocation5 + $0x18] sm:$0x1f] %v3813
        %3821 = vst [vmem:[#allocation5 + $0x20] sm:$0x1f] %v3814
        %vm3822 = vcmask 454656
        %3823 = vst.msk [vmem:[#allocation5 + $0x28] sm:$0x1f] %vm3822, %v3815
        %v3824 = vld [vmem:[#allocation5] ss:$8 sm:$0x7]
        %s3825 = scalar_lea.vmem [#allocation5], 1
        %v3826 = vld [vmem:[%s3825] ss:$8 sm:$0x7]
        %v3827 = vmax.f32 %v3824, %v3826
        %vm3828 = vcmp.lt.s32.totalorder %v2408, 312
        %vm3829 = vmand %vm2409, %vm3828
        %3830 = vst.msk [vmem:[#allocation6] ss:$8 sm:$0x7] %vm3829, %v3827
        %3831 = vst.msk [vmem:[#allocation6] ss:$8 sm:$0x0] %vm3829, %v3827
        %s3832 = scalar_lea.vmem [#allocation5], 2
        %v3833 = vld [vmem:[%s3832] ss:$8 sm:$0x7]
        %s3834 = scalar_lea.vmem [#allocation5], 3
        %v3835 = vld [vmem:[%s3834] ss:$8 sm:$0x7]
        %v3836 = vmax.f32 %v3833, %v3835
        %s3837 = scalar_lea.vmem [#allocation6], 1
        %3838 = vst.msk [vmem:[%s3837] ss:$8 sm:$0x7] %vm3829, %v3836
        %3839 = vst.msk [vmem:[%s3837] ss:$8 sm:$0x0] %vm3829, %v3836
        %s3840 = scalar_lea.vmem [#allocation5], 4
        %v3841 = vld [vmem:[%s3840] ss:$8 sm:$0x7]
        %s3842 = scalar_lea.vmem [#allocation5], 5
        %v3843 = vld [vmem:[%s3842] ss:$8 sm:$0x7]
        %v3844 = vmax.f32 %v3841, %v3843
        %s3845 = scalar_lea.vmem [#allocation6], 2
        %3846 = vst.msk [vmem:[%s3845] ss:$8 sm:$0x7] %vm3829, %v3844
        %3847 = vst.msk [vmem:[%s3845] ss:$8 sm:$0x0] %vm3829, %v3844
        %s3848 = scalar_lea.vmem [#allocation5], 6
        %v3849 = vld [vmem:[%s3848] ss:$8 sm:$0x7]
        %s3850 = scalar_lea.vmem [#allocation5], 7
        %v3851 = vld [vmem:[%s3850] ss:$8 sm:$0x7]
        %v3852 = vmax.f32 %v3849, %v3851
        %s3853 = scalar_lea.vmem [#allocation6], 3
        %3854 = vst.msk [vmem:[%s3853] ss:$8 sm:$0x7] %vm3829, %v3852
        %3855 = vst.msk [vmem:[%s3853] ss:$8 sm:$0x0] %vm3829, %v3852
        %s3856 = scalar_lea.vmem [#allocation5], 24
        %v3857 = vld [vmem:[%s3856] ss:$8 sm:$0x7]
        %s3858 = scalar_lea.vmem [#allocation5], 25
        %v3859 = vld [vmem:[%s3858] ss:$8 sm:$0x7]
        %v3860 = vmax.f32 %v3857, %v3859
        %s3861 = scalar_lea.vmem [#allocation6], 4
        %3862 = vst.msk [vmem:[%s3861] ss:$8 sm:$0x7] %vm3829, %v3860
        %3863 = vst.msk [vmem:[%s3861] ss:$8 sm:$0x0] %vm3829, %v3860
        %s3864 = scalar_lea.vmem [#allocation5], 26
        %v3865 = vld [vmem:[%s3864] ss:$8 sm:$0x7]
        %s3866 = scalar_lea.vmem [#allocation5], 27
        %v3867 = vld [vmem:[%s3866] ss:$8 sm:$0x7]
        %v3868 = vmax.f32 %v3865, %v3867
        %s3869 = scalar_lea.vmem [#allocation6], 5
        %3870 = vst.msk [vmem:[%s3869] ss:$8 sm:$0x7] %vm3829, %v3868
        %3871 = vst.msk [vmem:[%s3869] ss:$8 sm:$0x0] %vm3829, %v3868
        %v3872 = vld [vmem:[#allocation6] sm:$0x3f]
        %v3873 = vld [vmem:[#allocation6 + $0x8] sm:$0x3f]
        %v3874 = vld [vmem:[#allocation6 + $0x10] sm:$0x3f]
        %v3875 = vld [vmem:[%s7] sm:$0xff]
        %v3876 = vld [vmem:[%s7 + $0x8] sm:$0xff]
        %v3877 = vld [vmem:[%s7 + $0x10] sm:$0xff]
        %v3878 = vld [vmem:[%s7 + $0x18] sm:$0xff]
        %v3879 = vld [vmem:[%s7 + $0x20] sm:$0xff]
        %v3880 = vld [vmem:[%s7 + $0x28] sm:$0xff]
        %v3881 = vld [vmem:[%s7 + $0x30] sm:$0xff]
        %v3882 = vld [vmem:[%s7 + $0x38] sm:$0xff]
        %v3883 = vld [vmem:[%s7 + $0x40] sm:$0xff]
        %v3884 = vld [vmem:[%s7 + $0x48] sm:$0xff]
        %v3885 = vld [vmem:[%s7 + $0x50] sm:$0xff]
        %v3886 = vld [vmem:[%s7 + $0x58] sm:$0xff]
        %v3887 = vld [vmem:[%s7 + $0x60] sm:$0xff]
        %v3888 = vld [vmem:[%s7 + $0x68] sm:$0xff]
        %v3889 = vld [vmem:[%s7 + $0x70] sm:$0xff]
        %v3890 = vld [vmem:[%s7 + $0x78] sm:$0xff]
        %v3891 = vld [vmem:[%s7 + $0x80] sm:$0xff]
        %v3892 = vld [vmem:[%s7 + $0x88] sm:$0xff]
        %v3893 = vld [vmem:[%s7 + $0x90] sm:$0xff]
        %v3894 = vld [vmem:[%s7 + $0x98] sm:$0xff]
        %v3895 = vld [vmem:[%s7 + $0xa0] sm:$0xff]
        %v3896 = vld [vmem:[%s7 + $0xa8] sm:$0xff]
        %v3897 = vld [vmem:[%s7 + $0xb0] sm:$0xff]
        %v3898 = vld [vmem:[%s7 + $0xb8] sm:$0xff]
        %v3899 = vld [vmem:[%s7 + $0xc0] sm:$0xff]
        %v3900 = vld [vmem:[%s7 + $0xc8] sm:$0xff]
        %v3901 = vld [vmem:[%s7 + $0xd0] sm:$0xff]
        %v3902 = vld [vmem:[%s7 + $0xd8] sm:$0xff]
        %v3903 = vld [vmem:[%s7 + $0xe0] sm:$0xff]
        %v3904 = vld [vmem:[%s7 + $0xe8] sm:$0xff]
        %v3905 = vld [vmem:[%s7 + $0xf0] sm:$0xff]
        %v3906 = vld [vmem:[%s7 + $0xf8] sm:$0xff]
        %v3907 = vld [vmem:[%s7 + $0x100] sm:$0xff]
        %v3908 = vld [vmem:[%s7 + $0x108] sm:$0xff]
        %v3909 = vld [vmem:[%s7 + $0x110] sm:$0xff]
        %v3910 = vld [vmem:[%s7 + $0x118] sm:$0xff]
        %v3911 = vld [vmem:[%s7 + $0x120] sm:$0xff]
        %v3912 = vld [vmem:[%s7 + $0x128] sm:$0xff]
        %v3913 = vld [vmem:[%s7 + $0x130] sm:$0xff]
        %v3914 = vld [vmem:[%s7 + $0x138] sm:$0xff]
        %v3915 = vld [vmem:[%s7 + $0x140] sm:$0xff]
        %v3916 = vld [vmem:[%s7 + $0x148] sm:$0xff]
        %v3917 = vld [vmem:[%s7 + $0x150] sm:$0xff]
        %v3918 = vld [vmem:[%s7 + $0x158] sm:$0xff]
        %v3919 = vld [vmem:[%s7 + $0x160] sm:$0xff]
        %v3920 = vld [vmem:[%s7 + $0x168] sm:$0xff]
        %v3921 = vld [vmem:[%s7 + $0x170] sm:$0xff]
        %v3922 = vld [vmem:[%s7 + $0x178] sm:$0xff]
        %v3923 = vld [vmem:[%s7 + $0x180] sm:$0xff]
        %v3924 = vld [vmem:[%s7 + $0x188] sm:$0xff]
        %v3925 = vld [vmem:[%s7 + $0x190] sm:$0xff]
        %v3926 = vld [vmem:[%s7 + $0x198] sm:$0xff]
        %v3927 = vld [vmem:[%s7 + $0x1a0] sm:$0xff]
        %v3928 = vld [vmem:[%s7 + $0x1a8] sm:$0xff]
        %v3929 = vld [vmem:[%s7 + $0x1b0] sm:$0xff]
        %v3930 = vld [vmem:[%s7 + $0x1b8] sm:$0xff]
        %v3931 = vld [vmem:[%s7 + $0x1c0] sm:$0xff]
        %v3932 = vld [vmem:[%s7 + $0x1c8] sm:$0xff]
        %v3933 = vld [vmem:[%s7 + $0x1d0] sm:$0xff]
        %v3934 = vld [vmem:[%s7 + $0x1d8] sm:$0xff]
        %v3935 = vld [vmem:[%s7 + $0x1e0] sm:$0xff]
        %v3936 = vld [vmem:[%s7 + $0x1e8] sm:$0xff]
        %v3937 = vld [vmem:[%s7 + $0x1f0] sm:$0xff]
        %v3938 = vld [vmem:[%s7 + $0x1f8] sm:$0xff]
        %v3939 = vld [vmem:[%s7 + $0x200] sm:$0xff]
        %v3940 = vld [vmem:[%s7 + $0x208] sm:$0xff]
        %v3941 = vld [vmem:[%s7 + $0x210] sm:$0xff]
        %v3942 = vld [vmem:[%s7 + $0x218] sm:$0xff]
        %v3943 = vld [vmem:[%s7 + $0x220] sm:$0xff]
        %v3944 = vld [vmem:[%s7 + $0x228] sm:$0xff]
        %v3945 = vld [vmem:[%s7 + $0x230] sm:$0xff]
        %v3946 = vld [vmem:[%s7 + $0x238] sm:$0xff]
        %v3947 = vld [vmem:[%s7 + $0x240] sm:$0xff]
        %v3948 = vld [vmem:[%s7 + $0x248] sm:$0xff]
        %v3949 = vld [vmem:[%s7 + $0x250] sm:$0xff]
        %v3950 = vld [vmem:[%s7 + $0x258] sm:$0xff]
        %v3951 = vld [vmem:[%s7 + $0x260] sm:$0xff]
        %v3952 = vld [vmem:[%s7 + $0x268] sm:$0xff]
        %v3954 = vsel %vm3818, %v3874, 0
        %3956 = vmatprep.subr.mxu0 %v3906
        %3957 = vmatpush1.msra.mxu0 %v3905
        %3958 = vmatprep.subr.mxu0 %v3904
        %3959 = vmatpush1.msra.mxu0 %v3903
        %3960 = vmatprep.subr.mxu0 %v3902
        %3961 = vmatpush1.msra.mxu0 %v3901
        %3962 = vmatprep.subr.mxu0 %v3900
        %3963 = vmatpush1.msra.mxu0 %v3899
        %3964 = vmatprep.subr.mxu0 %v3898
        %3965 = vmatpush1.msra.mxu0 %v3897
        %3966 = vmatprep.subr.mxu0 %v3896
        %3967 = vmatpush1.msra.mxu0 %v3895
        %3968 = vmatprep.subr.mxu0 %v3894
        %3969 = vmatpush1.msra.mxu0 %v3893
        %3970 = vmatprep.subr.mxu0 %v3892
        %3971 = vmatpush1.msra.mxu0 %v3891
        %3972 = vmatprep.subr.mxu0 %v3890
        %3973 = vmatpush1.msra.mxu0 %v3889
        %3974 = vmatprep.subr.mxu0 %v3888
        %3975 = vmatpush1.msra.mxu0 %v3887
        %3976 = vmatprep.subr.mxu0 %v3886
        %3977 = vmatpush1.msra.mxu0 %v3885
        %3978 = vmatprep.subr.mxu0 %v3884
        %3979 = vmatpush1.msra.mxu0 %v3883
        %3980 = vmatprep.subr.mxu0 %v3882
        %3981 = vmatpush1.msra.mxu0 %v3881
        %3982 = vmatprep.subr.mxu0 %v3880
        %3983 = vmatpush1.msra.mxu0 %v3879
        %3984 = vmatprep.subr.mxu0 %v3878
        %3985 = vmatpush1.msra.mxu0 %v3877
        %3986 = vmatprep.subr.mxu0 %v3876
        %3987 = vmatpush1.msra.mxu0 %v3875
        %3988 = vmatprep.subr.mxu0 %v3938
        %3989 = vmatpush2.msra.mxu0 %v3937
        %3990 = vmatprep.subr.mxu0 %v3936
        %3991 = vmatpush2.msra.mxu0 %v3935
        %3992 = vmatprep.subr.mxu0 %v3934
        %3993 = vmatpush2.msra.mxu0 %v3933
        %3994 = vmatprep.subr.mxu0 %v3932
        %3995 = vmatpush2.msra.mxu0 %v3931
        %3996 = vmatprep.subr.mxu0 %v3930
        %3997 = vmatpush2.msra.mxu0 %v3929
        %3998 = vmatprep.subr.mxu0 %v3928
        %3999 = vmatpush2.msra.mxu0 %v3927
        %4000 = vmatprep.subr.mxu0 %v3926
        %4001 = vmatpush2.msra.mxu0 %v3925
        %4002 = vmatprep.subr.mxu0 %v3924
        %4003 = vmatpush2.msra.mxu0 %v3923
        %4004 = vmatprep.subr.mxu0 %v3922
        %4005 = vmatpush2.msra.mxu0 %v3921
        %4006 = vmatprep.subr.mxu0 %v3920
        %4007 = vmatpush2.msra.mxu0 %v3919
        %4008 = vmatprep.subr.mxu0 %v3918
        %4009 = vmatpush2.msra.mxu0 %v3917
        %4010 = vmatprep.subr.mxu0 %v3916
        %4011 = vmatpush2.msra.mxu0 %v3915
        %4012 = vmatprep.subr.mxu0 %v3914
        %4013 = vmatpush2.msra.mxu0 %v3913
        %4014 = vmatprep.subr.mxu0 %v3912
        %4015 = vmatpush2.msra.mxu0 %v3911
        %4016 = vmatprep.subr.mxu0 %v3910
        %4017 = vmatpush2.msra.mxu0 %v3909
        %4018 = vmatprep.subr.mxu0 %v3908
        %4019 = vmatpush2.msra.mxu0 %v3907
        %4020 = vmatprep.mubr.f32.mxu0 %v3873
        %4021 = vmatmul.mubr.f32.gmra.mxu0 %v3872
        %v4022 = vpop.f32.mrf.mxu0
        %v4023 = vadd.f32 0.0, %v4022
        %v4024 = vpop.f32.mrf.mxu0
        %v4025 = vadd.f32 0.0, %v4024
        %4026 = vdwg.mxu0
        %4027 = vmatprep.subr.mxu0 0.0
        %4028 = vmatpush1.msra.mxu0 0.0
        %4029 = vmatprep.subr.mxu0 0.0
        %4030 = vmatpush1.msra.mxu0 0.0
        %4031 = vmatprep.subr.mxu0 0.0
        %4032 = vmatpush1.msra.mxu0 0.0
        %4033 = vmatprep.subr.mxu0 0.0
        %4034 = vmatpush1.msra.mxu0 0.0
        %4035 = vmatprep.subr.mxu0 0.0
        %4036 = vmatpush1.msra.mxu0 0.0
        %4037 = vmatprep.subr.mxu0 0.0
        %4038 = vmatpush1.msra.mxu0 0.0
        %4039 = vmatprep.subr.mxu0 0.0
        %4040 = vmatpush1.msra.mxu0 0.0
        %4041 = vmatprep.subr.mxu0 0.0
        %4042 = vmatpush1.msra.mxu0 0.0
        %4043 = vmatprep.subr.mxu0 0.0
        %4044 = vmatpush1.msra.mxu0 0.0
        %4045 = vmatprep.subr.mxu0 %v3952
        %4046 = vmatpush1.msra.mxu0 %v3951
        %4047 = vmatprep.subr.mxu0 %v3950
        %4048 = vmatpush1.msra.mxu0 %v3949
        %4049 = vmatprep.subr.mxu0 %v3948
        %4050 = vmatpush1.msra.mxu0 %v3947
        %4051 = vmatprep.subr.mxu0 %v3946
        %4052 = vmatpush1.msra.mxu0 %v3945
        %4053 = vmatprep.subr.mxu0 %v3944
        %4054 = vmatpush1.msra.mxu0 %v3943
        %4055 = vmatprep.subr.mxu0 %v3942
        %4056 = vmatpush1.msra.mxu0 %v3941
        %4057 = vmatprep.subr.mxu0 %v3940
        %4058 = vmatpush1.msra.mxu0 %v3939
        %4059 = vmatprep.subr.mxu0 0.0
        %4060 = vmatpush2.msra.mxu0 0.0
        %4061 = vmatprep.subr.mxu0 0.0
        %4062 = vmatpush2.msra.mxu0 0.0
        %4063 = vmatprep.subr.mxu0 0.0
        %4064 = vmatpush2.msra.mxu0 0.0
        %4065 = vmatprep.subr.mxu0 0.0
        %4066 = vmatpush2.msra.mxu0 0.0
        %4067 = vmatprep.subr.mxu0 0.0
        %4068 = vmatpush2.msra.mxu0 0.0
        %4069 = vmatprep.subr.mxu0 0.0
        %4070 = vmatpush2.msra.mxu0 0.0
        %4071 = vmatprep.subr.mxu0 0.0
        %4072 = vmatpush2.msra.mxu0 0.0
        %4073 = vmatprep.subr.mxu0 0.0
        %4074 = vmatpush2.msra.mxu0 0.0
        %4075 = vmatprep.subr.mxu0 0.0
        %4076 = vmatpush2.msra.mxu0 0.0
        %4077 = vmatprep.subr.mxu0 0.0
        %4078 = vmatpush2.msra.mxu0 0.0
        %4079 = vmatprep.subr.mxu0 0.0
        %4080 = vmatpush2.msra.mxu0 0.0
        %4081 = vmatprep.subr.mxu0 0.0
        %4082 = vmatpush2.msra.mxu0 0.0
        %4083 = vmatprep.subr.mxu0 0.0
        %4084 = vmatpush2.msra.mxu0 0.0
        %4085 = vmatprep.subr.mxu0 0.0
        %4086 = vmatpush2.msra.mxu0 0.0
        %4087 = vmatprep.subr.mxu0 0.0
        %4088 = vmatpush2.msra.mxu0 0.0
        %4089 = vmatprep.subr.mxu0 0.0
        %4090 = vmatpush2.msra.mxu0 0.0
        %4091 = vmatprep.mubr.f32.mxu0 0.0
        %4092 = vmatmul.mubr.f32.gmra.mxu0 %v3954
        %v4093 = vpop.f32.mrf.mxu0
        %v4094 = vadd.f32 %v4023, %v4093
        %v4095 = vpop.f32.mrf.mxu0
        %v4096 = vadd.f32 %v4025, %v4095
        %4097 = vdwg.mxu0
        %v4098 = vld [vmem:[%s8] sm:$0xff]
        %v4099 = vld [vmem:[%s8 + $0x8] sm:$0xff]
        %v4100 = vld [vmem:[%s8 + $0x10] sm:$0xff]
        %v4101 = vld [vmem:[%s8 + $0x18] sm:$0xff]
        %v4102 = vld [vmem:[%s8 + $0x20] sm:$0xff]
        %v4103 = vld [vmem:[%s8 + $0x28] sm:$0xff]
        %v4104 = vld [vmem:[%s8 + $0x30] sm:$0xff]
        %v4105 = vld [vmem:[%s8 + $0x38] sm:$0xff]
        %v4106 = vld [vmem:[%s8 + $0x40] sm:$0xff]
        %v4107 = vld [vmem:[%s8 + $0x48] sm:$0xff]
        %v4108 = vld [vmem:[%s8 + $0x50] sm:$0xff]
        %v4109 = vld [vmem:[%s8 + $0x58] sm:$0xff]
        %v4110 = vld [vmem:[%s8 + $0x60] sm:$0xff]
        %v4111 = vld [vmem:[%s8 + $0x68] sm:$0xff]
        %v4112 = vld [vmem:[%s8 + $0x70] sm:$0xff]
        %v4113 = vld [vmem:[%s8 + $0x78] sm:$0xff]
        %v4114 = vld [vmem:[%s8 + $0x80] sm:$0xff]
        %v4115 = vld [vmem:[%s8 + $0x88] sm:$0xff]
        %v4116 = vld [vmem:[%s8 + $0x90] sm:$0xff]
        %v4117 = vld [vmem:[%s8 + $0x98] sm:$0xff]
        %v4118 = vld [vmem:[%s8 + $0xa0] sm:$0xff]
        %v4119 = vld [vmem:[%s8 + $0xa8] sm:$0xff]
        %v4120 = vld [vmem:[%s8 + $0xb0] sm:$0xff]
        %v4121 = vld [vmem:[%s8 + $0xb8] sm:$0xff]
        %v4122 = vld [vmem:[%s8 + $0xc0] sm:$0xff]
        %v4123 = vld [vmem:[%s8 + $0xc8] sm:$0xff]
        %v4124 = vld [vmem:[%s8 + $0xd0] sm:$0xff]
        %v4125 = vld [vmem:[%s8 + $0xd8] sm:$0xff]
        %v4126 = vld [vmem:[%s8 + $0xe0] sm:$0xff]
        %v4127 = vld [vmem:[%s8 + $0xe8] sm:$0xff]
        %v4128 = vld [vmem:[%s8 + $0xf0] sm:$0xff]
        %v4129 = vld [vmem:[%s8 + $0xf8] sm:$0xff]
        %v4130 = vld [vmem:[%s8 + $0x100] sm:$0xff]
        %v4131 = vld [vmem:[%s8 + $0x108] sm:$0xff]
        %v4132 = vld [vmem:[%s8 + $0x110] sm:$0xff]
        %v4133 = vld [vmem:[%s8 + $0x118] sm:$0xff]
        %v4134 = vld [vmem:[%s8 + $0x120] sm:$0xff]
        %v4135 = vld [vmem:[%s8 + $0x128] sm:$0xff]
        %v4136 = vld [vmem:[%s8 + $0x130] sm:$0xff]
        %v4137 = vld [vmem:[%s8 + $0x138] sm:$0xff]
        %v4138 = vld [vmem:[%s8 + $0x140] sm:$0xff]
        %v4139 = vld [vmem:[%s8 + $0x148] sm:$0xff]
        %v4140 = vld [vmem:[%s8 + $0x150] sm:$0xff]
        %v4141 = vld [vmem:[%s8 + $0x158] sm:$0xff]
        %v4142 = vld [vmem:[%s8 + $0x160] sm:$0xff]
        %v4143 = vld [vmem:[%s8 + $0x168] sm:$0xff]
        %v4144 = vld [vmem:[%s8 + $0x170] sm:$0xff]
        %v4145 = vld [vmem:[%s8 + $0x178] sm:$0xff]
        %v4146 = vld [vmem:[%s8 + $0x180] sm:$0xff]
        %v4147 = vld [vmem:[%s8 + $0x188] sm:$0xff]
        %v4148 = vld [vmem:[%s8 + $0x190] sm:$0xff]
        %v4149 = vld [vmem:[%s8 + $0x198] sm:$0xff]
        %v4150 = vld [vmem:[%s8 + $0x1a0] sm:$0xff]
        %v4151 = vld [vmem:[%s8 + $0x1a8] sm:$0xff]
        %v4152 = vld [vmem:[%s8 + $0x1b0] sm:$0xff]
        %v4153 = vld [vmem:[%s8 + $0x1b8] sm:$0xff]
        %v4154 = vld [vmem:[%s8 + $0x1c0] sm:$0xff]
        %v4155 = vld [vmem:[%s8 + $0x1c8] sm:$0xff]
        %v4156 = vld [vmem:[%s8 + $0x1d0] sm:$0xff]
        %v4157 = vld [vmem:[%s8 + $0x1d8] sm:$0xff]
        %v4158 = vld [vmem:[%s8 + $0x1e0] sm:$0xff]
        %v4159 = vld [vmem:[%s8 + $0x1e8] sm:$0xff]
        %v4160 = vld [vmem:[%s8 + $0x1f0] sm:$0xff]
        %v4161 = vld [vmem:[%s8 + $0x1f8] sm:$0xff]
        %v4162 = vld [vmem:[%s8 + $0x200] sm:$0xff]
        %v4163 = vld [vmem:[%s8 + $0x208] sm:$0xff]
        %v4164 = vld [vmem:[%s8 + $0x210] sm:$0xff]
        %v4165 = vld [vmem:[%s8 + $0x218] sm:$0xff]
        %v4166 = vld [vmem:[%s8 + $0x220] sm:$0xff]
        %v4167 = vld [vmem:[%s8 + $0x228] sm:$0xff]
        %v4168 = vld [vmem:[%s8 + $0x230] sm:$0xff]
        %v4169 = vld [vmem:[%s8 + $0x238] sm:$0xff]
        %v4170 = vld [vmem:[%s8 + $0x240] sm:$0xff]
        %v4171 = vld [vmem:[%s8 + $0x248] sm:$0xff]
        %v4172 = vld [vmem:[%s8 + $0x250] sm:$0xff]
        %v4173 = vld [vmem:[%s8 + $0x258] sm:$0xff]
        %v4174 = vld [vmem:[%s8 + $0x260] sm:$0xff]
        %v4175 = vld [vmem:[%s8 + $0x268] sm:$0xff]
        %4176 = vmatprep.subr.mxu0 %v4129
        %4177 = vmatpush1.msra.mxu0 %v4128
        %4178 = vmatprep.subr.mxu0 %v4127
        %4179 = vmatpush1.msra.mxu0 %v4126
        %4180 = vmatprep.subr.mxu0 %v4125
        %4181 = vmatpush1.msra.mxu0 %v4124
        %4182 = vmatprep.subr.mxu0 %v4123
        %4183 = vmatpush1.msra.mxu0 %v4122
        %4184 = vmatprep.subr.mxu0 %v4121
        %4185 = vmatpush1.msra.mxu0 %v4120
        %4186 = vmatprep.subr.mxu0 %v4119
        %4187 = vmatpush1.msra.mxu0 %v4118
        %4188 = vmatprep.subr.mxu0 %v4117
        %4189 = vmatpush1.msra.mxu0 %v4116
        %4190 = vmatprep.subr.mxu0 %v4115
        %4191 = vmatpush1.msra.mxu0 %v4114
        %4192 = vmatprep.subr.mxu0 %v4113
        %4193 = vmatpush1.msra.mxu0 %v4112
        %4194 = vmatprep.subr.mxu0 %v4111
        %4195 = vmatpush1.msra.mxu0 %v4110
        %4196 = vmatprep.subr.mxu0 %v4109
        %4197 = vmatpush1.msra.mxu0 %v4108
        %4198 = vmatprep.subr.mxu0 %v4107
        %4199 = vmatpush1.msra.mxu0 %v4106
        %4200 = vmatprep.subr.mxu0 %v4105
        %4201 = vmatpush1.msra.mxu0 %v4104
        %4202 = vmatprep.subr.mxu0 %v4103
        %4203 = vmatpush1.msra.mxu0 %v4102
        %4204 = vmatprep.subr.mxu0 %v4101
        %4205 = vmatpush1.msra.mxu0 %v4100
        %4206 = vmatprep.subr.mxu0 %v4099
        %4207 = vmatpush1.msra.mxu0 %v4098
        %4208 = vmatprep.subr.mxu0 %v4161
        %4209 = vmatpush2.msra.mxu0 %v4160
        %4210 = vmatprep.subr.mxu0 %v4159
        %4211 = vmatpush2.msra.mxu0 %v4158
        %4212 = vmatprep.subr.mxu0 %v4157
        %4213 = vmatpush2.msra.mxu0 %v4156
        %4214 = vmatprep.subr.mxu0 %v4155
        %4215 = vmatpush2.msra.mxu0 %v4154
        %4216 = vmatprep.subr.mxu0 %v4153
        %4217 = vmatpush2.msra.mxu0 %v4152
        %4218 = vmatprep.subr.mxu0 %v4151
        %4219 = vmatpush2.msra.mxu0 %v4150
        %4220 = vmatprep.subr.mxu0 %v4149
        %4221 = vmatpush2.msra.mxu0 %v4148
        %4222 = vmatprep.subr.mxu0 %v4147
        %4223 = vmatpush2.msra.mxu0 %v4146
        %4224 = vmatprep.subr.mxu0 %v4145
        %4225 = vmatpush2.msra.mxu0 %v4144
        %4226 = vmatprep.subr.mxu0 %v4143
        %4227 = vmatpush2.msra.mxu0 %v4142
        %4228 = vmatprep.subr.mxu0 %v4141
        %4229 = vmatpush2.msra.mxu0 %v4140
        %4230 = vmatprep.subr.mxu0 %v4139
        %4231 = vmatpush2.msra.mxu0 %v4138
        %4232 = vmatprep.subr.mxu0 %v4137
        %4233 = vmatpush2.msra.mxu0 %v4136
        %4234 = vmatprep.subr.mxu0 %v4135
        %4235 = vmatpush2.msra.mxu0 %v4134
        %4236 = vmatprep.subr.mxu0 %v4133
        %4237 = vmatpush2.msra.mxu0 %v4132
        %4238 = vmatprep.subr.mxu0 %v4131
        %4239 = vmatpush2.msra.mxu0 %v4130
        %4240 = vmatprep.mubr.f32.mxu0 %v3873
        %4241 = vmatmul.mubr.f32.gmra.mxu0 %v3872
        %v4242 = vpop.f32.mrf.mxu0
        %v4243 = vadd.f32 0.0, %v4242
        %v4244 = vpop.f32.mrf.mxu0
        %v4245 = vadd.f32 0.0, %v4244
        %4246 = vdwg.mxu0
        %4247 = vmatprep.subr.mxu0 0.0
        %4248 = vmatpush1.msra.mxu0 0.0
        %4249 = vmatprep.subr.mxu0 0.0
        %4250 = vmatpush1.msra.mxu0 0.0
        %4251 = vmatprep.subr.mxu0 0.0
        %4252 = vmatpush1.msra.mxu0 0.0
        %4253 = vmatprep.subr.mxu0 0.0
        %4254 = vmatpush1.msra.mxu0 0.0
        %4255 = vmatprep.subr.mxu0 0.0
        %4256 = vmatpush1.msra.mxu0 0.0
        %4257 = vmatprep.subr.mxu0 0.0
        %4258 = vmatpush1.msra.mxu0 0.0
        %4259 = vmatprep.subr.mxu0 0.0
        %4260 = vmatpush1.msra.mxu0 0.0
        %4261 = vmatprep.subr.mxu0 0.0
        %4262 = vmatpush1.msra.mxu0 0.0
        %4263 = vmatprep.subr.mxu0 0.0
        %4264 = vmatpush1.msra.mxu0 0.0
        %4265 = vmatprep.subr.mxu0 %v4175
        %4266 = vmatpush1.msra.mxu0 %v4174
        %4267 = vmatprep.subr.mxu0 %v4173
        %4268 = vmatpush1.msra.mxu0 %v4172
        %4269 = vmatprep.subr.mxu0 %v4171
        %4270 = vmatpush1.msra.mxu0 %v4170
        %4271 = vmatprep.subr.mxu0 %v4169
        %4272 = vmatpush1.msra.mxu0 %v4168
        %4273 = vmatprep.subr.mxu0 %v4167
        %4274 = vmatpush1.msra.mxu0 %v4166
        %4275 = vmatprep.subr.mxu0 %v4165
        %4276 = vmatpush1.msra.mxu0 %v4164
        %4277 = vmatprep.subr.mxu0 %v4163
        %4278 = vmatpush1.msra.mxu0 %v4162
        %4279 = vmatprep.subr.mxu0 0.0
        %4280 = vmatpush2.msra.mxu0 0.0
        %4281 = vmatprep.subr.mxu0 0.0
        %4282 = vmatpush2.msra.mxu0 0.0
        %4283 = vmatprep.subr.mxu0 0.0
        %4284 = vmatpush2.msra.mxu0 0.0
        %4285 = vmatprep.subr.mxu0 0.0
        %4286 = vmatpush2.msra.mxu0 0.0
        %4287 = vmatprep.subr.mxu0 0.0
        %4288 = vmatpush2.msra.mxu0 0.0
        %4289 = vmatprep.subr.mxu0 0.0
        %4290 = vmatpush2.msra.mxu0 0.0
        %4291 = vmatprep.subr.mxu0 0.0
        %4292 = vmatpush2.msra.mxu0 0.0
        %4293 = vmatprep.subr.mxu0 0.0
        %4294 = vmatpush2.msra.mxu0 0.0
        %4295 = vmatprep.subr.mxu0 0.0
        %4296 = vmatpush2.msra.mxu0 0.0
        %4297 = vmatprep.subr.mxu0 0.0
        %4298 = vmatpush2.msra.mxu0 0.0
        %4299 = vmatprep.subr.mxu0 0.0
        %4300 = vmatpush2.msra.mxu0 0.0
        %4301 = vmatprep.subr.mxu0 0.0
        %4302 = vmatpush2.msra.mxu0 0.0
        %4303 = vmatprep.subr.mxu0 0.0
        %4304 = vmatpush2.msra.mxu0 0.0
        %4305 = vmatprep.subr.mxu0 0.0
        %4306 = vmatpush2.msra.mxu0 0.0
        %4307 = vmatprep.subr.mxu0 0.0
        %4308 = vmatpush2.msra.mxu0 0.0
        %4309 = vmatprep.subr.mxu0 0.0
        %4310 = vmatpush2.msra.mxu0 0.0
        %4311 = vmatprep.mubr.f32.mxu0 0.0
        %4312 = vmatmul.mubr.f32.gmra.mxu0 %v3954
        %v4313 = vpop.f32.mrf.mxu0
        %v4314 = vadd.f32 %v4243, %v4313
        %v4315 = vpop.f32.mrf.mxu0
        %v4316 = vadd.f32 %v4245, %v4315
        %4317 = vdwg.mxu0
        %v4318 = vmax.f32 %v4094, %v4314
        %v4319 = vmax.f32 %v4096, %v4316
        %4320 = vst [vmem:[#allocation7] sm:$0x3f] %v4318
        %vm4321 = vcmask 128000
        %4322 = vst.msk [vmem:[#allocation7 + $0x8] sm:$0x3f] %vm4321, %v4319
        %v4323 = vld [vmem:[#allocation7] ss:$8 sm:$0x3]
        %v4324 = vld [vmem:[%s9] sm:$0xff]
        %v4325 = vld [vmem:[%s9 + $0x8] sm:$0xff]
        %v4326 = vld [vmem:[%s9 + $0x10] sm:$0xff]
        %v4327 = vld [vmem:[%s9 + $0x18] sm:$0xff]
        %v4328 = vld [vmem:[%s9 + $0x20] sm:$0xff]
        %v4329 = vld [vmem:[%s9 + $0x28] sm:$0xff]
        %v4330 = vld [vmem:[%s9 + $0x30] sm:$0xff]
        %v4331 = vld [vmem:[%s9 + $0x38] sm:$0xff]
        %v4332 = vld [vmem:[%s9 + $0x40] sm:$0xff]
        %v4333 = vld [vmem:[%s9 + $0x48] sm:$0xff]
        %v4334 = vld [vmem:[%s9 + $0x50] sm:$0xff]
        %v4335 = vld [vmem:[%s9 + $0x58] sm:$0xff]
        %v4336 = vld [vmem:[%s9 + $0x60] sm:$0xff]
        %v4337 = vld [vmem:[%s9 + $0x68] sm:$0xff]
        %v4338 = vld [vmem:[%s9 + $0x70] sm:$0xff]
        %v4339 = vld [vmem:[%s9 + $0x78] sm:$0xff]
        %v4340 = vld [vmem:[%s9 + $0x80] sm:$0xff]
        %v4341 = vld [vmem:[%s9 + $0x88] sm:$0xff]
        %s4342 = scalar_lea.vmem [#allocation7], 1
        %v4343 = vld [vmem:[%s4342] ss:$8 sm:$0x3]
        %s4344 = scalar_lea.vmem %s9, 144
        %v4345 = vld [vmem:[%s4344] sm:$0xff]
        %v4346 = vld [vmem:[%s4344 + $0x8] sm:$0xff]
        %v4347 = vld [vmem:[%s4344 + $0x10] sm:$0xff]
        %v4348 = vld [vmem:[%s4344 + $0x18] sm:$0xff]
        %v4349 = vld [vmem:[%s4344 + $0x20] sm:$0xff]
        %v4350 = vld [vmem:[%s4344 + $0x28] sm:$0xff]
        %v4351 = vld [vmem:[%s4344 + $0x30] sm:$0xff]
        %v4352 = vld [vmem:[%s4344 + $0x38] sm:$0xff]
        %v4353 = vld [vmem:[%s4344 + $0x40] sm:$0xff]
        %v4354 = vld [vmem:[%s4344 + $0x48] sm:$0xff]
        %v4355 = vld [vmem:[%s4344 + $0x50] sm:$0xff]
        %v4356 = vld [vmem:[%s4344 + $0x58] sm:$0xff]
        %v4357 = vld [vmem:[%s4344 + $0x60] sm:$0xff]
        %v4358 = vld [vmem:[%s4344 + $0x68] sm:$0xff]
        %v4359 = vld [vmem:[%s4344 + $0x70] sm:$0xff]
        %v4360 = vld [vmem:[%s4344 + $0x78] sm:$0xff]
        %v4361 = vld [vmem:[%s4344 + $0x80] sm:$0xff]
        %v4362 = vld [vmem:[%s4344 + $0x88] sm:$0xff]
        %v4364 = vlaneseq
        %v4365 = vshrl.u32 %v4364, 7
        %v4366 = vsub.s32 0, %v4365
        %v4367 = vrot.slane %v4343, %v4366
        %v4368 = vlaneseq
        %v4369 = vshrl.u32 %v4368, 7
        %v4370 = vsub.s32 1, %v4369
        %v4371 = vrot.slane %v4343, %v4370
        %vm4373 = vcmask 130048
        %v4374 = vsel %vm4373, %v4371, 0
        %4376 = vmatprep.subr.mxu0 0.0
        %4377 = vmatpush1.msra.mxu0 %v4360
        %4378 = vmatprep.subr.mxu0 0.0
        %4379 = vmatpush1.msra.mxu0 %v4359
        %4380 = vmatprep.subr.mxu0 0.0
        %4381 = vmatpush1.msra.mxu0 %v4358
        %4382 = vmatprep.subr.mxu0 0.0
        %4383 = vmatpush1.msra.mxu0 %v4357
        %4384 = vmatprep.subr.mxu0 0.0
        %4385 = vmatpush1.msra.mxu0 %v4356
        %4386 = vmatprep.subr.mxu0 0.0
        %4387 = vmatpush1.msra.mxu0 %v4355
        %4388 = vmatprep.subr.mxu0 0.0
        %4389 = vmatpush1.msra.mxu0 %v4354
        %4390 = vmatprep.subr.mxu0 0.0
        %4391 = vmatpush1.msra.mxu0 %v4353
        %4392 = vmatprep.subr.mxu0 0.0
        %4393 = vmatpush1.msra.mxu0 %v4352
        %4394 = vmatprep.subr.mxu0 0.0
        %4395 = vmatpush1.msra.mxu0 %v4351
        %4396 = vmatprep.subr.mxu0 0.0
        %4397 = vmatpush1.msra.mxu0 %v4350
        %4398 = vmatprep.subr.mxu0 0.0
        %4399 = vmatpush1.msra.mxu0 %v4349
        %4400 = vmatprep.subr.mxu0 0.0
        %4401 = vmatpush1.msra.mxu0 %v4348
        %4402 = vmatprep.subr.mxu0 0.0
        %4403 = vmatpush1.msra.mxu0 %v4347
        %4404 = vmatprep.subr.mxu0 0.0
        %4405 = vmatpush1.msra.mxu0 %v4346
        %4406 = vmatprep.subr.mxu0 0.0
        %4407 = vmatpush1.msra.mxu0 %v4345
        %4408 = vmatprep.subr.mxu0 0.0
        %4409 = vmatpush2.msra.mxu0 0.0
        %4410 = vmatprep.subr.mxu0 0.0
        %4411 = vmatpush2.msra.mxu0 0.0
        %4412 = vmatprep.subr.mxu0 0.0
        %4413 = vmatpush2.msra.mxu0 0.0
        %4414 = vmatprep.subr.mxu0 0.0
        %4415 = vmatpush2.msra.mxu0 0.0
        %4416 = vmatprep.subr.mxu0 0.0
        %4417 = vmatpush2.msra.mxu0 0.0
        %4418 = vmatprep.subr.mxu0 0.0
        %4419 = vmatpush2.msra.mxu0 0.0
        %4420 = vmatprep.subr.mxu0 0.0
        %4421 = vmatpush2.msra.mxu0 0.0
        %4422 = vmatprep.subr.mxu0 0.0
        %4423 = vmatpush2.msra.mxu0 0.0
        %4424 = vmatprep.subr.mxu0 0.0
        %4425 = vmatpush2.msra.mxu0 0.0
        %4426 = vmatprep.subr.mxu0 0.0
        %4427 = vmatpush2.msra.mxu0 0.0
        %4428 = vmatprep.subr.mxu0 0.0
        %4429 = vmatpush2.msra.mxu0 0.0
        %4430 = vmatprep.subr.mxu0 0.0
        %4431 = vmatpush2.msra.mxu0 0.0
        %4432 = vmatprep.subr.mxu0 0.0
        %4433 = vmatpush2.msra.mxu0 0.0
        %4434 = vmatprep.subr.mxu0 0.0
        %4435 = vmatpush2.msra.mxu0 0.0
        %4436 = vmatprep.subr.mxu0 0.0
        %4437 = vmatpush2.msra.mxu0 %v4362
        %4438 = vmatprep.subr.mxu0 0.0
        %4439 = vmatpush2.msra.mxu0 %v4361
        %4440 = vmatprep.mubr.f32.mxu0 %v4374
        %4441 = vmatmul.mubr.f32.gmra.mxu0 %v4367
        %v4442 = vpop.f32.mrf.mxu0
        %v4443 = vadd.f32 0.0, %v4442
        %v4444 = vpop.f32.mrf.mxu0
        %4445 = vdwg.mxu0
        %v4447 = vlaneseq
        %v4448 = vshrl.u32 %v4447, 7
        %v4449 = vsub.s32 0, %v4448
        %v4450 = vrot.slane %v4323, %v4449
        %v4451 = vlaneseq
        %v4452 = vshrl.u32 %v4451, 7
        %v4453 = vsub.s32 1, %v4452
        %v4454 = vrot.slane %v4323, %v4453
        %v4456 = vsel %vm4373, %v4454, 0
        %4458 = vmatprep.subr.mxu0 0.0
        %4459 = vmatpush1.msra.mxu0 %v4339
        %4460 = vmatprep.subr.mxu0 0.0
        %4461 = vmatpush1.msra.mxu0 %v4338
        %4462 = vmatprep.subr.mxu0 0.0
        %4463 = vmatpush1.msra.mxu0 %v4337
        %4464 = vmatprep.subr.mxu0 0.0
        %4465 = vmatpush1.msra.mxu0 %v4336
        %4466 = vmatprep.subr.mxu0 0.0
        %4467 = vmatpush1.msra.mxu0 %v4335
        %4468 = vmatprep.subr.mxu0 0.0
        %4469 = vmatpush1.msra.mxu0 %v4334
        %4470 = vmatprep.subr.mxu0 0.0
        %4471 = vmatpush1.msra.mxu0 %v4333
        %4472 = vmatprep.subr.mxu0 0.0
        %4473 = vmatpush1.msra.mxu0 %v4332
        %4474 = vmatprep.subr.mxu0 0.0
        %4475 = vmatpush1.msra.mxu0 %v4331
        %4476 = vmatprep.subr.mxu0 0.0
        %4477 = vmatpush1.msra.mxu0 %v4330
        %4478 = vmatprep.subr.mxu0 0.0
        %4479 = vmatpush1.msra.mxu0 %v4329
        %4480 = vmatprep.subr.mxu0 0.0
        %4481 = vmatpush1.msra.mxu0 %v4328
        %4482 = vmatprep.subr.mxu0 0.0
        %4483 = vmatpush1.msra.mxu0 %v4327
        %4484 = vmatprep.subr.mxu0 0.0
        %4485 = vmatpush1.msra.mxu0 %v4326
        %4486 = vmatprep.subr.mxu0 0.0
        %4487 = vmatpush1.msra.mxu0 %v4325
        %4488 = vmatprep.subr.mxu0 0.0
        %4489 = vmatpush1.msra.mxu0 %v4324
        %4490 = vmatprep.subr.mxu0 0.0
        %4491 = vmatpush2.msra.mxu0 0.0
        %4492 = vmatprep.subr.mxu0 0.0
        %4493 = vmatpush2.msra.mxu0 0.0
        %4494 = vmatprep.subr.mxu0 0.0
        %4495 = vmatpush2.msra.mxu0 0.0
        %4496 = vmatprep.subr.mxu0 0.0
        %4497 = vmatpush2.msra.mxu0 0.0
        %4498 = vmatprep.subr.mxu0 0.0
        %4499 = vmatpush2.msra.mxu0 0.0
        %4500 = vmatprep.subr.mxu0 0.0
        %4501 = vmatpush2.msra.mxu0 0.0
        %4502 = vmatprep.subr.mxu0 0.0
        %4503 = vmatpush2.msra.mxu0 0.0
        %4504 = vmatprep.subr.mxu0 0.0
        %4505 = vmatpush2.msra.mxu0 0.0
        %4506 = vmatprep.subr.mxu0 0.0
        %4507 = vmatpush2.msra.mxu0 0.0
        %4508 = vmatprep.subr.mxu0 0.0
        %4509 = vmatpush2.msra.mxu0 0.0
        %4510 = vmatprep.subr.mxu0 0.0
        %4511 = vmatpush2.msra.mxu0 0.0
        %4512 = vmatprep.subr.mxu0 0.0
        %4513 = vmatpush2.msra.mxu0 0.0
        %4514 = vmatprep.subr.mxu0 0.0
        %4515 = vmatpush2.msra.mxu0 0.0
        %4516 = vmatprep.subr.mxu0 0.0
        %4517 = vmatpush2.msra.mxu0 0.0
        %4518 = vmatprep.subr.mxu0 0.0
        %4519 = vmatpush2.msra.mxu0 %v4341
        %4520 = vmatprep.subr.mxu0 0.0
        %4521 = vmatpush2.msra.mxu0 %v4340
        %4522 = vmatprep.mubr.f32.mxu0 %v4456
        %4523 = vmatmul.mubr.f32.gmra.mxu0 %v4450
        %v4524 = vpop.f32.mrf.mxu0
        %v4525 = vadd.f32 %v4443, %v4524
        %v4526 = vpop.f32.mrf.mxu0
        %4527 = vdwg.mxu0
        %s4528 = scalar_lea.vmem [#allocation7], 2
        %v4529 = vld [vmem:[%s4528] ss:$8 sm:$0x3]
        %s4530 = scalar_lea.vmem %s9, 288
        %v4531 = vld [vmem:[%s4530] sm:$0xff]
        %v4532 = vld [vmem:[%s4530 + $0x8] sm:$0xff]
        %v4533 = vld [vmem:[%s4530 + $0x10] sm:$0xff]
        %v4534 = vld [vmem:[%s4530 + $0x18] sm:$0xff]
        %v4535 = vld [vmem:[%s4530 + $0x20] sm:$0xff]
        %v4536 = vld [vmem:[%s4530 + $0x28] sm:$0xff]
        %v4537 = vld [vmem:[%s4530 + $0x30] sm:$0xff]
        %v4538 = vld [vmem:[%s4530 + $0x38] sm:$0xff]
        %v4539 = vld [vmem:[%s4530 + $0x40] sm:$0xff]
        %v4540 = vld [vmem:[%s4530 + $0x48] sm:$0xff]
        %v4541 = vld [vmem:[%s4530 + $0x50] sm:$0xff]
        %v4542 = vld [vmem:[%s4530 + $0x58] sm:$0xff]
        %v4543 = vld [vmem:[%s4530 + $0x60] sm:$0xff]
        %v4544 = vld [vmem:[%s4530 + $0x68] sm:$0xff]
        %v4545 = vld [vmem:[%s4530 + $0x70] sm:$0xff]
        %v4546 = vld [vmem:[%s4530 + $0x78] sm:$0xff]
        %v4547 = vld [vmem:[%s4530 + $0x80] sm:$0xff]
        %v4548 = vld [vmem:[%s4530 + $0x88] sm:$0xff]
        %v4550 = vlaneseq
        %v4551 = vshrl.u32 %v4550, 7
        %v4552 = vsub.s32 0, %v4551
        %v4553 = vrot.slane %v4529, %v4552
        %v4554 = vlaneseq
        %v4555 = vshrl.u32 %v4554, 7
        %v4556 = vsub.s32 1, %v4555
        %v4557 = vrot.slane %v4529, %v4556
        %v4559 = vsel %vm4373, %v4557, 0
        %4561 = vmatprep.subr.mxu0 0.0
        %4562 = vmatpush1.msra.mxu0 %v4546
        %4563 = vmatprep.subr.mxu0 0.0
        %4564 = vmatpush1.msra.mxu0 %v4545
        %4565 = vmatprep.subr.mxu0 0.0
        %4566 = vmatpush1.msra.mxu0 %v4544
        %4567 = vmatprep.subr.mxu0 0.0
        %4568 = vmatpush1.msra.mxu0 %v4543
        %4569 = vmatprep.subr.mxu0 0.0
        %4570 = vmatpush1.msra.mxu0 %v4542
        %4571 = vmatprep.subr.mxu0 0.0
        %4572 = vmatpush1.msra.mxu0 %v4541
        %4573 = vmatprep.subr.mxu0 0.0
        %4574 = vmatpush1.msra.mxu0 %v4540
        %4575 = vmatprep.subr.mxu0 0.0
        %4576 = vmatpush1.msra.mxu0 %v4539
        %4577 = vmatprep.subr.mxu0 0.0
        %4578 = vmatpush1.msra.mxu0 %v4538
        %4579 = vmatprep.subr.mxu0 0.0
        %4580 = vmatpush1.msra.mxu0 %v4537
        %4581 = vmatprep.subr.mxu0 0.0
        %4582 = vmatpush1.msra.mxu0 %v4536
        %4583 = vmatprep.subr.mxu0 0.0
        %4584 = vmatpush1.msra.mxu0 %v4535
        %4585 = vmatprep.subr.mxu0 0.0
        %4586 = vmatpush1.msra.mxu0 %v4534
        %4587 = vmatprep.subr.mxu0 0.0
        %4588 = vmatpush1.msra.mxu0 %v4533
        %4589 = vmatprep.subr.mxu0 0.0
        %4590 = vmatpush1.msra.mxu0 %v4532
        %4591 = vmatprep.subr.mxu0 0.0
        %4592 = vmatpush1.msra.mxu0 %v4531
        %4593 = vmatprep.subr.mxu0 0.0
        %4594 = vmatpush2.msra.mxu0 0.0
        %4595 = vmatprep.subr.mxu0 0.0
        %4596 = vmatpush2.msra.mxu0 0.0
        %4597 = vmatprep.subr.mxu0 0.0
        %4598 = vmatpush2.msra.mxu0 0.0
        %4599 = vmatprep.subr.mxu0 0.0
        %4600 = vmatpush2.msra.mxu0 0.0
        %4601 = vmatprep.subr.mxu0 0.0
        %4602 = vmatpush2.msra.mxu0 0.0
        %4603 = vmatprep.subr.mxu0 0.0
        %4604 = vmatpush2.msra.mxu0 0.0
        %4605 = vmatprep.subr.mxu0 0.0
        %4606 = vmatpush2.msra.mxu0 0.0
        %4607 = vmatprep.subr.mxu0 0.0
        %4608 = vmatpush2.msra.mxu0 0.0
        %4609 = vmatprep.subr.mxu0 0.0
        %4610 = vmatpush2.msra.mxu0 0.0
        %4611 = vmatprep.subr.mxu0 0.0
        %4612 = vmatpush2.msra.mxu0 0.0
        %4613 = vmatprep.subr.mxu0 0.0
        %4614 = vmatpush2.msra.mxu0 0.0
        %4615 = vmatprep.subr.mxu0 0.0
        %4616 = vmatpush2.msra.mxu0 0.0
        %4617 = vmatprep.subr.mxu0 0.0
        %4618 = vmatpush2.msra.mxu0 0.0
        %4619 = vmatprep.subr.mxu0 0.0
        %4620 = vmatpush2.msra.mxu0 0.0
        %4621 = vmatprep.subr.mxu0 0.0
        %4622 = vmatpush2.msra.mxu0 %v4548
        %4623 = vmatprep.subr.mxu0 0.0
        %4624 = vmatpush2.msra.mxu0 %v4547
        %4625 = vmatprep.mubr.f32.mxu0 %v4559
        %4626 = vmatmul.mubr.f32.gmra.mxu0 %v4553
        %v4627 = vpop.f32.mrf.mxu0
        %v4628 = vadd.f32 0.0, %v4627
        %v4629 = vpop.f32.mrf.mxu0
        %4630 = vdwg.mxu0
        %v4631 = vadd.f32 %v4525, %v4628
        %s4632 = scalar_lea.vmem [#allocation7], 3
        %v4633 = vld [vmem:[%s4632] ss:$8 sm:$0x3]
        %s4634 = scalar_lea.vmem %s9, 432
        %v4635 = vld [vmem:[%s4634] sm:$0xff]
        %v4636 = vld [vmem:[%s4634 + $0x8] sm:$0xff]
        %v4637 = vld [vmem:[%s4634 + $0x10] sm:$0xff]
        %v4638 = vld [vmem:[%s4634 + $0x18] sm:$0xff]
        %v4639 = vld [vmem:[%s4634 + $0x20] sm:$0xff]
        %v4640 = vld [vmem:[%s4634 + $0x28] sm:$0xff]
        %v4641 = vld [vmem:[%s4634 + $0x30] sm:$0xff]
        %v4642 = vld [vmem:[%s4634 + $0x38] sm:$0xff]
        %v4643 = vld [vmem:[%s4634 + $0x40] sm:$0xff]
        %v4644 = vld [vmem:[%s4634 + $0x48] sm:$0xff]
        %v4645 = vld [vmem:[%s4634 + $0x50] sm:$0xff]
        %v4646 = vld [vmem:[%s4634 + $0x58] sm:$0xff]
        %v4647 = vld [vmem:[%s4634 + $0x60] sm:$0xff]
        %v4648 = vld [vmem:[%s4634 + $0x68] sm:$0xff]
        %v4649 = vld [vmem:[%s4634 + $0x70] sm:$0xff]
        %v4650 = vld [vmem:[%s4634 + $0x78] sm:$0xff]
        %v4651 = vld [vmem:[%s4634 + $0x80] sm:$0xff]
        %v4652 = vld [vmem:[%s4634 + $0x88] sm:$0xff]
        %v4654 = vlaneseq
        %v4655 = vshrl.u32 %v4654, 7
        %v4656 = vsub.s32 0, %v4655
        %v4657 = vrot.slane %v4633, %v4656
        %v4658 = vlaneseq
        %v4659 = vshrl.u32 %v4658, 7
        %v4660 = vsub.s32 1, %v4659
        %v4661 = vrot.slane %v4633, %v4660
        %v4663 = vsel %vm4373, %v4661, 0
        %4665 = vmatprep.subr.mxu0 0.0
        %4666 = vmatpush1.msra.mxu0 %v4650
        %4667 = vmatprep.subr.mxu0 0.0
        %4668 = vmatpush1.msra.mxu0 %v4649
        %4669 = vmatprep.subr.mxu0 0.0
        %4670 = vmatpush1.msra.mxu0 %v4648
        %4671 = vmatprep.subr.mxu0 0.0
        %4672 = vmatpush1.msra.mxu0 %v4647
        %4673 = vmatprep.subr.mxu0 0.0
        %4674 = vmatpush1.msra.mxu0 %v4646
        %4675 = vmatprep.subr.mxu0 0.0
        %4676 = vmatpush1.msra.mxu0 %v4645
        %4677 = vmatprep.subr.mxu0 0.0
        %4678 = vmatpush1.msra.mxu0 %v4644
        %4679 = vmatprep.subr.mxu0 0.0
        %4680 = vmatpush1.msra.mxu0 %v4643
        %4681 = vmatprep.subr.mxu0 0.0
        %4682 = vmatpush1.msra.mxu0 %v4642
        %4683 = vmatprep.subr.mxu0 0.0
        %4684 = vmatpush1.msra.mxu0 %v4641
        %4685 = vmatprep.subr.mxu0 0.0
        %4686 = vmatpush1.msra.mxu0 %v4640
        %4687 = vmatprep.subr.mxu0 0.0
        %4688 = vmatpush1.msra.mxu0 %v4639
        %4689 = vmatprep.subr.mxu0 0.0
        %4690 = vmatpush1.msra.mxu0 %v4638
        %4691 = vmatprep.subr.mxu0 0.0
        %4692 = vmatpush1.msra.mxu0 %v4637
        %4693 = vmatprep.subr.mxu0 0.0
        %4694 = vmatpush1.msra.mxu0 %v4636
        %4695 = vmatprep.subr.mxu0 0.0
        %4696 = vmatpush1.msra.mxu0 %v4635
        %4697 = vmatprep.subr.mxu0 0.0
        %4698 = vmatpush2.msra.mxu0 0.0
        %4699 = vmatprep.subr.mxu0 0.0
        %4700 = vmatpush2.msra.mxu0 0.0
        %4701 = vmatprep.subr.mxu0 0.0
        %4702 = vmatpush2.msra.mxu0 0.0
        %4703 = vmatprep.subr.mxu0 0.0
        %4704 = vmatpush2.msra.mxu0 0.0
        %4705 = vmatprep.subr.mxu0 0.0
        %4706 = vmatpush2.msra.mxu0 0.0
        %4707 = vmatprep.subr.mxu0 0.0
        %4708 = vmatpush2.msra.mxu0 0.0
        %4709 = vmatprep.subr.mxu0 0.0
        %4710 = vmatpush2.msra.mxu0 0.0
        %4711 = vmatprep.subr.mxu0 0.0
        %4712 = vmatpush2.msra.mxu0 0.0
        %4713 = vmatprep.subr.mxu0 0.0
        %4714 = vmatpush2.msra.mxu0 0.0
        %4715 = vmatprep.subr.mxu0 0.0
        %4716 = vmatpush2.msra.mxu0 0.0
        %4717 = vmatprep.subr.mxu0 0.0
        %4718 = vmatpush2.msra.mxu0 0.0
        %4719 = vmatprep.subr.mxu0 0.0
        %4720 = vmatpush2.msra.mxu0 0.0
        %4721 = vmatprep.subr.mxu0 0.0
        %4722 = vmatpush2.msra.mxu0 0.0
        %4723 = vmatprep.subr.mxu0 0.0
        %4724 = vmatpush2.msra.mxu0 0.0
        %4725 = vmatprep.subr.mxu0 0.0
        %4726 = vmatpush2.msra.mxu0 %v4652
        %4727 = vmatprep.subr.mxu0 0.0
        %4728 = vmatpush2.msra.mxu0 %v4651
        %4729 = vmatprep.mubr.f32.mxu0 %v4663
        %4730 = vmatmul.mubr.f32.gmra.mxu0 %v4657
        %v4731 = vpop.f32.mrf.mxu0
        %v4732 = vadd.f32 0.0, %v4731
        %v4733 = vpop.f32.mrf.mxu0
        %4734 = vdwg.mxu0
        %v4735 = vadd.f32 %v4631, %v4732
        %s4736 = scalar_lea.vmem [#allocation7], 4
        %v4737 = vld [vmem:[%s4736] ss:$8 sm:$0x3]
        %s4738 = scalar_lea.vmem %s9, 576
        %v4739 = vld [vmem:[%s4738] sm:$0xff]
        %v4740 = vld [vmem:[%s4738 + $0x8] sm:$0xff]
        %v4741 = vld [vmem:[%s4738 + $0x10] sm:$0xff]
        %v4742 = vld [vmem:[%s4738 + $0x18] sm:$0xff]
        %v4743 = vld [vmem:[%s4738 + $0x20] sm:$0xff]
        %v4744 = vld [vmem:[%s4738 + $0x28] sm:$0xff]
        %v4745 = vld [vmem:[%s4738 + $0x30] sm:$0xff]
        %v4746 = vld [vmem:[%s4738 + $0x38] sm:$0xff]
        %v4747 = vld [vmem:[%s4738 + $0x40] sm:$0xff]
        %v4748 = vld [vmem:[%s4738 + $0x48] sm:$0xff]
        %v4749 = vld [vmem:[%s4738 + $0x50] sm:$0xff]
        %v4750 = vld [vmem:[%s4738 + $0x58] sm:$0xff]
        %v4751 = vld [vmem:[%s4738 + $0x60] sm:$0xff]
        %v4752 = vld [vmem:[%s4738 + $0x68] sm:$0xff]
        %v4753 = vld [vmem:[%s4738 + $0x70] sm:$0xff]
        %v4754 = vld [vmem:[%s4738 + $0x78] sm:$0xff]
        %v4755 = vld [vmem:[%s4738 + $0x80] sm:$0xff]
        %v4756 = vld [vmem:[%s4738 + $0x88] sm:$0xff]
        %v4758 = vlaneseq
        %v4759 = vshrl.u32 %v4758, 7
        %v4760 = vsub.s32 0, %v4759
        %v4761 = vrot.slane %v4737, %v4760
        %v4762 = vlaneseq
        %v4763 = vshrl.u32 %v4762, 7
        %v4764 = vsub.s32 1, %v4763
        %v4765 = vrot.slane %v4737, %v4764
        %v4767 = vsel %vm4373, %v4765, 0
        %4769 = vmatprep.subr.mxu0 0.0
        %4770 = vmatpush1.msra.mxu0 %v4754
        %4771 = vmatprep.subr.mxu0 0.0
        %4772 = vmatpush1.msra.mxu0 %v4753
        %4773 = vmatprep.subr.mxu0 0.0
        %4774 = vmatpush1.msra.mxu0 %v4752
        %4775 = vmatprep.subr.mxu0 0.0
        %4776 = vmatpush1.msra.mxu0 %v4751
        %4777 = vmatprep.subr.mxu0 0.0
        %4778 = vmatpush1.msra.mxu0 %v4750
        %4779 = vmatprep.subr.mxu0 0.0
        %4780 = vmatpush1.msra.mxu0 %v4749
        %4781 = vmatprep.subr.mxu0 0.0
        %4782 = vmatpush1.msra.mxu0 %v4748
        %4783 = vmatprep.subr.mxu0 0.0
        %4784 = vmatpush1.msra.mxu0 %v4747
        %4785 = vmatprep.subr.mxu0 0.0
        %4786 = vmatpush1.msra.mxu0 %v4746
        %4787 = vmatprep.subr.mxu0 0.0
        %4788 = vmatpush1.msra.mxu0 %v4745
        %4789 = vmatprep.subr.mxu0 0.0
        %4790 = vmatpush1.msra.mxu0 %v4744
        %4791 = vmatprep.subr.mxu0 0.0
        %4792 = vmatpush1.msra.mxu0 %v4743
        %4793 = vmatprep.subr.mxu0 0.0
        %4794 = vmatpush1.msra.mxu0 %v4742
        %4795 = vmatprep.subr.mxu0 0.0
        %4796 = vmatpush1.msra.mxu0 %v4741
        %4797 = vmatprep.subr.mxu0 0.0
        %4798 = vmatpush1.msra.mxu0 %v4740
        %4799 = vmatprep.subr.mxu0 0.0
        %4800 = vmatpush1.msra.mxu0 %v4739
        %4801 = vmatprep.subr.mxu0 0.0
        %4802 = vmatpush2.msra.mxu0 0.0
        %4803 = vmatprep.subr.mxu0 0.0
        %4804 = vmatpush2.msra.mxu0 0.0
        %4805 = vmatprep.subr.mxu0 0.0
        %4806 = vmatpush2.msra.mxu0 0.0
        %4807 = vmatprep.subr.mxu0 0.0
        %4808 = vmatpush2.msra.mxu0 0.0
        %4809 = vmatprep.subr.mxu0 0.0
        %4810 = vmatpush2.msra.mxu0 0.0
        %4811 = vmatprep.subr.mxu0 0.0
        %4812 = vmatpush2.msra.mxu0 0.0
        %4813 = vmatprep.subr.mxu0 0.0
        %4814 = vmatpush2.msra.mxu0 0.0
        %4815 = vmatprep.subr.mxu0 0.0
        %4816 = vmatpush2.msra.mxu0 0.0
        %4817 = vmatprep.subr.mxu0 0.0
        %4818 = vmatpush2.msra.mxu0 0.0
        %4819 = vmatprep.subr.mxu0 0.0
        %4820 = vmatpush2.msra.mxu0 0.0
        %4821 = vmatprep.subr.mxu0 0.0
        %4822 = vmatpush2.msra.mxu0 0.0
        %4823 = vmatprep.subr.mxu0 0.0
        %4824 = vmatpush2.msra.mxu0 0.0
        %4825 = vmatprep.subr.mxu0 0.0
        %4826 = vmatpush2.msra.mxu0 0.0
        %4827 = vmatprep.subr.mxu0 0.0
        %4828 = vmatpush2.msra.mxu0 0.0
        %4829 = vmatprep.subr.mxu0 0.0
        %4830 = vmatpush2.msra.mxu0 %v4756
        %4831 = vmatprep.subr.mxu0 0.0
        %4832 = vmatpush2.msra.mxu0 %v4755
        %4833 = vmatprep.mubr.f32.mxu0 %v4767
        %4834 = vmatmul.mubr.f32.gmra.mxu0 %v4761
        %v4835 = vpop.f32.mrf.mxu0
        %v4836 = vadd.f32 0.0, %v4835
        %v4837 = vpop.f32.mrf.mxu0
        %4838 = vdwg.mxu0
        %v4839 = vadd.f32 %v4735, %v4836
        %s4840 = scalar_lea.vmem [#allocation7], 5
        %v4841 = vld [vmem:[%s4840] ss:$8 sm:$0x3]
        %s4842 = scalar_lea.vmem %s9, 720
        %v4843 = vld [vmem:[%s4842] sm:$0xff]
        %v4844 = vld [vmem:[%s4842 + $0x8] sm:$0xff]
        %v4845 = vld [vmem:[%s4842 + $0x10] sm:$0xff]
        %v4846 = vld [vmem:[%s4842 + $0x18] sm:$0xff]
        %v4847 = vld [vmem:[%s4842 + $0x20] sm:$0xff]
        %v4848 = vld [vmem:[%s4842 + $0x28] sm:$0xff]
        %v4849 = vld [vmem:[%s4842 + $0x30] sm:$0xff]
        %v4850 = vld [vmem:[%s4842 + $0x38] sm:$0xff]
        %v4851 = vld [vmem:[%s4842 + $0x40] sm:$0xff]
        %v4852 = vld [vmem:[%s4842 + $0x48] sm:$0xff]
        %v4853 = vld [vmem:[%s4842 + $0x50] sm:$0xff]
        %v4854 = vld [vmem:[%s4842 + $0x58] sm:$0xff]
        %v4855 = vld [vmem:[%s4842 + $0x60] sm:$0xff]
        %v4856 = vld [vmem:[%s4842 + $0x68] sm:$0xff]
        %v4857 = vld [vmem:[%s4842 + $0x70] sm:$0xff]
        %v4858 = vld [vmem:[%s4842 + $0x78] sm:$0xff]
        %v4859 = vld [vmem:[%s4842 + $0x80] sm:$0xff]
        %v4860 = vld [vmem:[%s4842 + $0x88] sm:$0xff]
        %v4862 = vlaneseq
        %v4863 = vshrl.u32 %v4862, 7
        %v4864 = vsub.s32 0, %v4863
        %v4865 = vrot.slane %v4841, %v4864
        %v4866 = vlaneseq
        %v4867 = vshrl.u32 %v4866, 7
        %v4868 = vsub.s32 1, %v4867
        %v4869 = vrot.slane %v4841, %v4868
        %v4871 = vsel %vm4373, %v4869, 0
        %4873 = vmatprep.subr.mxu0 0.0
        %4874 = vmatpush1.msra.mxu0 %v4858
        %4875 = vmatprep.subr.mxu0 0.0
        %4876 = vmatpush1.msra.mxu0 %v4857
        %4877 = vmatprep.subr.mxu0 0.0
        %4878 = vmatpush1.msra.mxu0 %v4856
        %4879 = vmatprep.subr.mxu0 0.0
        %4880 = vmatpush1.msra.mxu0 %v4855
        %4881 = vmatprep.subr.mxu0 0.0
        %4882 = vmatpush1.msra.mxu0 %v4854
        %4883 = vmatprep.subr.mxu0 0.0
        %4884 = vmatpush1.msra.mxu0 %v4853
        %4885 = vmatprep.subr.mxu0 0.0
        %4886 = vmatpush1.msra.mxu0 %v4852
        %4887 = vmatprep.subr.mxu0 0.0
        %4888 = vmatpush1.msra.mxu0 %v4851
        %4889 = vmatprep.subr.mxu0 0.0
        %4890 = vmatpush1.msra.mxu0 %v4850
        %4891 = vmatprep.subr.mxu0 0.0
        %4892 = vmatpush1.msra.mxu0 %v4849
        %4893 = vmatprep.subr.mxu0 0.0
        %4894 = vmatpush1.msra.mxu0 %v4848
        %4895 = vmatprep.subr.mxu0 0.0
        %4896 = vmatpush1.msra.mxu0 %v4847
        %4897 = vmatprep.subr.mxu0 0.0
        %4898 = vmatpush1.msra.mxu0 %v4846
        %4899 = vmatprep.subr.mxu0 0.0
        %4900 = vmatpush1.msra.mxu0 %v4845
        %4901 = vmatprep.subr.mxu0 0.0
        %4902 = vmatpush1.msra.mxu0 %v4844
        %4903 = vmatprep.subr.mxu0 0.0
        %4904 = vmatpush1.msra.mxu0 %v4843
        %4905 = vmatprep.subr.mxu0 0.0
        %4906 = vmatpush2.msra.mxu0 0.0
        %4907 = vmatprep.subr.mxu0 0.0
        %4908 = vmatpush2.msra.mxu0 0.0
        %4909 = vmatprep.subr.mxu0 0.0
        %4910 = vmatpush2.msra.mxu0 0.0
        %4911 = vmatprep.subr.mxu0 0.0
        %4912 = vmatpush2.msra.mxu0 0.0
        %4913 = vmatprep.subr.mxu0 0.0
        %4914 = vmatpush2.msra.mxu0 0.0
        %4915 = vmatprep.subr.mxu0 0.0
        %4916 = vmatpush2.msra.mxu0 0.0
        %4917 = vmatprep.subr.mxu0 0.0
        %4918 = vmatpush2.msra.mxu0 0.0
        %4919 = vmatprep.subr.mxu0 0.0
        %4920 = vmatpush2.msra.mxu0 0.0
        %4921 = vmatprep.subr.mxu0 0.0
        %4922 = vmatpush2.msra.mxu0 0.0
        %4923 = vmatprep.subr.mxu0 0.0
        %4924 = vmatpush2.msra.mxu0 0.0
        %4925 = vmatprep.subr.mxu0 0.0
        %4926 = vmatpush2.msra.mxu0 0.0
        %4927 = vmatprep.subr.mxu0 0.0
        %4928 = vmatpush2.msra.mxu0 0.0
        %4929 = vmatprep.subr.mxu0 0.0
        %4930 = vmatpush2.msra.mxu0 0.0
        %4931 = vmatprep.subr.mxu0 0.0
        %4932 = vmatpush2.msra.mxu0 0.0
        %4933 = vmatprep.subr.mxu0 0.0
        %4934 = vmatpush2.msra.mxu0 %v4860
        %4935 = vmatprep.subr.mxu0 0.0
        %4936 = vmatpush2.msra.mxu0 %v4859
        %4937 = vmatprep.mubr.f32.mxu0 %v4871
        %4938 = vmatmul.mubr.f32.gmra.mxu0 %v4865
        %v4939 = vpop.f32.mrf.mxu0
        %v4940 = vadd.f32 0.0, %v4939
        %v4941 = vpop.f32.mrf.mxu0
        %4942 = vdwg.mxu0
        %v4943 = vadd.f32 %v4839, %v4940
        %v4944 = vld [vmem:[%s10] sm:$0x1]
        %v4945 = vadd.f32 %v4943, %v4944
        %vm4946 = vcmp.ge.f32.partialorder %v4945, 0.0
        %v4947 = vmul.f32 %v4945, 0.01
        %v4948 = vsel %vm4946, %v4945, %v4947
        %v4949 = vld [vmem:[%s11] sm:$0xff]
        %v4950 = vld [vmem:[%s11 + $0x8] sm:$0xff]
        %v4951 = vld [vmem:[%s11 + $0x10] sm:$0xff]
        %v4952 = vld [vmem:[%s11 + $0x18] sm:$0xff]
        %v4953 = vld [vmem:[%s11 + $0x20] sm:$0xff]
        %v4954 = vld [vmem:[%s11 + $0x28] sm:$0xff]
        %v4955 = vld [vmem:[%s11 + $0x30] sm:$0xff]
        %v4956 = vld [vmem:[%s11 + $0x38] sm:$0xff]
        %v4957 = vld [vmem:[%s11 + $0x40] sm:$0xff]
        %v4958 = vld [vmem:[%s11 + $0x48] sm:$0xff]
        %v4959 = vld [vmem:[%s11 + $0x50] sm:$0xff]
        %v4960 = vld [vmem:[%s11 + $0x58] sm:$0xff]
        %v4961 = vld [vmem:[%s11 + $0x60] sm:$0xff]
        %v4962 = vld [vmem:[%s11 + $0x68] sm:$0xff]
        %v4963 = vld [vmem:[%s11 + $0x70] sm:$0xff]
        %v4964 = vld [vmem:[%s12] sm:$0x1]
        %vm4965 = vcmask 982016
        %v4967 = vsel %vm4965, %v4948, 0
        %4969 = vmatprep.subr.mxu0 0.0
        %4970 = vmatpush1.msra.mxu0 0.0
        %4971 = vmatprep.subr.mxu0 0.0
        %4972 = vmatpush1.msra.mxu0 %v4963
        %4973 = vmatprep.subr.mxu0 0.0
        %4974 = vmatpush1.msra.mxu0 %v4962
        %4975 = vmatprep.subr.mxu0 0.0
        %4976 = vmatpush1.msra.mxu0 %v4961
        %4977 = vmatprep.subr.mxu0 0.0
        %4978 = vmatpush1.msra.mxu0 %v4960
        %4979 = vmatprep.subr.mxu0 0.0
        %4980 = vmatpush1.msra.mxu0 %v4959
        %4981 = vmatprep.subr.mxu0 0.0
        %4982 = vmatpush1.msra.mxu0 %v4958
        %4983 = vmatprep.subr.mxu0 0.0
        %4984 = vmatpush1.msra.mxu0 %v4957
        %4985 = vmatprep.subr.mxu0 0.0
        %4986 = vmatpush1.msra.mxu0 %v4956
        %4987 = vmatprep.subr.mxu0 0.0
        %4988 = vmatpush1.msra.mxu0 %v4955
        %4989 = vmatprep.subr.mxu0 0.0
        %4990 = vmatpush1.msra.mxu0 %v4954
        %4991 = vmatprep.subr.mxu0 0.0
        %4992 = vmatpush1.msra.mxu0 %v4953
        %4993 = vmatprep.subr.mxu0 0.0
        %4994 = vmatpush1.msra.mxu0 %v4952
        %4995 = vmatprep.subr.mxu0 0.0
        %4996 = vmatpush1.msra.mxu0 %v4951
        %4997 = vmatprep.subr.mxu0 0.0
        %4998 = vmatpush1.msra.mxu0 %v4950
        %4999 = vmatprep.subr.mxu0 0.0
        %5000 = vmatpush1.msra.mxu0 %v4949
        %5001 = vmatprep.subr.mxu0 0.0
        %5002 = vmatpush2.msra.mxu0 0.0
        %5003 = vmatprep.subr.mxu0 0.0
        %5004 = vmatpush2.msra.mxu0 0.0
        %5005 = vmatprep.subr.mxu0 0.0
        %5006 = vmatpush2.msra.mxu0 0.0
        %5007 = vmatprep.subr.mxu0 0.0
        %5008 = vmatpush2.msra.mxu0 0.0
        %5009 = vmatprep.subr.mxu0 0.0
        %5010 = vmatpush2.msra.mxu0 0.0
        %5011 = vmatprep.subr.mxu0 0.0
        %5012 = vmatpush2.msra.mxu0 0.0
        %5013 = vmatprep.subr.mxu0 0.0
        %5014 = vmatpush2.msra.mxu0 0.0
        %5015 = vmatprep.subr.mxu0 0.0
        %5016 = vmatpush2.msra.mxu0 0.0
        %5017 = vmatprep.subr.mxu0 0.0
        %5018 = vmatpush2.msra.mxu0 0.0
        %5019 = vmatprep.subr.mxu0 0.0
        %5020 = vmatpush2.msra.mxu0 0.0
        %5021 = vmatprep.subr.mxu0 0.0
        %5022 = vmatpush2.msra.mxu0 0.0
        %5023 = vmatprep.subr.mxu0 0.0
        %5024 = vmatpush2.msra.mxu0 0.0
        %5025 = vmatprep.subr.mxu0 0.0
        %5026 = vmatpush2.msra.mxu0 0.0
        %5027 = vmatprep.subr.mxu0 0.0
        %5028 = vmatpush2.msra.mxu0 0.0
        %5029 = vmatprep.subr.mxu0 0.0
        %5030 = vmatpush2.msra.mxu0 0.0
        %5031 = vmatprep.subr.mxu0 0.0
        %5032 = vmatpush2.msra.mxu0 0.0
        %5033 = vmatprep.mubr.f32.mxu0 0.0
        %5034 = vmatmul.mubr.f32.gmra.mxu0 %v4967
        %v5035 = vpop.f32.mrf.mxu0
        %v5036 = vadd.f32 %v4964, %v5035
        %v5037 = vpop.f32.mrf.mxu0
        %5038 = vdwg.mxu0
        %vm5039 = vcmp.ge.f32.partialorder %v5036, 0.0
        %v5040 = vmul.f32 %v5036, 0.01
        %v5041 = vsel %vm5039, %v5036, %v5040
        %vm5042 = vcmask 401408
        %5043 = vst.msk [vmem:[%s432] sm:$0x1] %vm5042, %v5041
        %s5044 = sand.u32 %s313, 1
        %s5045 = scalar_lea.sflag [#allocation9], %s5044
        %s5046 = sand.u32 %s313, 1
        %s5047 = scalar_lea.vmem [#allocation8], %s5046
        // Predicated region
        $region73: #{convnet_basic_forward.1} parent=71 // pred_check
          %p5048 = pneg %p323
        $region74: #{convnet_basic_forward.1} parent=71 // pred_check_branch
          %5050 = sbr.rel (%p5048) target = $region76
        $region75: #{convnet_basic_forward.1} parent=71 // pred_region
          %s5052 = ssub.s32 16, 16
          %5053 = vsyncadd %s5045, %s5052
          %s5054 = smul.addr %s27, 16
          %s5055 = scalar_lea.hbm %s13, %s5054
          %s5057 = sshll.u32 %s5047, 4
          %s5058 = int_to_ptr.vmem [resolvable:$true] %s5057
          %5060 = dma.vmem_to_hbm [thread:$0]  %s5058, 16, %s5055, %s5045
        $region76: #{convnet_basic_forward.1} parent=71 // pred_fallthru
          _
      $region72: #{convnet_basic_forward.1} parent=5 // pred_fallthru
        _
      %p5061 = scmp.le.s32.totalorder 2, %s22
      // Predicated region
      $region77: #{convnet_basic_forward.1} parent=5 // pred_check
        %p5062 = pneg %p5061
      $region78: #{convnet_basic_forward.1} parent=5 // pred_check_branch
        %5064 = sbr.rel (%p5062) target = $region80
      $region79: #{convnet_basic_forward.1} parent=5 // pred_region
        %s5065 = ssub.s32 %s22, 2
        // Predicated region
        $region81: #{convnet_basic_forward.1} parent=79 // pred_check
          %p5066 = pneg %p329
        $region82: #{convnet_basic_forward.1} parent=79 // pred_check_branch
          %5068 = sbr.rel (%p5066) target = $region84
        $region83: #{convnet_basic_forward.1} parent=79 // pred_region
          %s5069 = sand.u32 %s314, 1
          %s5070 = scalar_lea.sflag [#allocation9], %s5069
          %s5071 = sand.u32 %s314, 1
          %s5072 = scalar_lea.vmem [#allocation8], %s5071
          %5073 = dma.done %s5070, 16
        $region84: #{convnet_basic_forward.1} parent=79 // pred_fallthru
          _
      $region80: #{convnet_basic_forward.1} parent=5 // pred_fallthru
        _
    $region6: #{convnet_basic_forward.1} parent=1 // loop_footer
      %s26 = sadd.s32 1, %s22
    $region7: #{convnet_basic_forward.1} parent=1 // loop_footer_branch
      %21 = sbr.rel target = $region3
    $region8: #{convnet_basic_forward.1} parent=1 // loop_exit
      _
    %5074 = vsyncpa [#allocation9], 1
    %s5075 = scalar_lea.sflag [#allocation9], 1
    %5076 = vsyncpa %s5075, 1

</llo_original>
